<compile_context>
chip_gen: v6e
topology: v6e:2x2x1
jax: 0.10.0
libtpu: 0.0.40
codegen_flags: <defaults>
</compile_context>

<pallas_src>
import functools
import math

import numpy as np

import jax
import jax.numpy as jnp
from jax.experimental import pallas as pl
from jax.experimental.pallas import tpu as pltpu


def _cdiv(a, b):
    return -(-a // b)


def _make_zerodf_kernel(P: int, M: int, R: int, W: int, C: int, ignore_gain: bool):
    Mp1 = M + 1

    def kernel(x_ref, xh_ref, b_ref, bh_ref, e0_ref, e1_ref, o_ref):
        # x_ref : (1, R, W)        lane-dense excitation rows of this tile
        # xh_ref: (1, n_tiles, Mh) per-tile halo: the M samples preceding each tile
        # b_ref : (1, R, C, M+1)   frame coefficients, grouped C frames per row
        # bh_ref: (1, n_tiles, M+1) per-tile next-frame halo (first frame of next tile)
        # e0/e1 : (C, W)           constant expansion+interpolation matrices
        # o_ref : (1, R, W)
        ti = pl.program_id(1)

        xf = x_ref[0].astype(jnp.float32)                        # (R, W)
        b0 = b_ref[0].astype(jnp.float32)                        # (R, C, M+1)

        # Next-frame coefficients in the same (R, C) grouping: shift by one
        # frame; the last frame of the tile comes from the per-tile halo.
        bh = bh_ref[0, pl.ds(ti, 1), :].astype(jnp.float32)      # (1, M+1)
        bh = bh[:, None, :]                                      # (1, 1, M+1)
        if R > 1:
            col_last = jnp.concatenate([b0[1:, 0:1, :], bh], axis=0)   # (R, 1, M+1)
        else:
            col_last = bh
        if C > 1:
            b1 = jnp.concatenate([b0[:, 1:, :], col_last], axis=1)     # (R, C, M+1)
        else:
            b1 = col_last

        # Haloed staging matrix: stage[r, M + l] = x[row r, sample l];
        # stage[r, :M] = the M samples preceding the row (previous row of this
        # tile, previous tile, or zeros at the very start of the signal).
        if M > 0:
            xh = xh_ref[0, pl.ds(ti, 1), :].astype(jnp.float32)         # (1, M)
            if R > 1:
                prev = jnp.concatenate([xh, xf[:R - 1, W - M:]], axis=0)  # (R, M)
            else:
                prev = xh
            stage = jnp.concatenate([prev, xf], axis=1)                 # (R, M + W)
        else:
            stage = xf

        e0 = e0_ref[...]                                         # (C, W)
        e1 = e1_ref[...]

        def coeff_plane(m):
            # Interpolated coefficient m at every sample of the tile, built by
            # frame->lane expansion fused with the interpolation weights.
            c0 = b0[:, :, m]                                     # (R, C)
            c1 = b1[:, :, m]
            if C == 1:                                           # P multiple of 128
                return c0 * e0 + c1 * e1                         # broadcast mul (VPU)
            hp = jax.lax.Precision.HIGHEST                       # keep f32 accuracy
            return (jnp.dot(c0, e0, preferred_element_type=jnp.float32, precision=hp)
                    + jnp.dot(c1, e1, preferred_element_type=jnp.float32, precision=hp))

        acc = None
        inv_gain = None
        # Time-varying FIR; M+1 is small and static -> fully unrolled dense MACs.
        # (For very large M switch to lax.fori_loop(..., unroll=True).)
        for m in range(Mp1):
            hm = coeff_plane(m)
            if ignore_gain and m == 0:
                gain = hm                                        # interpolated gain
                inv_gain = pl.reciprocal(gain, approx=True)      # EUP slot
                inv_gain = inv_gain * (2.0 - gain * inv_gain)    # 2 Newton steps
                inv_gain = inv_gain * (2.0 - gain * inv_gain)
            term = hm * stage[:, M - m:M - m + W]                # x[t - m]
            acc = term if acc is None else acc + term
        if ignore_gain:
            acc = acc * inv_gain                                 # hoisted out of the loop

        o_ref[0] = acc.astype(o_ref.dtype)                       # lane-dense store

    return kernel


def _plan(T: int, P: int, M: int, target_samples: int):
    """Pick row width W, rows-per-tile R and tile count so that rows are
    lane-dense when cheap, frames never straddle rows, the halo fits in one
    row, and tiles stay within a conservative VMEM budget."""
    g = math.gcd(P, 128)
    lcm = P * (128 // g)
    W = lcm if lcm <= 32768 else P          # multiple of P; multiple of 128 when cheap
    if W < M:                               # a row's halo must fit in the previous row
        W *= _cdiv(M, W)
    rows_needed = _cdiv(T, W)
    # ~10 f32 temporaries of size R*W per tile -> keep R*W <= 1M samples (v7x 64 MiB VMEM)
    rows_cap = max(8, ((1 << 20) // W) // 8 * 8)
    rows_target = max(8, min(rows_cap, (target_samples // W) // 8 * 8))
    if rows_needed <= 8:
        R, n_tiles = rows_needed, 1         # single tile: block covers the full rows dim
    else:
        n_tiles = max(2, _cdiv(rows_needed, rows_target))   # >=2 tiles: pipeline + megacore
        R = min(rows_target, max(8, _cdiv(rows_needed, n_tiles * 8) * 8))
        n_tiles = _cdiv(rows_needed, R)
    return W, R, n_tiles


@functools.partial(jax.jit, static_argnames=("frame_period", "ignore_gain",
                                              "target_tile_samples"))
def all_zero_digital_filter(x, b, *, frame_period: int, ignore_gain: bool = False,
                            target_tile_samples: int = 262144):
    """x: (..., T), b: (..., T/P, M+1) with T == N * frame_period."""
    P = int(frame_period)
    batch = x.shape[:-1]
    T = x.shape[-1]
    N, Mp1 = b.shape[-2], b.shape[-1]
    M = Mp1 - 1
    assert b.shape[:-2] == batch, "x and b must share leading (batch) dims"
    assert T == N * P, "sequence length must equal n_frames * frame_period"

    B = int(np.prod(batch)) if batch else 1
    x2 = x.reshape(B, T)
    b2 = b.reshape(B, N, Mp1)

    W, R, n_tiles = _plan(T, P, M, int(target_tile_samples))
    C = W // P                      # frames per row
    tile = R * W                    # samples per tile
    F = tile // P                   # frames per tile
    rows_total = R * n_tiles
    T_pad = rows_total * W
    N_pad = T_pad // P

    # Pad the tail so tiles divide the signal (output tail is sliced off).
    if T_pad > T:
        x2 = jnp.pad(x2, ((0, 0), (0, T_pad - T)))
    if N_pad > N:
        b2 = jnp.concatenate(
            [b2, jnp.broadcast_to(b2[:, N - 1:N, :], (B, N_pad - N, Mp1))], axis=1)

    # Per-tile halos: M excitation samples + 1 coefficient frame per tile.
    Mh = max(M, 1)
    xt = x2.reshape(B, n_tiles, tile)
    if M > 0:
        x_halo = jnp.concatenate(
            [jnp.zeros((B, 1, M), x2.dtype), xt[:, :-1, tile - M:]], axis=1)
    else:
        x_halo = jnp.zeros((B, n_tiles, 1), x2.dtype)
    nxt = jnp.minimum((jnp.arange(n_tiles) + 1) * F, N_pad - 1)
    b_halo = jnp.take(b2, nxt, axis=1)                           # (B, n_tiles, M+1)

    # Constant expansion+interpolation matrices (same for every tile/batch):
    #   E0[c, l] = [l // P == c] * (1 - (l % P) / P),  E1[c, l] = [l // P == c] * (l % P) / P
    lane = np.arange(W)
    frac = (lane % P).astype(np.float32) / np.float32(P)
    onehot = (lane // P == np.arange(C)[:, None]).astype(np.float32)   # (C, W)
    e0 = jnp.asarray(onehot * (1.0 - frac))
    e1 = jnp.asarray(onehot * frac)

    x_rows = x2.reshape(B, rows_total, W)
    b_rows = b2.reshape(B, rows_total, C, Mp1)

    kernel = _make_zerodf_kernel(P=P, M=M, R=R, W=W, C=C, ignore_gain=ignore_gain)

    out = pl.pallas_call(
        kernel,
        out_shape=jax.ShapeDtypeStruct((B, rows_total, W), x.dtype),
        grid=(B, n_tiles),
        in_specs=[
            pl.BlockSpec((1, R, W), lambda bi, ti: (bi, ti, 0)),          # x rows
            pl.BlockSpec((1, n_tiles, Mh), lambda bi, ti: (bi, 0, 0)),    # x tile halo
            pl.BlockSpec((1, R, C, Mp1), lambda bi, ti: (bi, ti, 0, 0)),  # b frames
            pl.BlockSpec((1, n_tiles, Mp1), lambda bi, ti: (bi, 0, 0)),   # b tile halo
            pl.BlockSpec((C, W), lambda bi, ti: (0, 0)),                  # E0 (constant)
            pl.BlockSpec((C, W), lambda bi, ti: (0, 0)),                  # E1 (constant)
        ],
        out_specs=pl.BlockSpec((1, R, W), lambda bi, ti: (bi, ti, 0)),
        compiler_params=pltpu.CompilerParams(
            dimension_semantics=("parallel", "parallel"),
            vmem_limit_bytes=48 * 1024 * 1024),
    )(x_rows, x_halo, b_rows, b_halo, e0, e1)

    y = out.reshape(B, T_pad)[:, :T]
    return y.reshape(*batch, T) if batch else y.reshape(T)


def _reference(x, b, P, ignore_gain):
    """Pure-JAX reference mirroring the PyTorch module semantics."""
    B, T = x.shape
    Mp1 = b.shape[-1]
    M = Mp1 - 1
    n_idx = jnp.arange(T) // P
    frac = (jnp.arange(T) % P).astype(jnp.float32) / P
    b_next = jnp.concatenate([b[:, 1:], b[:, -1:]], axis=1)
    h = ((1.0 - frac)[None, :, None] * b[:, n_idx, :]
         + frac[None, :, None] * b_next[:, n_idx, :])            # (B, T, M+1)
    if ignore_gain:
        h = h / h[..., :1]
    xp = jnp.pad(x, ((0, 0), (M, 0)))
    y = jnp.zeros((B, T), jnp.float32)
    for m in range(Mp1):
        y = y + h[:, :, m] * xp[:, M - m:M - m + T]
    return y.astype(x.dtype)


if __name__ == "__main__":
    key = jax.random.PRNGKey(0)
    B = 2
    # (P, M, N, gains): covers MXU expansion path, multi-tile + padding + halos,
    # C==1 broadcast path (P multiple of 128), lcm row width (P=80), and M=0.
    configs = [
        (8,   3,  64, (False, True)),
        (8,   5, 200, (True,)),
        (128, 2,   8, (False,)),
        (80, 12,  40, (True,)),
        (8,   0,  64, (False,)),
    ]

    ok = True
    for P, M, N, gains in configs:
        T = N * P
        key, kx, kb = jax.random.split(key, 3)
        x = jax.random.normal(kx, (B, T), dtype=jnp.float32)
        b = jax.random.normal(kb, (B, N, M + 1), dtype=jnp.float32)
        b = b.at[..., 0].add(4.0)   # keep the gain coefficient away from zero
        for ig in gains:
            y = all_zero_digital_filter(x, b, frame_period=P, ignore_gain=ig)
            y = jax.block_until_ready(y)
            y_ref = _reference(x, b, P, ig)
            if not jnp.allclose(y, y_ref, atol=2e-4, rtol=2e-4):
                ok = False
                err = float(jnp.max(jnp.abs(y - y_ref)))
                print(f"MISMATCH P={P} M={M} N={N} ignore_gain={ig}: max abs err {err:e}")

    if ok:
        print("KERNEL_OK")
</pallas_src>

<mosaic_0001>
module attributes {stable_mosaic.version = 11 : i64} {
  func.func @kernel(%arg0: i32, %arg1: i32, %arg2: memref<1x4x128xf32, #tpu.memory_space<vmem>>, %arg3: memref<1x1x3xf32, #tpu.memory_space<vmem>>, %arg4: memref<1x4x16x4xf32, #tpu.memory_space<vmem>>, %arg5: memref<1x1x4xf32, #tpu.memory_space<vmem>>, %arg6: memref<16x128xf32, #tpu.memory_space<vmem>>, %arg7: memref<16x128xf32, #tpu.memory_space<vmem>>, %arg8: memref<1x4x128xf32, #tpu.memory_space<vmem>>) attributes {dimension_semantics = [#tpu.dimension_semantics<parallel>, #tpu.dimension_semantics<parallel>], iteration_bounds = array<i64: 2, 1>, scalar_prefetch = 0 : i64, scratch_operands = 0 : i64, tpu.core_type = #tpu.core_type<tc>, window_params = [{transform_indices = @transform_0, window_bounds = array<i64: 1, 4, 128>}, {transform_indices = @transform_1, window_bounds = array<i64: 1, 1, 3>}, {transform_indices = @transform_2, window_bounds = array<i64: 1, 4, 16, 4>}, {transform_indices = @transform_3, window_bounds = array<i64: 1, 1, 4>}, {pipeline_mode = #tpu.pipeline_mode<synchronous>, transform_indices = @transform_4, window_bounds = array<i64: 16, 128>}, {pipeline_mode = #tpu.pipeline_mode<synchronous>, transform_indices = @transform_5, window_bounds = array<i64: 16, 128>}, {transform_indices = @transform_6, window_bounds = array<i64: 1, 4, 128>}]} {
    %c0 = arith.constant 0 : index
    %c0_0 = arith.constant 0 : index
    %c0_1 = arith.constant 0 : index
    %0 = vector.load %arg2[%c0, %c0_0, %c0_1] : memref<1x4x128xf32, #tpu.memory_space<vmem>>, vector<1x4x128xf32>
    %1 = vector.shape_cast %0 : vector<1x4x128xf32> to vector<4x128xf32>
    %c0_2 = arith.constant 0 : index
    %c0_3 = arith.constant 0 : index
    %c0_4 = arith.constant 0 : index
    %c0_5 = arith.constant 0 : index
    %2 = vector.load %arg4[%c0_2, %c0_3, %c0_4, %c0_5] : memref<1x4x16x4xf32, #tpu.memory_space<vmem>>, vector<1x4x16x4xf32>
    %3 = vector.shape_cast %2 : vector<1x4x16x4xf32> to vector<4x16x4xf32>
    %c0_6 = arith.constant 0 : index
    %4 = arith.index_cast %arg1 : i32 to index
    %c0_7 = arith.constant 0 : index
    %5 = vector.load %arg5[%c0_6, %4, %c0_7] : memref<1x1x4xf32, #tpu.memory_space<vmem>>, vector<1x1x4xf32>
    %6 = vector.shape_cast %5 : vector<1x1x4xf32> to vector<1x4xf32>
    %7 = vector.shape_cast %6 : vector<1x4xf32> to vector<1x1x4xf32>
    %8 = vector.extract_strided_slice %3 {offsets = [1, 0, 0], sizes = [3, 1, 4], strides = [1, 1, 1]} : vector<4x16x4xf32> to vector<3x1x4xf32>
    %9 = tpu.concatenate %8, %7 in 0 : vector<3x1x4xf32>, vector<1x1x4xf32> -> vector<4x1x4xf32>
    %10 = vector.extract_strided_slice %3 {offsets = [0, 1, 0], sizes = [4, 15, 4], strides = [1, 1, 1]} : vector<4x16x4xf32> to vector<4x15x4xf32>
    %11 = tpu.concatenate %10, %9 in 1 : vector<4x15x4xf32>, vector<4x1x4xf32> -> vector<4x16x4xf32>
    %c0_8 = arith.constant 0 : index
    %12 = arith.index_cast %arg1 : i32 to index
    %c0_9 = arith.constant 0 : index
    %13 = vector.load %arg3[%c0_8, %12, %c0_9] : memref<1x1x3xf32, #tpu.memory_space<vmem>>, vector<1x1x3xf32>
    %14 = vector.shape_cast %13 : vector<1x1x3xf32> to vector<1x3xf32>
    %15 = vector.extract_strided_slice %1 {offsets = [0, 125], sizes = [3, 3], strides = [1, 1]} : vector<4x128xf32> to vector<3x3xf32>
    %16 = tpu.concatenate %14, %15 in 0 : vector<1x3xf32>, vector<3x3xf32> -> vector<4x3xf32>
    %17 = tpu.concatenate %16, %1 in 1 : vector<4x3xf32>, vector<4x128xf32> -> vector<4x131xf32>
    %c0_10 = arith.constant 0 : index
    %c0_11 = arith.constant 0 : index
    %18 = vector.load %arg6[%c0_10, %c0_11] : memref<16x128xf32, #tpu.memory_space<vmem>>, vector<16x128xf32>
    %c0_12 = arith.constant 0 : index
    %c0_13 = arith.constant 0 : index
    %19 = vector.load %arg7[%c0_12, %c0_13] : memref<16x128xf32, #tpu.memory_space<vmem>>, vector<16x128xf32>
    %20 = vector.extract_strided_slice %3 {offsets = [0, 0, 0], sizes = [4, 16, 1], strides = [1, 1, 1]} : vector<4x16x4xf32> to vector<4x16x1xf32>
    %21 = vector.shape_cast %20 : vector<4x16x1xf32> to vector<4x16xf32>
    %22 = vector.extract_strided_slice %11 {offsets = [0, 0, 0], sizes = [4, 16, 1], strides = [1, 1, 1]} : vector<4x16x4xf32> to vector<4x16x1xf32>
    %23 = vector.shape_cast %22 : vector<4x16x1xf32> to vector<4x16xf32>
    %cst = arith.constant dense<0.000000e+00> : vector<4x128xf32>
    %24 = tpu.matmul %21, %18, %cst {dimension_numbers = #tpu.dot_dimension_numbers<[1], [0], [0], [1], [0, 0, 1, 1], [], []>, precision = #tpu.contract_precision<fp32>} : vector<4x16xf32>, vector<16x128xf32>, vector<4x128xf32> -> vector<4x128xf32>
    %cst_14 = arith.constant dense<0.000000e+00> : vector<4x128xf32>
    %25 = tpu.matmul %23, %19, %cst_14 {dimension_numbers = #tpu.dot_dimension_numbers<[1], [0], [0], [1], [0, 0, 1, 1], [], []>, precision = #tpu.contract_precision<fp32>} : vector<4x16xf32>, vector<16x128xf32>, vector<4x128xf32> -> vector<4x128xf32>
    %26 = arith.addf %24, %25 : vector<4x128xf32>
    %27 = vector.extract_strided_slice %17 {offsets = [0, 3], sizes = [4, 128], strides = [1, 1]} : vector<4x131xf32> to vector<4x128xf32>
    %28 = arith.mulf %26, %27 : vector<4x128xf32>
    %29 = vector.extract_strided_slice %3 {offsets = [0, 0, 1], sizes = [4, 16, 1], strides = [1, 1, 1]} : vector<4x16x4xf32> to vector<4x16x1xf32>
    %30 = vector.shape_cast %29 : vector<4x16x1xf32> to vector<4x16xf32>
    %31 = vector.extract_strided_slice %11 {offsets = [0, 0, 1], sizes = [4, 16, 1], strides = [1, 1, 1]} : vector<4x16x4xf32> to vector<4x16x1xf32>
    %32 = vector.shape_cast %31 : vector<4x16x1xf32> to vector<4x16xf32>
    %cst_15 = arith.constant dense<0.000000e+00> : vector<4x128xf32>
    %33 = tpu.matmul %30, %18, %cst_15 {dimension_numbers = #tpu.dot_dimension_numbers<[1], [0], [0], [1], [0, 0, 1, 1], [], []>, precision = #tpu.contract_precision<fp32>} : vector<4x16xf32>, vector<16x128xf32>, vector<4x128xf32> -> vector<4x128xf32>
    %cst_16 = arith.constant dense<0.000000e+00> : vector<4x128xf32>
    %34 = tpu.matmul %32, %19, %cst_16 {dimension_numbers = #tpu.dot_dimension_numbers<[1], [0], [0], [1], [0, 0, 1, 1], [], []>, precision = #tpu.contract_precision<fp32>} : vector<4x16xf32>, vector<16x128xf32>, vector<4x128xf32> -> vector<4x128xf32>
    %35 = arith.addf %33, %34 : vector<4x128xf32>
    %36 = vector.extract_strided_slice %17 {offsets = [0, 2], sizes = [4, 128], strides = [1, 1]} : vector<4x131xf32> to vector<4x128xf32>
    %37 = arith.mulf %35, %36 : vector<4x128xf32>
    %38 = arith.addf %28, %37 : vector<4x128xf32>
    %39 = vector.extract_strided_slice %3 {offsets = [0, 0, 2], sizes = [4, 16, 1], strides = [1, 1, 1]} : vector<4x16x4xf32> to vector<4x16x1xf32>
    %40 = vector.shape_cast %39 : vector<4x16x1xf32> to vector<4x16xf32>
    %41 = vector.extract_strided_slice %11 {offsets = [0, 0, 2], sizes = [4, 16, 1], strides = [1, 1, 1]} : vector<4x16x4xf32> to vector<4x16x1xf32>
    %42 = vector.shape_cast %41 : vector<4x16x1xf32> to vector<4x16xf32>
    %cst_17 = arith.constant dense<0.000000e+00> : vector<4x128xf32>
    %43 = tpu.matmul %40, %18, %cst_17 {dimension_numbers = #tpu.dot_dimension_numbers<[1], [0], [0], [1], [0, 0, 1, 1], [], []>, precision = #tpu.contract_precision<fp32>} : vector<4x16xf32>, vector<16x128xf32>, vector<4x128xf32> -> vector<4x128xf32>
    %cst_18 = arith.constant dense<0.000000e+00> : vector<4x128xf32>
    %44 = tpu.matmul %42, %19, %cst_18 {dimension_numbers = #tpu.dot_dimension_numbers<[1], [0], [0], [1], [0, 0, 1, 1], [], []>, precision = #tpu.contract_precision<fp32>} : vector<4x16xf32>, vector<16x128xf32>, vector<4x128xf32> -> vector<4x128xf32>
    %45 = arith.addf %43, %44 : vector<4x128xf32>
    %46 = vector.extract_strided_slice %17 {offsets = [0, 1], sizes = [4, 128], strides = [1, 1]} : vector<4x131xf32> to vector<4x128xf32>
    %47 = arith.mulf %45, %46 : vector<4x128xf32>
    %48 = arith.addf %38, %47 : vector<4x128xf32>
    %49 = vector.extract_strided_slice %3 {offsets = [0, 0, 3], sizes = [4, 16, 1], strides = [1, 1, 1]} : vector<4x16x4xf32> to vector<4x16x1xf32>
    %50 = vector.shape_cast %49 : vector<4x16x1xf32> to vector<4x16xf32>
    %51 = vector.extract_strided_slice %11 {offsets = [0, 0, 3], sizes = [4, 16, 1], strides = [1, 1, 1]} : vector<4x16x4xf32> to vector<4x16x1xf32>
    %52 = vector.shape_cast %51 : vector<4x16x1xf32> to vector<4x16xf32>
    %cst_19 = arith.constant dense<0.000000e+00> : vector<4x128xf32>
    %53 = tpu.matmul %50, %18, %cst_19 {dimension_numbers = #tpu.dot_dimension_numbers<[1], [0], [0], [1], [0, 0, 1, 1], [], []>, precision = #tpu.contract_precision<fp32>} : vector<4x16xf32>, vector<16x128xf32>, vector<4x128xf32> -> vector<4x128xf32>
    %cst_20 = arith.constant dense<0.000000e+00> : vector<4x128xf32>
    %54 = tpu.matmul %52, %19, %cst_20 {dimension_numbers = #tpu.dot_dimension_numbers<[1], [0], [0], [1], [0, 0, 1, 1], [], []>, precision = #tpu.contract_precision<fp32>} : vector<4x16xf32>, vector<16x128xf32>, vector<4x128xf32> -> vector<4x128xf32>
    %55 = arith.addf %53, %54 : vector<4x128xf32>
    %56 = vector.extract_strided_slice %17 {offsets = [0, 0], sizes = [4, 128], strides = [1, 1]} : vector<4x131xf32> to vector<4x128xf32>
    %57 = arith.mulf %55, %56 : vector<4x128xf32>
    %58 = arith.addf %48, %57 : vector<4x128xf32>
    %c0_21 = arith.constant 0 : index
    %c0_22 = arith.constant 0 : index
    %c0_23 = arith.constant 0 : index
    %59 = vector.load %arg8[%c0_21, %c0_22, %c0_23] : memref<1x4x128xf32, #tpu.memory_space<vmem>>, vector<1x4x128xf32>
    %60 = vector.shape_cast %59 : vector<1x4x128xf32> to vector<4x128xf32>
    %61 = vector.shape_cast %58 : vector<4x128xf32> to vector<1x4x128xf32>
    tpu.vector_store %arg8[%c0_21, %c0_22, %c0_23], %61 {strides = array<i32>} : memref<1x4x128xf32, #tpu.memory_space<vmem>>, vector<1x4x128xf32>,
    return
  }
  func.func @transform_0(%arg0: i32, %arg1: i32) -> (i32, i32, i32) {
    %c0_i32 = arith.constant 0 : i32
    %c0_i32_0 = arith.constant 0 : i32
    return %arg0, %arg1, %c0_i32 : i32, i32, i32
  }
  func.func @transform_1(%arg0: i32, %arg1: i32) -> (i32, i32, i32) {
    %c0_i32 = arith.constant 0 : i32
    %c0_i32_0 = arith.constant 0 : i32
    %c0_i32_1 = arith.constant 0 : i32
    return %arg0, %c0_i32, %c0_i32_0 : i32, i32, i32
  }
  func.func @transform_2(%arg0: i32, %arg1: i32) -> (i32, i32, i32, i32) {
    %c0_i32 = arith.constant 0 : i32
    %c0_i32_0 = arith.constant 0 : i32
    %c0_i32_1 = arith.constant 0 : i32
    return %arg0, %arg1, %c0_i32, %c0_i32_0 : i32, i32, i32, i32
  }
  func.func @transform_3(%arg0: i32, %arg1: i32) -> (i32, i32, i32) {
    %c0_i32 = arith.constant 0 : i32
    %c0_i32_0 = arith.constant 0 : i32
    %c0_i32_1 = arith.constant 0 : i32
    return %arg0, %c0_i32, %c0_i32_0 : i32, i32, i32
  }
  func.func @transform_4(%arg0: i32, %arg1: i32) -> (i32, i32) {
    %c0_i32 = arith.constant 0 : i32
    %c0_i32_0 = arith.constant 0 : i32
    %c0_i32_1 = arith.constant 0 : i32
    return %c0_i32, %c0_i32_0 : i32, i32
  }
  func.func @transform_5(%arg0: i32, %arg1: i32) -> (i32, i32) {
    %c0_i32 = arith.constant 0 : i32
    %c0_i32_0 = arith.constant 0 : i32
    %c0_i32_1 = arith.constant 0 : i32
    return %c0_i32, %c0_i32_0 : i32, i32
  }
  func.func @transform_6(%arg0: i32, %arg1: i32) -> (i32, i32, i32) {
    %c0_i32 = arith.constant 0 : i32
    %c0_i32_0 = arith.constant 0 : i32
    return %arg0, %arg1, %c0_i32 : i32, i32, i32
  }
}

</mosaic_0001>

<llo_original>
// kernel: all_zero_digital_filter.1
$region0: #{all_zero_digital_filter.1}
  #allocation0 [shape = 'u32[]', space=smem, size = 0x4, offset = 0x4, fixed_abs, tag = 'smem constant byte address 0x4 - core index']
  #allocation1 [shape = 'u32[144,128]{1,0:T(1,128)}', space=vmem, size = 0x12000, scoped, tag = 'internal scratch']
  %s0 = inlined_call_operand.vmem [shape: f32[2,4,128], index: 0, kind: input, shape index: {}]
  %s1 = inlined_call_operand.vmem [shape: f32[2,1,3], index: 1, kind: input, shape index: {}]
  %s2 = inlined_call_operand.vmem [shape: f32[2,4,16,4], index: 2, kind: input, shape index: {}]
  %s3 = inlined_call_operand.vmem [shape: f32[2,1,4], index: 3, kind: input, shape index: {}]
  %s4 = inlined_call_operand.vmem [shape: f32[16,128], index: 4, kind: input, shape index: {}]
  %s5 = inlined_call_operand.vmem [shape: f32[16,128], index: 5, kind: input, shape index: {}]
  %s6 = inlined_call_operand.vmem [shape: f32[2,4,128], index: 6, kind: output, shape index: {}]
  %s7 = sld [smem:[#allocation0]]
  $region57: #{all_zero_digital_filter.1} parent=0
    _
  %s9 = ssub.s32 1, %s7
  %s10 = scalar_select 0, %s9, %s7
  loop: start=0, step=1, limit=4
  $region2: #{all_zero_digital_filter.1} parent=0 // loop_pre_header
    _
  $region3: #{all_zero_digital_filter.1} parent=0 // loop_header
    %s12 = sphi 0, %s16
    %p13 = scmp.ge.s32.totalorder %s12, 4
    %s19 = sphi 0, %s31
    %s20 = sphi 0, %s27
    %s21 = sphi 0, %s19
    %s22 = sphi 0, %s20
    %s23 = sphi 0, %s21
    %s24 = sphi 0, %s22
    %s36 = sphi 0, %s38
    %s39 = sphi 0, %s36
    %s40 = sphi 0, %s39
    %s56 = sphi 0, %s40
    %s62 = sphi 0, %s64
    %s65 = sphi 0, %s62
    %s66 = sphi 0, %s65
    %s82 = sphi 0, %s66
    %s90 = sphi 0, %s92
    %s93 = sphi 0, %s90
    %s94 = sphi 0, %s93
    %s110 = sphi 0, %s94
    %s116 = sphi 0, %s118
    %s119 = sphi 0, %s116
    %s120 = sphi 0, %s119
    %s136 = sphi 0, %s120
    %s140 = sphi 0, %s140
    %s142 = sphi 0, %s140
    %s143 = sphi 0, %s142
    %s157 = sphi 0, %s143
    %s161 = sphi 0, %s161
    %s163 = sphi 0, %s161
    %s164 = sphi 0, %s163
    %s178 = sphi 0, %s164
    %s186 = sphi 0, %s188
    %s189 = sphi 0, %s186
    %s190 = sphi 0, %s189
    %s206 = sphi 0, %s190
  $region4: #{all_zero_digital_filter.1} parent=0 // loop_header_branch
    %15 = sbr.rel (%p13) target = $region8
  $region5: #{all_zero_digital_filter.1} parent=0 // loop_body
    %s17 = ssub.s32 %s12, 1
    %s18 = ssub.s32 %s12, 2
    %s25 = sadd.s32 1, %s20
    %p26 = scmp.ge.s32.totalorder %s25, 1
    %s27 = scalar_select %p26, 0, %s25
    %s28 = sadd.s32 1, %s19
    %s29 = scalar_select %p26, %s28, %s19
    %p30 = scmp.ge.s32.totalorder %s29, 2
    %s31 = scalar_select %p30, 0, %s29
    %s32 = ssub.s32 %s19, %s31
    %s33 = ssub.s32 %s20, %s27
    %s34 = sor.u32 %s32, %s33
    %p35 = scmp.eq.s32.totalorder %s34, 0
    %s37 = sadd.s32 %s36, 1
    %s38 = scalar_select %p35, %s36, %s37
    %p41 = pneg %p35
    %p42 = scmp.eq.s32.totalorder %s12, 1
    %p43 = por %p41, %p42
    %p44 = scmp.ne.s32.totalorder %s36, %s39
    %p45 = scmp.eq.s32.totalorder %s12, 0
    %p46 = por %p44, %p45
    %p47 = scmp.ne.s32.totalorder %s36, %s39
    %p48 = scmp.eq.s32.totalorder %s17, 1
    %p49 = por %p47, %p48
    %p50 = scmp.ne.s32.totalorder %s39, %s40
    %p51 = scmp.eq.s32.totalorder %s17, 0
    %p52 = por %p50, %p51
    %p53 = scmp.ne.s32.totalorder %s39, %s40
    %p54 = scmp.eq.s32.totalorder %s18, 1
    %p55 = por %p53, %p54
    %p57 = scmp.ne.s32.totalorder %s40, %s56
    %p58 = scmp.eq.s32.totalorder %s18, 0
    %p59 = por %p57, %p58
    %s60 = ssub.s32 %s19, %s31
    %p61 = scmp.eq.s32.totalorder %s60, 0
    %s63 = sadd.s32 %s62, 1
    %s64 = scalar_select %p61, %s62, %s63
    %p67 = pneg %p61
    %p68 = scmp.eq.s32.totalorder %s12, 1
    %p69 = por %p67, %p68
    %p70 = scmp.ne.s32.totalorder %s62, %s65
    %p71 = scmp.eq.s32.totalorder %s12, 0
    %p72 = por %p70, %p71
    %p73 = scmp.ne.s32.totalorder %s62, %s65
    %p74 = scmp.eq.s32.totalorder %s17, 1
    %p75 = por %p73, %p74
    %p76 = scmp.ne.s32.totalorder %s65, %s66
    %p77 = scmp.eq.s32.totalorder %s17, 0
    %p78 = por %p76, %p77
    %p79 = scmp.ne.s32.totalorder %s65, %s66
    %p80 = scmp.eq.s32.totalorder %s18, 1
    %p81 = por %p79, %p80
    %p83 = scmp.ne.s32.totalorder %s66, %s82
    %p84 = scmp.eq.s32.totalorder %s18, 0
    %p85 = por %p83, %p84
    %s86 = ssub.s32 %s19, %s31
    %s87 = ssub.s32 %s20, %s27
    %s88 = sor.u32 %s86, %s87
    %p89 = scmp.eq.s32.totalorder %s88, 0
    %s91 = sadd.s32 %s90, 1
    %s92 = scalar_select %p89, %s90, %s91
    %p95 = pneg %p89
    %p96 = scmp.eq.s32.totalorder %s12, 1
    %p97 = por %p95, %p96
    %p98 = scmp.ne.s32.totalorder %s90, %s93
    %p99 = scmp.eq.s32.totalorder %s12, 0
    %p100 = por %p98, %p99
    %p101 = scmp.ne.s32.totalorder %s90, %s93
    %p102 = scmp.eq.s32.totalorder %s17, 1
    %p103 = por %p101, %p102
    %p104 = scmp.ne.s32.totalorder %s93, %s94
    %p105 = scmp.eq.s32.totalorder %s17, 0
    %p106 = por %p104, %p105
    %p107 = scmp.ne.s32.totalorder %s93, %s94
    %p108 = scmp.eq.s32.totalorder %s18, 1
    %p109 = por %p107, %p108
    %p111 = scmp.ne.s32.totalorder %s94, %s110
    %p112 = scmp.eq.s32.totalorder %s18, 0
    %p113 = por %p111, %p112
    %s114 = ssub.s32 %s19, %s31
    %p115 = scmp.eq.s32.totalorder %s114, 0
    %s117 = sadd.s32 %s116, 1
    %s118 = scalar_select %p115, %s116, %s117
    %p121 = pneg %p115
    %p122 = scmp.eq.s32.totalorder %s12, 1
    %p123 = por %p121, %p122
    %p124 = scmp.ne.s32.totalorder %s116, %s119
    %p125 = scmp.eq.s32.totalorder %s12, 0
    %p126 = por %p124, %p125
    %p127 = scmp.ne.s32.totalorder %s116, %s119
    %p128 = scmp.eq.s32.totalorder %s17, 1
    %p129 = por %p127, %p128
    %p130 = scmp.ne.s32.totalorder %s119, %s120
    %p131 = scmp.eq.s32.totalorder %s17, 0
    %p132 = por %p130, %p131
    %p133 = scmp.ne.s32.totalorder %s119, %s120
    %p134 = scmp.eq.s32.totalorder %s18, 1
    %p135 = por %p133, %p134
    %p137 = scmp.ne.s32.totalorder %s120, %s136
    %p138 = scmp.eq.s32.totalorder %s18, 0
    %p139 = por %p137, %p138
    %s141 = sadd.s32 %s140, 1
    %p144 = scmp.eq.s32.totalorder %s12, 1
    %p145 = scmp.ne.s32.totalorder %s140, %s142
    %p146 = scmp.eq.s32.totalorder %s12, 0
    %p147 = por %p145, %p146
    %p148 = scmp.ne.s32.totalorder %s140, %s142
    %p149 = scmp.eq.s32.totalorder %s17, 1
    %p150 = por %p148, %p149
    %p151 = scmp.ne.s32.totalorder %s142, %s143
    %p152 = scmp.eq.s32.totalorder %s17, 0
    %p153 = por %p151, %p152
    %p154 = scmp.ne.s32.totalorder %s142, %s143
    %p155 = scmp.eq.s32.totalorder %s18, 1
    %p156 = por %p154, %p155
    %p158 = scmp.ne.s32.totalorder %s143, %s157
    %p159 = scmp.eq.s32.totalorder %s18, 0
    %p160 = por %p158, %p159
    %s162 = sadd.s32 %s161, 1
    %p165 = scmp.eq.s32.totalorder %s12, 1
    %p166 = scmp.ne.s32.totalorder %s161, %s163
    %p167 = scmp.eq.s32.totalorder %s12, 0
    %p168 = por %p166, %p167
    %p169 = scmp.ne.s32.totalorder %s161, %s163
    %p170 = scmp.eq.s32.totalorder %s17, 1
    %p171 = por %p169, %p170
    %p172 = scmp.ne.s32.totalorder %s163, %s164
    %p173 = scmp.eq.s32.totalorder %s17, 0
    %p174 = por %p172, %p173
    %p175 = scmp.ne.s32.totalorder %s163, %s164
    %p176 = scmp.eq.s32.totalorder %s18, 1
    %p177 = por %p175, %p176
    %p179 = scmp.ne.s32.totalorder %s164, %s178
    %p180 = scmp.eq.s32.totalorder %s18, 0
    %p181 = por %p179, %p180
    %s182 = ssub.s32 %s19, %s31
    %s183 = ssub.s32 %s20, %s27
    %s184 = sor.u32 %s182, %s183
    %p185 = scmp.eq.s32.totalorder %s184, 0
    %s187 = sadd.s32 %s186, 1
    %s188 = scalar_select %p185, %s186, %s187
    %p191 = pneg %p185
    %p192 = scmp.eq.s32.totalorder %s12, 1
    %p193 = por %p191, %p192
    %p194 = scmp.ne.s32.totalorder %s186, %s189
    %p195 = scmp.eq.s32.totalorder %s12, 0
    %p196 = por %p194, %p195
    %p197 = scmp.ne.s32.totalorder %s186, %s189
    %p198 = scmp.eq.s32.totalorder %s17, 1
    %p199 = por %p197, %p198
    %p200 = scmp.ne.s32.totalorder %s189, %s190
    %p201 = scmp.eq.s32.totalorder %s17, 0
    %p202 = por %p200, %p201
    %p203 = scmp.ne.s32.totalorder %s189, %s190
    %p204 = scmp.eq.s32.totalorder %s18, 1
    %p205 = por %p203, %p204
    %p207 = scmp.ne.s32.totalorder %s190, %s206
    %p208 = scmp.eq.s32.totalorder %s18, 0
    %p209 = por %p207, %p208
    %p210 = scmp.le.s32.totalorder 1, %s12
    %p211 = scmp.lt.s32.totalorder %s12, 3
    %p212 = pnand %p210, %p211
    %p213 = pneg %p212
    // Predicated region
    $region9: #{all_zero_digital_filter.1} parent=5 // pred_check
      _
    $region10: #{all_zero_digital_filter.1} parent=5 // pred_check_branch
      %215 = sbr.rel (%p212) target = $region12
    $region11: #{all_zero_digital_filter.1} parent=5 // pred_region
      %s216 = ssub.s32 %s12, 1
      // Predicated region
      $region13: #{all_zero_digital_filter.1} parent=11 // pred_check
        %p217 = pneg %p153
      $region14: #{all_zero_digital_filter.1} parent=11 // pred_check_branch
        %219 = sbr.rel (%p217) target = $region16
      $region15: #{all_zero_digital_filter.1} parent=11 // pred_region
        _
      $region16: #{all_zero_digital_filter.1} parent=11 // pred_fallthru
        _
      // Predicated region
      $region17: #{all_zero_digital_filter.1} parent=11 // pred_check
        %p220 = pneg %p174
      $region18: #{all_zero_digital_filter.1} parent=11 // pred_check_branch
        %222 = sbr.rel (%p220) target = $region20
      $region19: #{all_zero_digital_filter.1} parent=11 // pred_region
        _
      $region20: #{all_zero_digital_filter.1} parent=11 // pred_fallthru
        _
    $region12: #{all_zero_digital_filter.1} parent=5 // pred_fallthru
      _
    %p223 = scmp.lt.s32.totalorder %s12, 2
    // Predicated region
    $region21: #{all_zero_digital_filter.1} parent=5 // pred_check
      %p224 = pneg %p223
    $region22: #{all_zero_digital_filter.1} parent=5 // pred_check_branch
      %226 = sbr.rel (%p224) target = $region24
    $region23: #{all_zero_digital_filter.1} parent=5 // pred_region
      // Predicated region
      $region25: #{all_zero_digital_filter.1} parent=23 // pred_check
        %p227 = pneg %p46
      $region26: #{all_zero_digital_filter.1} parent=23 // pred_check_branch
        %229 = sbr.rel (%p227) target = $region28
      $region27: #{all_zero_digital_filter.1} parent=23 // pred_region
        %p230 = scmp.lt.s32.totalorder %s19, 1
        %s231 = scalar_select %p230, %s19, 1
        %p232 = scmp.lt.s32.totalorder %s20, 0
        %s233 = scalar_select %p232, %s20, 0
        %s234 = sadd.s32 %s233, %s231
        %s235 = smul.addr %s234, 4
        %s236 = scalar_lea.vmem %s0, %s235
      $region28: #{all_zero_digital_filter.1} parent=23 // pred_fallthru
        _
      // Predicated region
      $region29: #{all_zero_digital_filter.1} parent=23 // pred_check
        %p237 = pneg %p72
      $region30: #{all_zero_digital_filter.1} parent=23 // pred_check_branch
        %239 = sbr.rel (%p237) target = $region32
      $region31: #{all_zero_digital_filter.1} parent=23 // pred_region
        %p240 = scmp.lt.s32.totalorder %s19, 1
        %s241 = scalar_select %p240, %s19, 1
        %s242 = scalar_lea.vmem %s1, %s241
      $region32: #{all_zero_digital_filter.1} parent=23 // pred_fallthru
        _
      // Predicated region
      $region33: #{all_zero_digital_filter.1} parent=23 // pred_check
        %p243 = pneg %p100
      $region34: #{all_zero_digital_filter.1} parent=23 // pred_check_branch
        %245 = sbr.rel (%p243) target = $region36
      $region35: #{all_zero_digital_filter.1} parent=23 // pred_region
        %s246 = smul.u32 4, %s20
        %p247 = scmp.lt.s32.totalorder %s19, 1
        %s248 = scalar_select %p247, %s19, 1
        %p249 = scmp.lt.s32.totalorder %s246, 3
        %s250 = scalar_select %p249, %s246, 3
        %s251 = smul.addr %s250, 2
        %s252 = smul.addr %s248, 8
        %s253 = sadd.s32 %s251, %s252
        %s254 = smul.addr %s253, 8
        %s255 = scalar_lea.vmem %s2, %s254
        %s256 = smul.u32 4, %s20
      $region36: #{all_zero_digital_filter.1} parent=23 // pred_fallthru
        _
      // Predicated region
      $region37: #{all_zero_digital_filter.1} parent=23 // pred_check
        %p257 = pneg %p126
      $region38: #{all_zero_digital_filter.1} parent=23 // pred_check_branch
        %259 = sbr.rel (%p257) target = $region40
      $region39: #{all_zero_digital_filter.1} parent=23 // pred_region
        %p260 = scmp.lt.s32.totalorder %s19, 1
        %s261 = scalar_select %p260, %s19, 1
        %s262 = scalar_lea.vmem %s3, %s261
      $region40: #{all_zero_digital_filter.1} parent=23 // pred_fallthru
        _
    $region24: #{all_zero_digital_filter.1} parent=5 // pred_fallthru
      _
    %p263 = scmp.le.s32.totalorder 1, %s12
    %p264 = scmp.lt.s32.totalorder %s12, 3
    %p265 = pnand %p263, %p264
    %p266 = pneg %p265
    // Predicated region
    $region41: #{all_zero_digital_filter.1} parent=5 // pred_check
      _
    $region42: #{all_zero_digital_filter.1} parent=5 // pred_check_branch
      %268 = sbr.rel (%p265) target = $region44
    $region43: #{all_zero_digital_filter.1} parent=5 // pred_region
      %s269 = ssub.s32 %s12, 1
      %p270 = scmp.lt.s32.totalorder %s21, 1
      %s271 = scalar_select %p270, %s21, 1
      %p272 = scmp.lt.s32.totalorder %s22, 0
      %s273 = scalar_select %p272, %s22, 0
      %s274 = sadd.s32 %s273, %s271
      %s275 = smul.addr %s274, 4
      %s276 = scalar_lea.vmem %s0, %s275
      %p277 = pneg %p52
      %p278 = pneg %p49
      %p279 = scmp.lt.s32.totalorder %s21, 1
      %s280 = scalar_select %p279, %s21, 1
      %s281 = scalar_lea.vmem %s1, %s280
      %p282 = pneg %p78
      %p283 = pneg %p75
      %s284 = smul.u32 4, %s22
      %p285 = scmp.lt.s32.totalorder %s21, 1
      %s286 = scalar_select %p285, %s21, 1
      %p287 = scmp.lt.s32.totalorder %s284, 3
      %s288 = scalar_select %p287, %s284, 3
      %s289 = smul.addr %s288, 2
      %s290 = smul.addr %s286, 8
      %s291 = sadd.s32 %s289, %s290
      %s292 = smul.addr %s291, 8
      %s293 = scalar_lea.vmem %s2, %s292
      %p294 = pneg %p106
      %p295 = pneg %p103
      %p296 = scmp.lt.s32.totalorder %s21, 1
      %s297 = scalar_select %p296, %s21, 1
      %s298 = scalar_lea.vmem %s3, %s297
      %p299 = pneg %p132
      %p300 = pneg %p129
      %p301 = pneg %p153
      %p302 = pneg %p150
      %p303 = pneg %p174
      %p304 = pneg %p171
      %p305 = pneg %p202
      %p306 = pneg %p199
      %p307 = scmp.lt.s32.totalorder %s21, 1
      %s308 = scalar_select %p307, %s21, 1
      %p309 = scmp.lt.s32.totalorder %s22, 0
      %s310 = scalar_select %p309, %s22, 0
      %s311 = sadd.s32 %s310, %s308
      %s312 = smul.addr %s311, 4
      %s313 = scalar_lea.vmem %s6, %s312
      %p314 = scmp.lt.s32.totalorder %s21, 1
      %s315 = scalar_select %p314, %s21, 1
      %p316 = scmp.lt.s32.totalorder %s22, 0
      %s317 = scalar_select %p316, %s22, 0
      %s318 = sadd.s32 %s317, %s315
      %s319 = smul.addr %s318, 4
      %s320 = scalar_lea.vmem %s0, %s319
      %p321 = scmp.lt.s32.totalorder %s21, 1
      %s322 = scalar_select %p321, %s21, 1
      %s323 = scalar_lea.vmem %s1, %s322
      %s324 = smul.u32 4, %s22
      %p325 = scmp.lt.s32.totalorder %s21, 1
      %s326 = scalar_select %p325, %s21, 1
      %p327 = scmp.lt.s32.totalorder %s324, 3
      %s328 = scalar_select %p327, %s324, 3
      %s329 = smul.addr %s328, 2
      %s330 = smul.addr %s326, 8
      %s331 = sadd.s32 %s329, %s330
      %s332 = smul.addr %s331, 8
      %s333 = scalar_lea.vmem %s2, %s332
      %s334 = smul.u32 4, %s22
      %p335 = scmp.lt.s32.totalorder %s21, 1
      %s336 = scalar_select %p335, %s21, 1
      %s337 = scalar_lea.vmem %s3, %s336
      %p338 = scmp.lt.s32.totalorder %s21, 1
      %s339 = scalar_select %p338, %s21, 1
      %p340 = scmp.lt.s32.totalorder %s22, 0
      %s341 = scalar_select %p340, %s22, 0
      %s342 = sadd.s32 %s341, %s339
      %s343 = smul.addr %s342, 4
      %s344 = scalar_lea.vmem %s6, %s343
      %v345 = vld [vmem:[%s320] sm:$0xf]
      %v346 = vld [vmem:[%s333] sm:$0xff]
      %v347 = vld [vmem:[%s333 + $0x8] sm:$0xff]
      %v348 = vld [vmem:[%s333 + $0x10] sm:$0xff]
      %v349 = vld [vmem:[%s333 + $0x18] sm:$0xff]
      %v350 = vld [vmem:[%s333 + $0x20] sm:$0xff]
      %v351 = vld [vmem:[%s333 + $0x28] sm:$0xff]
      %v352 = vld [vmem:[%s333 + $0x30] sm:$0xff]
      %v353 = vld [vmem:[%s333 + $0x38] sm:$0xff]
      %s354 = scalar_lea.vmem %s337, %s22
      %v355 = vld [vmem:[%s354] sm:$0x1]
      %vm364 = vcmask 1046528
      %v365 = vrot.slane %v346, 1
      %v366 = vrot.slane %v347, 1
      %v367 = vsel %vm364, %v365, %v366
      %v368 = vrot.slane %v348, 1
      %v369 = vrot.slane %v349, 1
      %v370 = vsel %vm364, %v368, %v369
      %v371 = vrot.slane %v350, 1
      %v372 = vrot.slane %v351, 1
      %v373 = vsel %vm364, %v371, %v372
      %v374 = vrot.slane %v352, 1
      %v375 = vrot.slane %v353, 1
      %v376 = vsel %vm364, %v374, %v375
      %v382 = vrot.slane %v355, 1
      %v387 = vsel %vm364, %v366, %v368
      %v388 = vsel %vm364, %v369, %v371
      %v389 = vsel %vm364, %v372, %v374
      %v390 = vsel %vm364, %v375, %v382
      %s391 = scalar_lea.vmem %s323, %s22
      %v392 = vld [vmem:[%s391] sm:$0x1]
      %v394 = vrot.slane %v345, 7
      %395 = vrot.lane.b32.xlu0 %v394, 3
      %v396 = vpop.permute.xlu0 %395
      %vm398 = vcmask 1040384
      %v399 = vsel %vm398, %v392, %v396
      %400 = vrot.lane.b32.xlu0 %v345, 3
      %v401 = vpop.permute.xlu0 %400
      %vm403 = vcmask 23552
      %v404 = vsel %vm403, %v399, %v401
      %v405 = vld [vmem:[%s4] sm:$0xff]
      %v406 = vld [vmem:[%s4 + $0x8] sm:$0xff]
      %v407 = vld [vmem:[%s5] sm:$0xff]
      %v408 = vld [vmem:[%s5 + $0x8] sm:$0xff]
      %413 = vset.pattern.permute.xlu0 0
      %414 = vperm.xlu0 %413, %v367
      %v415 = vpop.permute.xlu0 %414
      %416 = vset.pattern.permute.xlu0 0
      %417 = vperm.xlu0 %416, %v387
      %v418 = vpop.permute.xlu0 %417
      %419 = vset.pattern.permute.xlu0 0
      %420 = vperm.xlu0 %419, %v370
      %v421 = vpop.permute.xlu0 %420
      %422 = vset.pattern.permute.xlu0 0
      %423 = vperm.xlu0 %422, %v388
      %v424 = vpop.permute.xlu0 %423
      %425 = vset.pattern.permute.xlu0 0
      %426 = vperm.xlu0 %425, %v373
      %v427 = vpop.permute.xlu0 %426
      %428 = vset.pattern.permute.xlu0 0
      %429 = vperm.xlu0 %428, %v389
      %v430 = vpop.permute.xlu0 %429
      %431 = vset.pattern.permute.xlu0 0
      %432 = vperm.xlu0 %431, %v376
      %v433 = vpop.permute.xlu0 %432
      %434 = vset.pattern.permute.xlu0 0
      %435 = vperm.xlu0 %434, %v390
      %v436 = vpop.permute.xlu0 %435
      %v437 = vlaneseq
      %v438 = vand.u32 %v437, 127
      %v439 = vlaneseq
      %v440 = vshrl.u32 %v439, 7
      %v441 = vsub.s32 %v438, %v440
      %v442 = vrot.slane %v415, %v441
      %v443 = vadd.s32 %v438, 4294967288
      %v444 = vlaneseq
      %v445 = vshrl.u32 %v444, 7
      %v446 = vsub.s32 %v443, %v445
      %v447 = vrot.slane %v418, %v446
      %vm448 = vcmask 130112
      %v449 = vsel %vm448, %v447, %v442
      %v450 = vlaneseq
      %v451 = vshrl.u32 %v450, 7
      %v452 = vsub.s32 %v438, %v451
      %v453 = vrot.slane %v421, %v452
      %v454 = vlaneseq
      %v455 = vshrl.u32 %v454, 7
      %v456 = vsub.s32 %v443, %v455
      %v457 = vrot.slane %v424, %v456
      %v458 = vsel %vm448, %v457, %v453
      %v459 = vlaneseq
      %v460 = vshrl.u32 %v459, 7
      %v461 = vsub.s32 %v438, %v460
      %v462 = vrot.slane %v427, %v461
      %v463 = vlaneseq
      %v464 = vshrl.u32 %v463, 7
      %v465 = vsub.s32 %v443, %v464
      %v466 = vrot.slane %v430, %v465
      %v467 = vsel %vm448, %v466, %v462
      %v468 = vlaneseq
      %v469 = vshrl.u32 %v468, 7
      %v470 = vsub.s32 %v438, %v469
      %v471 = vrot.slane %v433, %v470
      %v472 = vlaneseq
      %v473 = vshrl.u32 %v472, 7
      %v474 = vsub.s32 %v443, %v473
      %v475 = vrot.slane %v436, %v474
      %v476 = vsel %vm448, %v475, %v471
      %vm477 = vcmask 1041409
      %v478 = vsel %vm477, %v458, %v449
      %vm479 = vcmask 1042434
      %v480 = vsel %vm479, %v467, %v478
      %vm481 = vcmask 1043459
      %v482 = vsel %vm481, %v476, %v480
      %vm483 = vcmask 130048
      %v484 = vsel %vm483, %v482, 0
      %486 = vmatprep.subr.mxu0 0.0
      %487 = vmatpush1.msra.mxu0 0.0
      %488 = vmatprep.subr.mxu0 0.0
      %489 = vmatpush1.msra.mxu0 0.0
      %490 = vmatprep.subr.mxu0 0.0
      %491 = vmatpush1.msra.mxu0 0.0
      %492 = vmatprep.subr.mxu0 0.0
      %493 = vmatpush1.msra.mxu0 0.0
      %494 = vmatprep.subr.mxu0 0.0
      %495 = vmatpush1.msra.mxu0 0.0
      %496 = vmatprep.subr.mxu0 0.0
      %497 = vmatpush1.msra.mxu0 0.0
      %498 = vmatprep.subr.mxu0 0.0
      %499 = vmatpush1.msra.mxu0 0.0
      %500 = vmatprep.subr.mxu0 0.0
      %501 = vmatpush1.msra.mxu0 0.0
      %502 = vmatprep.subr.mxu0 0.0
      %503 = vmatpush1.msra.mxu0 0.0
      %504 = vmatprep.subr.mxu0 0.0
      %505 = vmatpush1.msra.mxu0 0.0
      %506 = vmatprep.subr.mxu0 0.0
      %507 = vmatpush1.msra.mxu0 0.0
      %508 = vmatprep.subr.mxu0 0.0
      %509 = vmatpush1.msra.mxu0 0.0
      %510 = vmatprep.subr.mxu0 0.0
      %511 = vmatpush1.msra.mxu0 0.0
      %512 = vmatprep.subr.mxu0 0.0
      %513 = vmatpush1.msra.mxu0 0.0
      %514 = vmatprep.subr.mxu0 0.0
      %v515 = vand.u32 %v408, 4294901760
      %516 = vmatpush1.msra.mxu0 %v515
      %517 = vmatprep.subr.mxu0 0.0
      %v518 = vand.u32 %v407, 4294901760
      %519 = vmatpush1.msra.mxu0 %v518
      %520 = vmatprep.subr.mxu0 0.0
      %521 = vmatpush2.msra.mxu0 0.0
      %522 = vmatprep.subr.mxu0 0.0
      %523 = vmatpush2.msra.mxu0 0.0
      %524 = vmatprep.subr.mxu0 0.0
      %525 = vmatpush2.msra.mxu0 0.0
      %526 = vmatprep.subr.mxu0 0.0
      %527 = vmatpush2.msra.mxu0 0.0
      %528 = vmatprep.subr.mxu0 0.0
      %529 = vmatpush2.msra.mxu0 0.0
      %530 = vmatprep.subr.mxu0 0.0
      %531 = vmatpush2.msra.mxu0 0.0
      %532 = vmatprep.subr.mxu0 0.0
      %533 = vmatpush2.msra.mxu0 0.0
      %534 = vmatprep.subr.mxu0 0.0
      %535 = vmatpush2.msra.mxu0 0.0
      %536 = vmatprep.subr.mxu0 0.0
      %537 = vmatpush2.msra.mxu0 0.0
      %538 = vmatprep.subr.mxu0 0.0
      %539 = vmatpush2.msra.mxu0 0.0
      %540 = vmatprep.subr.mxu0 0.0
      %541 = vmatpush2.msra.mxu0 0.0
      %542 = vmatprep.subr.mxu0 0.0
      %543 = vmatpush2.msra.mxu0 0.0
      %544 = vmatprep.subr.mxu0 0.0
      %545 = vmatpush2.msra.mxu0 0.0
      %546 = vmatprep.subr.mxu0 0.0
      %547 = vmatpush2.msra.mxu0 0.0
      %548 = vmatprep.subr.mxu0 0.0
      %549 = vmatpush2.msra.mxu0 0.0
      %550 = vmatprep.subr.mxu0 0.0
      %551 = vmatpush2.msra.mxu0 0.0
      %552 = vmatprep.mubr.f32.mxu0 0.0
      %v553 = vand.u32 %v484, 4294901760
      %v554 = vsub.f32 %v484, %v553
      %v555 = vand.u32 %v554, 4294901760
      %v556 = vsub.f32 %v554, %v555
      %v557 = vand.u32 %v556, 4294901760
      %558 = vmatmul.mubr.f32.gmra.mxu0 %v557
      %v559 = vpop.f32.mrf.mxu0
      %v560 = vadd.f32 0.0, %v559
      %v561 = vpop.f32.mrf.mxu0
      %562 = vdwg.mxu0
      %563 = vmatprep.subr.mxu0 0.0
      %564 = vmatpush1.msra.mxu0 0.0
      %565 = vmatprep.subr.mxu0 0.0
      %566 = vmatpush1.msra.mxu0 0.0
      %567 = vmatprep.subr.mxu0 0.0
      %568 = vmatpush1.msra.mxu0 0.0
      %569 = vmatprep.subr.mxu0 0.0
      %570 = vmatpush1.msra.mxu0 0.0
      %571 = vmatprep.subr.mxu0 0.0
      %572 = vmatpush1.msra.mxu0 0.0
      %573 = vmatprep.subr.mxu0 0.0
      %574 = vmatpush1.msra.mxu0 0.0
      %575 = vmatprep.subr.mxu0 0.0
      %576 = vmatpush1.msra.mxu0 0.0
      %577 = vmatprep.subr.mxu0 0.0
      %578 = vmatpush1.msra.mxu0 0.0
      %579 = vmatprep.subr.mxu0 0.0
      %580 = vmatpush1.msra.mxu0 0.0
      %581 = vmatprep.subr.mxu0 0.0
      %582 = vmatpush1.msra.mxu0 0.0
      %583 = vmatprep.subr.mxu0 0.0
      %584 = vmatpush1.msra.mxu0 0.0
      %585 = vmatprep.subr.mxu0 0.0
      %586 = vmatpush1.msra.mxu0 0.0
      %587 = vmatprep.subr.mxu0 0.0
      %588 = vmatpush1.msra.mxu0 0.0
      %589 = vmatprep.subr.mxu0 0.0
      %590 = vmatpush1.msra.mxu0 0.0
      %591 = vmatprep.subr.mxu0 0.0
      %v592 = vand.u32 %v408, 4294901760
      %v593 = vsub.f32 %v408, %v592
      %v594 = vand.u32 %v593, 4294901760
      %v595 = vsub.f32 %v593, %v594
      %v596 = vand.u32 %v595, 4294901760
      %597 = vmatpush1.msra.mxu0 %v596
      %598 = vmatprep.subr.mxu0 0.0
      %v599 = vand.u32 %v407, 4294901760
      %v600 = vsub.f32 %v407, %v599
      %v601 = vand.u32 %v600, 4294901760
      %v602 = vsub.f32 %v600, %v601
      %v603 = vand.u32 %v602, 4294901760
      %604 = vmatpush1.msra.mxu0 %v603
      %605 = vmatprep.subr.mxu0 0.0
      %606 = vmatpush2.msra.mxu0 0.0
      %607 = vmatprep.subr.mxu0 0.0
      %608 = vmatpush2.msra.mxu0 0.0
      %609 = vmatprep.subr.mxu0 0.0
      %610 = vmatpush2.msra.mxu0 0.0
      %611 = vmatprep.subr.mxu0 0.0
      %612 = vmatpush2.msra.mxu0 0.0
      %613 = vmatprep.subr.mxu0 0.0
      %614 = vmatpush2.msra.mxu0 0.0
      %615 = vmatprep.subr.mxu0 0.0
      %616 = vmatpush2.msra.mxu0 0.0
      %617 = vmatprep.subr.mxu0 0.0
      %618 = vmatpush2.msra.mxu0 0.0
      %619 = vmatprep.subr.mxu0 0.0
      %620 = vmatpush2.msra.mxu0 0.0
      %621 = vmatprep.subr.mxu0 0.0
      %622 = vmatpush2.msra.mxu0 0.0
      %623 = vmatprep.subr.mxu0 0.0
      %624 = vmatpush2.msra.mxu0 0.0
      %625 = vmatprep.subr.mxu0 0.0
      %626 = vmatpush2.msra.mxu0 0.0
      %627 = vmatprep.subr.mxu0 0.0
      %628 = vmatpush2.msra.mxu0 0.0
      %629 = vmatprep.subr.mxu0 0.0
      %630 = vmatpush2.msra.mxu0 0.0
      %631 = vmatprep.subr.mxu0 0.0
      %632 = vmatpush2.msra.mxu0 0.0
      %633 = vmatprep.subr.mxu0 0.0
      %634 = vmatpush2.msra.mxu0 0.0
      %635 = vmatprep.subr.mxu0 0.0
      %636 = vmatpush2.msra.mxu0 0.0
      %637 = vmatprep.mubr.f32.mxu0 0.0
      %v638 = vand.u32 %v484, 4294901760
      %639 = vmatmul.mubr.f32.gmra.mxu0 %v638
      %v640 = vpop.f32.mrf.mxu0
      %v641 = vadd.f32 %v560, %v640
      %v642 = vpop.f32.mrf.mxu0
      %643 = vdwg.mxu0
      %644 = vmatprep.subr.mxu0 0.0
      %645 = vmatpush1.msra.mxu0 0.0
      %646 = vmatprep.subr.mxu0 0.0
      %647 = vmatpush1.msra.mxu0 0.0
      %648 = vmatprep.subr.mxu0 0.0
      %649 = vmatpush1.msra.mxu0 0.0
      %650 = vmatprep.subr.mxu0 0.0
      %651 = vmatpush1.msra.mxu0 0.0
      %652 = vmatprep.subr.mxu0 0.0
      %653 = vmatpush1.msra.mxu0 0.0
      %654 = vmatprep.subr.mxu0 0.0
      %655 = vmatpush1.msra.mxu0 0.0
      %656 = vmatprep.subr.mxu0 0.0
      %657 = vmatpush1.msra.mxu0 0.0
      %658 = vmatprep.subr.mxu0 0.0
      %659 = vmatpush1.msra.mxu0 0.0
      %660 = vmatprep.subr.mxu0 0.0
      %661 = vmatpush1.msra.mxu0 0.0
      %662 = vmatprep.subr.mxu0 0.0
      %663 = vmatpush1.msra.mxu0 0.0
      %664 = vmatprep.subr.mxu0 0.0
      %665 = vmatpush1.msra.mxu0 0.0
      %666 = vmatprep.subr.mxu0 0.0
      %667 = vmatpush1.msra.mxu0 0.0
      %668 = vmatprep.subr.mxu0 0.0
      %669 = vmatpush1.msra.mxu0 0.0
      %670 = vmatprep.subr.mxu0 0.0
      %671 = vmatpush1.msra.mxu0 0.0
      %672 = vmatprep.subr.mxu0 0.0
      %v673 = vand.u32 %v408, 4294901760
      %v674 = vsub.f32 %v408, %v673
      %675 = vmatpush1.msra.mxu0 %v674
      %676 = vmatprep.subr.mxu0 0.0
      %v677 = vand.u32 %v407, 4294901760
      %v678 = vsub.f32 %v407, %v677
      %679 = vmatpush1.msra.mxu0 %v678
      %680 = vmatprep.subr.mxu0 0.0
      %681 = vmatpush2.msra.mxu0 0.0
      %682 = vmatprep.subr.mxu0 0.0
      %683 = vmatpush2.msra.mxu0 0.0
      %684 = vmatprep.subr.mxu0 0.0
      %685 = vmatpush2.msra.mxu0 0.0
      %686 = vmatprep.subr.mxu0 0.0
      %687 = vmatpush2.msra.mxu0 0.0
      %688 = vmatprep.subr.mxu0 0.0
      %689 = vmatpush2.msra.mxu0 0.0
      %690 = vmatprep.subr.mxu0 0.0
      %691 = vmatpush2.msra.mxu0 0.0
      %692 = vmatprep.subr.mxu0 0.0
      %693 = vmatpush2.msra.mxu0 0.0
      %694 = vmatprep.subr.mxu0 0.0
      %695 = vmatpush2.msra.mxu0 0.0
      %696 = vmatprep.subr.mxu0 0.0
      %697 = vmatpush2.msra.mxu0 0.0
      %698 = vmatprep.subr.mxu0 0.0
      %699 = vmatpush2.msra.mxu0 0.0
      %700 = vmatprep.subr.mxu0 0.0
      %701 = vmatpush2.msra.mxu0 0.0
      %702 = vmatprep.subr.mxu0 0.0
      %703 = vmatpush2.msra.mxu0 0.0
      %704 = vmatprep.subr.mxu0 0.0
      %705 = vmatpush2.msra.mxu0 0.0
      %706 = vmatprep.subr.mxu0 0.0
      %707 = vmatpush2.msra.mxu0 0.0
      %708 = vmatprep.subr.mxu0 0.0
      %709 = vmatpush2.msra.mxu0 0.0
      %710 = vmatprep.subr.mxu0 0.0
      %711 = vmatpush2.msra.mxu0 0.0
      %712 = vmatprep.mubr.f32.mxu0 0.0
      %v713 = vand.u32 %v484, 4294901760
      %v714 = vsub.f32 %v484, %v713
      %715 = vmatmul.mubr.f32.gmra.mxu0 %v714
      %v716 = vpop.f32.mrf.mxu0
      %v717 = vadd.f32 %v641, %v716
      %v718 = vpop.f32.mrf.mxu0
      %719 = vdwg.mxu0
      %720 = vmatprep.subr.mxu0 0.0
      %721 = vmatpush1.msra.mxu0 0.0
      %722 = vmatprep.subr.mxu0 0.0
      %723 = vmatpush1.msra.mxu0 0.0
      %724 = vmatprep.subr.mxu0 0.0
      %725 = vmatpush1.msra.mxu0 0.0
      %726 = vmatprep.subr.mxu0 0.0
      %727 = vmatpush1.msra.mxu0 0.0
      %728 = vmatprep.subr.mxu0 0.0
      %729 = vmatpush1.msra.mxu0 0.0
      %730 = vmatprep.subr.mxu0 0.0
      %731 = vmatpush1.msra.mxu0 0.0
      %732 = vmatprep.subr.mxu0 0.0
      %733 = vmatpush1.msra.mxu0 0.0
      %734 = vmatprep.subr.mxu0 0.0
      %735 = vmatpush1.msra.mxu0 0.0
      %736 = vmatprep.subr.mxu0 0.0
      %737 = vmatpush1.msra.mxu0 0.0
      %738 = vmatprep.subr.mxu0 0.0
      %739 = vmatpush1.msra.mxu0 0.0
      %740 = vmatprep.subr.mxu0 0.0
      %741 = vmatpush1.msra.mxu0 0.0
      %742 = vmatprep.subr.mxu0 0.0
      %743 = vmatpush1.msra.mxu0 0.0
      %744 = vmatprep.subr.mxu0 0.0
      %745 = vmatpush1.msra.mxu0 0.0
      %746 = vmatprep.subr.mxu0 0.0
      %747 = vmatpush1.msra.mxu0 0.0
      %748 = vmatprep.subr.mxu0 0.0
      %v749 = vand.u32 %v408, 4294901760
      %750 = vmatpush1.msra.mxu0 %v749
      %751 = vmatprep.subr.mxu0 0.0
      %v752 = vand.u32 %v407, 4294901760
      %753 = vmatpush1.msra.mxu0 %v752
      %754 = vmatprep.subr.mxu0 0.0
      %755 = vmatpush2.msra.mxu0 0.0
      %756 = vmatprep.subr.mxu0 0.0
      %757 = vmatpush2.msra.mxu0 0.0
      %758 = vmatprep.subr.mxu0 0.0
      %759 = vmatpush2.msra.mxu0 0.0
      %760 = vmatprep.subr.mxu0 0.0
      %761 = vmatpush2.msra.mxu0 0.0
      %762 = vmatprep.subr.mxu0 0.0
      %763 = vmatpush2.msra.mxu0 0.0
      %764 = vmatprep.subr.mxu0 0.0
      %765 = vmatpush2.msra.mxu0 0.0
      %766 = vmatprep.subr.mxu0 0.0
      %767 = vmatpush2.msra.mxu0 0.0
      %768 = vmatprep.subr.mxu0 0.0
      %769 = vmatpush2.msra.mxu0 0.0
      %770 = vmatprep.subr.mxu0 0.0
      %771 = vmatpush2.msra.mxu0 0.0
      %772 = vmatprep.subr.mxu0 0.0
      %773 = vmatpush2.msra.mxu0 0.0
      %774 = vmatprep.subr.mxu0 0.0
      %775 = vmatpush2.msra.mxu0 0.0
      %776 = vmatprep.subr.mxu0 0.0
      %777 = vmatpush2.msra.mxu0 0.0
      %778 = vmatprep.subr.mxu0 0.0
      %779 = vmatpush2.msra.mxu0 0.0
      %780 = vmatprep.subr.mxu0 0.0
      %781 = vmatpush2.msra.mxu0 0.0
      %782 = vmatprep.subr.mxu0 0.0
      %783 = vmatpush2.msra.mxu0 0.0
      %784 = vmatprep.subr.mxu0 0.0
      %785 = vmatpush2.msra.mxu0 0.0
      %786 = vmatprep.mubr.f32.mxu0 0.0
      %v787 = vand.u32 %v484, 4294901760
      %v788 = vsub.f32 %v484, %v787
      %v789 = vand.u32 %v788, 4294901760
      %790 = vmatmul.mubr.f32.gmra.mxu0 %v789
      %v791 = vpop.f32.mrf.mxu0
      %v792 = vadd.f32 %v717, %v791
      %v793 = vpop.f32.mrf.mxu0
      %794 = vdwg.mxu0
      %795 = vmatprep.subr.mxu0 0.0
      %796 = vmatpush1.msra.mxu0 0.0
      %797 = vmatprep.subr.mxu0 0.0
      %798 = vmatpush1.msra.mxu0 0.0
      %799 = vmatprep.subr.mxu0 0.0
      %800 = vmatpush1.msra.mxu0 0.0
      %801 = vmatprep.subr.mxu0 0.0
      %802 = vmatpush1.msra.mxu0 0.0
      %803 = vmatprep.subr.mxu0 0.0
      %804 = vmatpush1.msra.mxu0 0.0
      %805 = vmatprep.subr.mxu0 0.0
      %806 = vmatpush1.msra.mxu0 0.0
      %807 = vmatprep.subr.mxu0 0.0
      %808 = vmatpush1.msra.mxu0 0.0
      %809 = vmatprep.subr.mxu0 0.0
      %810 = vmatpush1.msra.mxu0 0.0
      %811 = vmatprep.subr.mxu0 0.0
      %812 = vmatpush1.msra.mxu0 0.0
      %813 = vmatprep.subr.mxu0 0.0
      %814 = vmatpush1.msra.mxu0 0.0
      %815 = vmatprep.subr.mxu0 0.0
      %816 = vmatpush1.msra.mxu0 0.0
      %817 = vmatprep.subr.mxu0 0.0
      %818 = vmatpush1.msra.mxu0 0.0
      %819 = vmatprep.subr.mxu0 0.0
      %820 = vmatpush1.msra.mxu0 0.0
      %821 = vmatprep.subr.mxu0 0.0
      %822 = vmatpush1.msra.mxu0 0.0
      %823 = vmatprep.subr.mxu0 0.0
      %v824 = vand.u32 %v408, 4294901760
      %v825 = vsub.f32 %v408, %v824
      %v826 = vand.u32 %v825, 4294901760
      %827 = vmatpush1.msra.mxu0 %v826
      %828 = vmatprep.subr.mxu0 0.0
      %v829 = vand.u32 %v407, 4294901760
      %v830 = vsub.f32 %v407, %v829
      %v831 = vand.u32 %v830, 4294901760
      %832 = vmatpush1.msra.mxu0 %v831
      %833 = vmatprep.subr.mxu0 0.0
      %834 = vmatpush2.msra.mxu0 0.0
      %835 = vmatprep.subr.mxu0 0.0
      %836 = vmatpush2.msra.mxu0 0.0
      %837 = vmatprep.subr.mxu0 0.0
      %838 = vmatpush2.msra.mxu0 0.0
      %839 = vmatprep.subr.mxu0 0.0
      %840 = vmatpush2.msra.mxu0 0.0
      %841 = vmatprep.subr.mxu0 0.0
      %842 = vmatpush2.msra.mxu0 0.0
      %843 = vmatprep.subr.mxu0 0.0
      %844 = vmatpush2.msra.mxu0 0.0
      %845 = vmatprep.subr.mxu0 0.0
      %846 = vmatpush2.msra.mxu0 0.0
      %847 = vmatprep.subr.mxu0 0.0
      %848 = vmatpush2.msra.mxu0 0.0
      %849 = vmatprep.subr.mxu0 0.0
      %850 = vmatpush2.msra.mxu0 0.0
      %851 = vmatprep.subr.mxu0 0.0
      %852 = vmatpush2.msra.mxu0 0.0
      %853 = vmatprep.subr.mxu0 0.0
      %854 = vmatpush2.msra.mxu0 0.0
      %855 = vmatprep.subr.mxu0 0.0
      %856 = vmatpush2.msra.mxu0 0.0
      %857 = vmatprep.subr.mxu0 0.0
      %858 = vmatpush2.msra.mxu0 0.0
      %859 = vmatprep.subr.mxu0 0.0
      %860 = vmatpush2.msra.mxu0 0.0
      %861 = vmatprep.subr.mxu0 0.0
      %862 = vmatpush2.msra.mxu0 0.0
      %863 = vmatprep.subr.mxu0 0.0
      %864 = vmatpush2.msra.mxu0 0.0
      %865 = vmatprep.mubr.f32.mxu0 0.0
      %v866 = vand.u32 %v484, 4294901760
      %867 = vmatmul.mubr.f32.gmra.mxu0 %v866
      %v868 = vpop.f32.mrf.mxu0
      %v869 = vadd.f32 %v792, %v868
      %v870 = vpop.f32.mrf.mxu0
      %871 = vdwg.mxu0
      %872 = vmatprep.subr.mxu0 0.0
      %873 = vmatpush1.msra.mxu0 0.0
      %874 = vmatprep.subr.mxu0 0.0
      %875 = vmatpush1.msra.mxu0 0.0
      %876 = vmatprep.subr.mxu0 0.0
      %877 = vmatpush1.msra.mxu0 0.0
      %878 = vmatprep.subr.mxu0 0.0
      %879 = vmatpush1.msra.mxu0 0.0
      %880 = vmatprep.subr.mxu0 0.0
      %881 = vmatpush1.msra.mxu0 0.0
      %882 = vmatprep.subr.mxu0 0.0
      %883 = vmatpush1.msra.mxu0 0.0
      %884 = vmatprep.subr.mxu0 0.0
      %885 = vmatpush1.msra.mxu0 0.0
      %886 = vmatprep.subr.mxu0 0.0
      %887 = vmatpush1.msra.mxu0 0.0
      %888 = vmatprep.subr.mxu0 0.0
      %889 = vmatpush1.msra.mxu0 0.0
      %890 = vmatprep.subr.mxu0 0.0
      %891 = vmatpush1.msra.mxu0 0.0
      %892 = vmatprep.subr.mxu0 0.0
      %893 = vmatpush1.msra.mxu0 0.0
      %894 = vmatprep.subr.mxu0 0.0
      %895 = vmatpush1.msra.mxu0 0.0
      %896 = vmatprep.subr.mxu0 0.0
      %897 = vmatpush1.msra.mxu0 0.0
      %898 = vmatprep.subr.mxu0 0.0
      %899 = vmatpush1.msra.mxu0 0.0
      %900 = vmatprep.subr.mxu0 0.0
      %v901 = vand.u32 %v408, 4294901760
      %902 = vmatpush1.msra.mxu0 %v901
      %903 = vmatprep.subr.mxu0 0.0
      %v904 = vand.u32 %v407, 4294901760
      %905 = vmatpush1.msra.mxu0 %v904
      %906 = vmatprep.subr.mxu0 0.0
      %907 = vmatpush2.msra.mxu0 0.0
      %908 = vmatprep.subr.mxu0 0.0
      %909 = vmatpush2.msra.mxu0 0.0
      %910 = vmatprep.subr.mxu0 0.0
      %911 = vmatpush2.msra.mxu0 0.0
      %912 = vmatprep.subr.mxu0 0.0
      %913 = vmatpush2.msra.mxu0 0.0
      %914 = vmatprep.subr.mxu0 0.0
      %915 = vmatpush2.msra.mxu0 0.0
      %916 = vmatprep.subr.mxu0 0.0
      %917 = vmatpush2.msra.mxu0 0.0
      %918 = vmatprep.subr.mxu0 0.0
      %919 = vmatpush2.msra.mxu0 0.0
      %920 = vmatprep.subr.mxu0 0.0
      %921 = vmatpush2.msra.mxu0 0.0
      %922 = vmatprep.subr.mxu0 0.0
      %923 = vmatpush2.msra.mxu0 0.0
      %924 = vmatprep.subr.mxu0 0.0
      %925 = vmatpush2.msra.mxu0 0.0
      %926 = vmatprep.subr.mxu0 0.0
      %927 = vmatpush2.msra.mxu0 0.0
      %928 = vmatprep.subr.mxu0 0.0
      %929 = vmatpush2.msra.mxu0 0.0
      %930 = vmatprep.subr.mxu0 0.0
      %931 = vmatpush2.msra.mxu0 0.0
      %932 = vmatprep.subr.mxu0 0.0
      %933 = vmatpush2.msra.mxu0 0.0
      %934 = vmatprep.subr.mxu0 0.0
      %935 = vmatpush2.msra.mxu0 0.0
      %936 = vmatprep.subr.mxu0 0.0
      %937 = vmatpush2.msra.mxu0 0.0
      %938 = vmatprep.mubr.f32.mxu0 0.0
      %v939 = vand.u32 %v484, 4294901760
      %940 = vmatmul.mubr.f32.gmra.mxu0 %v939
      %v941 = vpop.f32.mrf.mxu0
      %v942 = vadd.f32 %v869, %v941
      %v943 = vpop.f32.mrf.mxu0
      %944 = vdwg.mxu0
      %945 = vset.pattern.permute.xlu0 0
      %946 = vperm.xlu0 %945, %v346
      %v947 = vpop.permute.xlu0 %946
      %948 = vset.pattern.permute.xlu0 0
      %949 = vperm.xlu0 %948, %v347
      %v950 = vpop.permute.xlu0 %949
      %951 = vset.pattern.permute.xlu0 0
      %952 = vperm.xlu0 %951, %v348
      %v953 = vpop.permute.xlu0 %952
      %954 = vset.pattern.permute.xlu0 0
      %955 = vperm.xlu0 %954, %v349
      %v956 = vpop.permute.xlu0 %955
      %957 = vset.pattern.permute.xlu0 0
      %958 = vperm.xlu0 %957, %v350
      %v959 = vpop.permute.xlu0 %958
      %960 = vset.pattern.permute.xlu0 0
      %961 = vperm.xlu0 %960, %v351
      %v962 = vpop.permute.xlu0 %961
      %963 = vset.pattern.permute.xlu0 0
      %964 = vperm.xlu0 %963, %v352
      %v965 = vpop.permute.xlu0 %964
      %966 = vset.pattern.permute.xlu0 0
      %967 = vperm.xlu0 %966, %v353
      %v968 = vpop.permute.xlu0 %967
      %v969 = vlaneseq
      %v970 = vshrl.u32 %v969, 7
      %v971 = vsub.s32 %v438, %v970
      %v972 = vrot.slane %v947, %v971
      %v973 = vlaneseq
      %v974 = vshrl.u32 %v973, 7
      %v975 = vsub.s32 %v443, %v974
      %v976 = vrot.slane %v950, %v975
      %v977 = vsel %vm448, %v976, %v972
      %v978 = vlaneseq
      %v979 = vshrl.u32 %v978, 7
      %v980 = vsub.s32 %v438, %v979
      %v981 = vrot.slane %v953, %v980
      %v982 = vlaneseq
      %v983 = vshrl.u32 %v982, 7
      %v984 = vsub.s32 %v443, %v983
      %v985 = vrot.slane %v956, %v984
      %v986 = vsel %vm448, %v985, %v981
      %v987 = vlaneseq
      %v988 = vshrl.u32 %v987, 7
      %v989 = vsub.s32 %v438, %v988
      %v990 = vrot.slane %v959, %v989
      %v991 = vlaneseq
      %v992 = vshrl.u32 %v991, 7
      %v993 = vsub.s32 %v443, %v992
      %v994 = vrot.slane %v962, %v993
      %v995 = vsel %vm448, %v994, %v990
      %v996 = vlaneseq
      %v997 = vshrl.u32 %v996, 7
      %v998 = vsub.s32 %v438, %v997
      %v999 = vrot.slane %v965, %v998
      %v1000 = vlaneseq
      %v1001 = vshrl.u32 %v1000, 7
      %v1002 = vsub.s32 %v443, %v1001
      %v1003 = vrot.slane %v968, %v1002
      %v1004 = vsel %vm448, %v1003, %v999
      %v1005 = vsel %vm477, %v986, %v977
      %v1006 = vsel %vm479, %v995, %v1005
      %v1007 = vsel %vm481, %v1004, %v1006
      %v1008 = vsel %vm483, %v1007, 0
      %1010 = vmatprep.subr.mxu0 0.0
      %1011 = vmatpush1.msra.mxu0 0.0
      %1012 = vmatprep.subr.mxu0 0.0
      %1013 = vmatpush1.msra.mxu0 0.0
      %1014 = vmatprep.subr.mxu0 0.0
      %1015 = vmatpush1.msra.mxu0 0.0
      %1016 = vmatprep.subr.mxu0 0.0
      %1017 = vmatpush1.msra.mxu0 0.0
      %1018 = vmatprep.subr.mxu0 0.0
      %1019 = vmatpush1.msra.mxu0 0.0
      %1020 = vmatprep.subr.mxu0 0.0
      %1021 = vmatpush1.msra.mxu0 0.0
      %1022 = vmatprep.subr.mxu0 0.0
      %1023 = vmatpush1.msra.mxu0 0.0
      %1024 = vmatprep.subr.mxu0 0.0
      %1025 = vmatpush1.msra.mxu0 0.0
      %1026 = vmatprep.subr.mxu0 0.0
      %1027 = vmatpush1.msra.mxu0 0.0
      %1028 = vmatprep.subr.mxu0 0.0
      %1029 = vmatpush1.msra.mxu0 0.0
      %1030 = vmatprep.subr.mxu0 0.0
      %1031 = vmatpush1.msra.mxu0 0.0
      %1032 = vmatprep.subr.mxu0 0.0
      %1033 = vmatpush1.msra.mxu0 0.0
      %1034 = vmatprep.subr.mxu0 0.0
      %1035 = vmatpush1.msra.mxu0 0.0
      %1036 = vmatprep.subr.mxu0 0.0
      %1037 = vmatpush1.msra.mxu0 0.0
      %1038 = vmatprep.subr.mxu0 0.0
      %v1039 = vand.u32 %v406, 4294901760
      %1040 = vmatpush1.msra.mxu0 %v1039
      %1041 = vmatprep.subr.mxu0 0.0
      %v1042 = vand.u32 %v405, 4294901760
      %1043 = vmatpush1.msra.mxu0 %v1042
      %1044 = vmatprep.subr.mxu0 0.0
      %1045 = vmatpush2.msra.mxu0 0.0
      %1046 = vmatprep.subr.mxu0 0.0
      %1047 = vmatpush2.msra.mxu0 0.0
      %1048 = vmatprep.subr.mxu0 0.0
      %1049 = vmatpush2.msra.mxu0 0.0
      %1050 = vmatprep.subr.mxu0 0.0
      %1051 = vmatpush2.msra.mxu0 0.0
      %1052 = vmatprep.subr.mxu0 0.0
      %1053 = vmatpush2.msra.mxu0 0.0
      %1054 = vmatprep.subr.mxu0 0.0
      %1055 = vmatpush2.msra.mxu0 0.0
      %1056 = vmatprep.subr.mxu0 0.0
      %1057 = vmatpush2.msra.mxu0 0.0
      %1058 = vmatprep.subr.mxu0 0.0
      %1059 = vmatpush2.msra.mxu0 0.0
      %1060 = vmatprep.subr.mxu0 0.0
      %1061 = vmatpush2.msra.mxu0 0.0
      %1062 = vmatprep.subr.mxu0 0.0
      %1063 = vmatpush2.msra.mxu0 0.0
      %1064 = vmatprep.subr.mxu0 0.0
      %1065 = vmatpush2.msra.mxu0 0.0
      %1066 = vmatprep.subr.mxu0 0.0
      %1067 = vmatpush2.msra.mxu0 0.0
      %1068 = vmatprep.subr.mxu0 0.0
      %1069 = vmatpush2.msra.mxu0 0.0
      %1070 = vmatprep.subr.mxu0 0.0
      %1071 = vmatpush2.msra.mxu0 0.0
      %1072 = vmatprep.subr.mxu0 0.0
      %1073 = vmatpush2.msra.mxu0 0.0
      %1074 = vmatprep.subr.mxu0 0.0
      %1075 = vmatpush2.msra.mxu0 0.0
      %1076 = vmatprep.mubr.f32.mxu0 0.0
      %v1077 = vand.u32 %v1008, 4294901760
      %v1078 = vsub.f32 %v1008, %v1077
      %v1079 = vand.u32 %v1078, 4294901760
      %v1080 = vsub.f32 %v1078, %v1079
      %v1081 = vand.u32 %v1080, 4294901760
      %1082 = vmatmul.mubr.f32.gmra.mxu0 %v1081
      %v1083 = vpop.f32.mrf.mxu0
      %v1084 = vadd.f32 %v942, %v1083
      %v1085 = vpop.f32.mrf.mxu0
      %1086 = vdwg.mxu0
      %1087 = vmatprep.subr.mxu0 0.0
      %1088 = vmatpush1.msra.mxu0 0.0
      %1089 = vmatprep.subr.mxu0 0.0
      %1090 = vmatpush1.msra.mxu0 0.0
      %1091 = vmatprep.subr.mxu0 0.0
      %1092 = vmatpush1.msra.mxu0 0.0
      %1093 = vmatprep.subr.mxu0 0.0
      %1094 = vmatpush1.msra.mxu0 0.0
      %1095 = vmatprep.subr.mxu0 0.0
      %1096 = vmatpush1.msra.mxu0 0.0
      %1097 = vmatprep.subr.mxu0 0.0
      %1098 = vmatpush1.msra.mxu0 0.0
      %1099 = vmatprep.subr.mxu0 0.0
      %1100 = vmatpush1.msra.mxu0 0.0
      %1101 = vmatprep.subr.mxu0 0.0
      %1102 = vmatpush1.msra.mxu0 0.0
      %1103 = vmatprep.subr.mxu0 0.0
      %1104 = vmatpush1.msra.mxu0 0.0
      %1105 = vmatprep.subr.mxu0 0.0
      %1106 = vmatpush1.msra.mxu0 0.0
      %1107 = vmatprep.subr.mxu0 0.0
      %1108 = vmatpush1.msra.mxu0 0.0
      %1109 = vmatprep.subr.mxu0 0.0
      %1110 = vmatpush1.msra.mxu0 0.0
      %1111 = vmatprep.subr.mxu0 0.0
      %1112 = vmatpush1.msra.mxu0 0.0
      %1113 = vmatprep.subr.mxu0 0.0
      %1114 = vmatpush1.msra.mxu0 0.0
      %1115 = vmatprep.subr.mxu0 0.0
      %v1116 = vand.u32 %v406, 4294901760
      %v1117 = vsub.f32 %v406, %v1116
      %v1118 = vand.u32 %v1117, 4294901760
      %v1119 = vsub.f32 %v1117, %v1118
      %v1120 = vand.u32 %v1119, 4294901760
      %1121 = vmatpush1.msra.mxu0 %v1120
      %1122 = vmatprep.subr.mxu0 0.0
      %v1123 = vand.u32 %v405, 4294901760
      %v1124 = vsub.f32 %v405, %v1123
      %v1125 = vand.u32 %v1124, 4294901760
      %v1126 = vsub.f32 %v1124, %v1125
      %v1127 = vand.u32 %v1126, 4294901760
      %1128 = vmatpush1.msra.mxu0 %v1127
      %1129 = vmatprep.subr.mxu0 0.0
      %1130 = vmatpush2.msra.mxu0 0.0
      %1131 = vmatprep.subr.mxu0 0.0
      %1132 = vmatpush2.msra.mxu0 0.0
      %1133 = vmatprep.subr.mxu0 0.0
      %1134 = vmatpush2.msra.mxu0 0.0
      %1135 = vmatprep.subr.mxu0 0.0
      %1136 = vmatpush2.msra.mxu0 0.0
      %1137 = vmatprep.subr.mxu0 0.0
      %1138 = vmatpush2.msra.mxu0 0.0
      %1139 = vmatprep.subr.mxu0 0.0
      %1140 = vmatpush2.msra.mxu0 0.0
      %1141 = vmatprep.subr.mxu0 0.0
      %1142 = vmatpush2.msra.mxu0 0.0
      %1143 = vmatprep.subr.mxu0 0.0
      %1144 = vmatpush2.msra.mxu0 0.0
      %1145 = vmatprep.subr.mxu0 0.0
      %1146 = vmatpush2.msra.mxu0 0.0
      %1147 = vmatprep.subr.mxu0 0.0
      %1148 = vmatpush2.msra.mxu0 0.0
      %1149 = vmatprep.subr.mxu0 0.0
      %1150 = vmatpush2.msra.mxu0 0.0
      %1151 = vmatprep.subr.mxu0 0.0
      %1152 = vmatpush2.msra.mxu0 0.0
      %1153 = vmatprep.subr.mxu0 0.0
      %1154 = vmatpush2.msra.mxu0 0.0
      %1155 = vmatprep.subr.mxu0 0.0
      %1156 = vmatpush2.msra.mxu0 0.0
      %1157 = vmatprep.subr.mxu0 0.0
      %1158 = vmatpush2.msra.mxu0 0.0
      %1159 = vmatprep.subr.mxu0 0.0
      %1160 = vmatpush2.msra.mxu0 0.0
      %1161 = vmatprep.mubr.f32.mxu0 0.0
      %v1162 = vand.u32 %v1008, 4294901760
      %1163 = vmatmul.mubr.f32.gmra.mxu0 %v1162
      %v1164 = vpop.f32.mrf.mxu0
      %v1165 = vadd.f32 %v1084, %v1164
      %v1166 = vpop.f32.mrf.mxu0
      %1167 = vdwg.mxu0
      %1168 = vmatprep.subr.mxu0 0.0
      %1169 = vmatpush1.msra.mxu0 0.0
      %1170 = vmatprep.subr.mxu0 0.0
      %1171 = vmatpush1.msra.mxu0 0.0
      %1172 = vmatprep.subr.mxu0 0.0
      %1173 = vmatpush1.msra.mxu0 0.0
      %1174 = vmatprep.subr.mxu0 0.0
      %1175 = vmatpush1.msra.mxu0 0.0
      %1176 = vmatprep.subr.mxu0 0.0
      %1177 = vmatpush1.msra.mxu0 0.0
      %1178 = vmatprep.subr.mxu0 0.0
      %1179 = vmatpush1.msra.mxu0 0.0
      %1180 = vmatprep.subr.mxu0 0.0
      %1181 = vmatpush1.msra.mxu0 0.0
      %1182 = vmatprep.subr.mxu0 0.0
      %1183 = vmatpush1.msra.mxu0 0.0
      %1184 = vmatprep.subr.mxu0 0.0
      %1185 = vmatpush1.msra.mxu0 0.0
      %1186 = vmatprep.subr.mxu0 0.0
      %1187 = vmatpush1.msra.mxu0 0.0
      %1188 = vmatprep.subr.mxu0 0.0
      %1189 = vmatpush1.msra.mxu0 0.0
      %1190 = vmatprep.subr.mxu0 0.0
      %1191 = vmatpush1.msra.mxu0 0.0
      %1192 = vmatprep.subr.mxu0 0.0
      %1193 = vmatpush1.msra.mxu0 0.0
      %1194 = vmatprep.subr.mxu0 0.0
      %1195 = vmatpush1.msra.mxu0 0.0
      %1196 = vmatprep.subr.mxu0 0.0
      %v1197 = vand.u32 %v406, 4294901760
      %v1198 = vsub.f32 %v406, %v1197
      %1199 = vmatpush1.msra.mxu0 %v1198
      %1200 = vmatprep.subr.mxu0 0.0
      %v1201 = vand.u32 %v405, 4294901760
      %v1202 = vsub.f32 %v405, %v1201
      %1203 = vmatpush1.msra.mxu0 %v1202
      %1204 = vmatprep.subr.mxu0 0.0
      %1205 = vmatpush2.msra.mxu0 0.0
      %1206 = vmatprep.subr.mxu0 0.0
      %1207 = vmatpush2.msra.mxu0 0.0
      %1208 = vmatprep.subr.mxu0 0.0
      %1209 = vmatpush2.msra.mxu0 0.0
      %1210 = vmatprep.subr.mxu0 0.0
      %1211 = vmatpush2.msra.mxu0 0.0
      %1212 = vmatprep.subr.mxu0 0.0
      %1213 = vmatpush2.msra.mxu0 0.0
      %1214 = vmatprep.subr.mxu0 0.0
      %1215 = vmatpush2.msra.mxu0 0.0
      %1216 = vmatprep.subr.mxu0 0.0
      %1217 = vmatpush2.msra.mxu0 0.0
      %1218 = vmatprep.subr.mxu0 0.0
      %1219 = vmatpush2.msra.mxu0 0.0
      %1220 = vmatprep.subr.mxu0 0.0
      %1221 = vmatpush2.msra.mxu0 0.0
      %1222 = vmatprep.subr.mxu0 0.0
      %1223 = vmatpush2.msra.mxu0 0.0
      %1224 = vmatprep.subr.mxu0 0.0
      %1225 = vmatpush2.msra.mxu0 0.0
      %1226 = vmatprep.subr.mxu0 0.0
      %1227 = vmatpush2.msra.mxu0 0.0
      %1228 = vmatprep.subr.mxu0 0.0
      %1229 = vmatpush2.msra.mxu0 0.0
      %1230 = vmatprep.subr.mxu0 0.0
      %1231 = vmatpush2.msra.mxu0 0.0
      %1232 = vmatprep.subr.mxu0 0.0
      %1233 = vmatpush2.msra.mxu0 0.0
      %1234 = vmatprep.subr.mxu0 0.0
      %1235 = vmatpush2.msra.mxu0 0.0
      %1236 = vmatprep.mubr.f32.mxu0 0.0
      %v1237 = vand.u32 %v1008, 4294901760
      %v1238 = vsub.f32 %v1008, %v1237
      %1239 = vmatmul.mubr.f32.gmra.mxu0 %v1238
      %v1240 = vpop.f32.mrf.mxu0
      %v1241 = vadd.f32 %v1165, %v1240
      %v1242 = vpop.f32.mrf.mxu0
      %1243 = vdwg.mxu0
      %1244 = vmatprep.subr.mxu0 0.0
      %1245 = vmatpush1.msra.mxu0 0.0
      %1246 = vmatprep.subr.mxu0 0.0
      %1247 = vmatpush1.msra.mxu0 0.0
      %1248 = vmatprep.subr.mxu0 0.0
      %1249 = vmatpush1.msra.mxu0 0.0
      %1250 = vmatprep.subr.mxu0 0.0
      %1251 = vmatpush1.msra.mxu0 0.0
      %1252 = vmatprep.subr.mxu0 0.0
      %1253 = vmatpush1.msra.mxu0 0.0
      %1254 = vmatprep.subr.mxu0 0.0
      %1255 = vmatpush1.msra.mxu0 0.0
      %1256 = vmatprep.subr.mxu0 0.0
      %1257 = vmatpush1.msra.mxu0 0.0
      %1258 = vmatprep.subr.mxu0 0.0
      %1259 = vmatpush1.msra.mxu0 0.0
      %1260 = vmatprep.subr.mxu0 0.0
      %1261 = vmatpush1.msra.mxu0 0.0
      %1262 = vmatprep.subr.mxu0 0.0
      %1263 = vmatpush1.msra.mxu0 0.0
      %1264 = vmatprep.subr.mxu0 0.0
      %1265 = vmatpush1.msra.mxu0 0.0
      %1266 = vmatprep.subr.mxu0 0.0
      %1267 = vmatpush1.msra.mxu0 0.0
      %1268 = vmatprep.subr.mxu0 0.0
      %1269 = vmatpush1.msra.mxu0 0.0
      %1270 = vmatprep.subr.mxu0 0.0
      %1271 = vmatpush1.msra.mxu0 0.0
      %1272 = vmatprep.subr.mxu0 0.0
      %v1273 = vand.u32 %v406, 4294901760
      %1274 = vmatpush1.msra.mxu0 %v1273
      %1275 = vmatprep.subr.mxu0 0.0
      %v1276 = vand.u32 %v405, 4294901760
      %1277 = vmatpush1.msra.mxu0 %v1276
      %1278 = vmatprep.subr.mxu0 0.0
      %1279 = vmatpush2.msra.mxu0 0.0
      %1280 = vmatprep.subr.mxu0 0.0
      %1281 = vmatpush2.msra.mxu0 0.0
      %1282 = vmatprep.subr.mxu0 0.0
      %1283 = vmatpush2.msra.mxu0 0.0
      %1284 = vmatprep.subr.mxu0 0.0
      %1285 = vmatpush2.msra.mxu0 0.0
      %1286 = vmatprep.subr.mxu0 0.0
      %1287 = vmatpush2.msra.mxu0 0.0
      %1288 = vmatprep.subr.mxu0 0.0
      %1289 = vmatpush2.msra.mxu0 0.0
      %1290 = vmatprep.subr.mxu0 0.0
      %1291 = vmatpush2.msra.mxu0 0.0
      %1292 = vmatprep.subr.mxu0 0.0
      %1293 = vmatpush2.msra.mxu0 0.0
      %1294 = vmatprep.subr.mxu0 0.0
      %1295 = vmatpush2.msra.mxu0 0.0
      %1296 = vmatprep.subr.mxu0 0.0
      %1297 = vmatpush2.msra.mxu0 0.0
      %1298 = vmatprep.subr.mxu0 0.0
      %1299 = vmatpush2.msra.mxu0 0.0
      %1300 = vmatprep.subr.mxu0 0.0
      %1301 = vmatpush2.msra.mxu0 0.0
      %1302 = vmatprep.subr.mxu0 0.0
      %1303 = vmatpush2.msra.mxu0 0.0
      %1304 = vmatprep.subr.mxu0 0.0
      %1305 = vmatpush2.msra.mxu0 0.0
      %1306 = vmatprep.subr.mxu0 0.0
      %1307 = vmatpush2.msra.mxu0 0.0
      %1308 = vmatprep.subr.mxu0 0.0
      %1309 = vmatpush2.msra.mxu0 0.0
      %1310 = vmatprep.mubr.f32.mxu0 0.0
      %v1311 = vand.u32 %v1008, 4294901760
      %v1312 = vsub.f32 %v1008, %v1311
      %v1313 = vand.u32 %v1312, 4294901760
      %1314 = vmatmul.mubr.f32.gmra.mxu0 %v1313
      %v1315 = vpop.f32.mrf.mxu0
      %v1316 = vadd.f32 %v1241, %v1315
      %v1317 = vpop.f32.mrf.mxu0
      %1318 = vdwg.mxu0
      %1319 = vmatprep.subr.mxu0 0.0
      %1320 = vmatpush1.msra.mxu0 0.0
      %1321 = vmatprep.subr.mxu0 0.0
      %1322 = vmatpush1.msra.mxu0 0.0
      %1323 = vmatprep.subr.mxu0 0.0
      %1324 = vmatpush1.msra.mxu0 0.0
      %1325 = vmatprep.subr.mxu0 0.0
      %1326 = vmatpush1.msra.mxu0 0.0
      %1327 = vmatprep.subr.mxu0 0.0
      %1328 = vmatpush1.msra.mxu0 0.0
      %1329 = vmatprep.subr.mxu0 0.0
      %1330 = vmatpush1.msra.mxu0 0.0
      %1331 = vmatprep.subr.mxu0 0.0
      %1332 = vmatpush1.msra.mxu0 0.0
      %1333 = vmatprep.subr.mxu0 0.0
      %1334 = vmatpush1.msra.mxu0 0.0
      %1335 = vmatprep.subr.mxu0 0.0
      %1336 = vmatpush1.msra.mxu0 0.0
      %1337 = vmatprep.subr.mxu0 0.0
      %1338 = vmatpush1.msra.mxu0 0.0
      %1339 = vmatprep.subr.mxu0 0.0
      %1340 = vmatpush1.msra.mxu0 0.0
      %1341 = vmatprep.subr.mxu0 0.0
      %1342 = vmatpush1.msra.mxu0 0.0
      %1343 = vmatprep.subr.mxu0 0.0
      %1344 = vmatpush1.msra.mxu0 0.0
      %1345 = vmatprep.subr.mxu0 0.0
      %1346 = vmatpush1.msra.mxu0 0.0
      %1347 = vmatprep.subr.mxu0 0.0
      %v1348 = vand.u32 %v406, 4294901760
      %v1349 = vsub.f32 %v406, %v1348
      %v1350 = vand.u32 %v1349, 4294901760
      %1351 = vmatpush1.msra.mxu0 %v1350
      %1352 = vmatprep.subr.mxu0 0.0
      %v1353 = vand.u32 %v405, 4294901760
      %v1354 = vsub.f32 %v405, %v1353
      %v1355 = vand.u32 %v1354, 4294901760
      %1356 = vmatpush1.msra.mxu0 %v1355
      %1357 = vmatprep.subr.mxu0 0.0
      %1358 = vmatpush2.msra.mxu0 0.0
      %1359 = vmatprep.subr.mxu0 0.0
      %1360 = vmatpush2.msra.mxu0 0.0
      %1361 = vmatprep.subr.mxu0 0.0
      %1362 = vmatpush2.msra.mxu0 0.0
      %1363 = vmatprep.subr.mxu0 0.0
      %1364 = vmatpush2.msra.mxu0 0.0
      %1365 = vmatprep.subr.mxu0 0.0
      %1366 = vmatpush2.msra.mxu0 0.0
      %1367 = vmatprep.subr.mxu0 0.0
      %1368 = vmatpush2.msra.mxu0 0.0
      %1369 = vmatprep.subr.mxu0 0.0
      %1370 = vmatpush2.msra.mxu0 0.0
      %1371 = vmatprep.subr.mxu0 0.0
      %1372 = vmatpush2.msra.mxu0 0.0
      %1373 = vmatprep.subr.mxu0 0.0
      %1374 = vmatpush2.msra.mxu0 0.0
      %1375 = vmatprep.subr.mxu0 0.0
      %1376 = vmatpush2.msra.mxu0 0.0
      %1377 = vmatprep.subr.mxu0 0.0
      %1378 = vmatpush2.msra.mxu0 0.0
      %1379 = vmatprep.subr.mxu0 0.0
      %1380 = vmatpush2.msra.mxu0 0.0
      %1381 = vmatprep.subr.mxu0 0.0
      %1382 = vmatpush2.msra.mxu0 0.0
      %1383 = vmatprep.subr.mxu0 0.0
      %1384 = vmatpush2.msra.mxu0 0.0
      %1385 = vmatprep.subr.mxu0 0.0
      %1386 = vmatpush2.msra.mxu0 0.0
      %1387 = vmatprep.subr.mxu0 0.0
      %1388 = vmatpush2.msra.mxu0 0.0
      %1389 = vmatprep.mubr.f32.mxu0 0.0
      %v1390 = vand.u32 %v1008, 4294901760
      %1391 = vmatmul.mubr.f32.gmra.mxu0 %v1390
      %v1392 = vpop.f32.mrf.mxu0
      %v1393 = vadd.f32 %v1316, %v1392
      %v1394 = vpop.f32.mrf.mxu0
      %1395 = vdwg.mxu0
      %1396 = vmatprep.subr.mxu0 0.0
      %1397 = vmatpush1.msra.mxu0 0.0
      %1398 = vmatprep.subr.mxu0 0.0
      %1399 = vmatpush1.msra.mxu0 0.0
      %1400 = vmatprep.subr.mxu0 0.0
      %1401 = vmatpush1.msra.mxu0 0.0
      %1402 = vmatprep.subr.mxu0 0.0
      %1403 = vmatpush1.msra.mxu0 0.0
      %1404 = vmatprep.subr.mxu0 0.0
      %1405 = vmatpush1.msra.mxu0 0.0
      %1406 = vmatprep.subr.mxu0 0.0
      %1407 = vmatpush1.msra.mxu0 0.0
      %1408 = vmatprep.subr.mxu0 0.0
      %1409 = vmatpush1.msra.mxu0 0.0
      %1410 = vmatprep.subr.mxu0 0.0
      %1411 = vmatpush1.msra.mxu0 0.0
      %1412 = vmatprep.subr.mxu0 0.0
      %1413 = vmatpush1.msra.mxu0 0.0
      %1414 = vmatprep.subr.mxu0 0.0
      %1415 = vmatpush1.msra.mxu0 0.0
      %1416 = vmatprep.subr.mxu0 0.0
      %1417 = vmatpush1.msra.mxu0 0.0
      %1418 = vmatprep.subr.mxu0 0.0
      %1419 = vmatpush1.msra.mxu0 0.0
      %1420 = vmatprep.subr.mxu0 0.0
      %1421 = vmatpush1.msra.mxu0 0.0
      %1422 = vmatprep.subr.mxu0 0.0
      %1423 = vmatpush1.msra.mxu0 0.0
      %1424 = vmatprep.subr.mxu0 0.0
      %v1425 = vand.u32 %v406, 4294901760
      %1426 = vmatpush1.msra.mxu0 %v1425
      %1427 = vmatprep.subr.mxu0 0.0
      %v1428 = vand.u32 %v405, 4294901760
      %1429 = vmatpush1.msra.mxu0 %v1428
      %1430 = vmatprep.subr.mxu0 0.0
      %1431 = vmatpush2.msra.mxu0 0.0
      %1432 = vmatprep.subr.mxu0 0.0
      %1433 = vmatpush2.msra.mxu0 0.0
      %1434 = vmatprep.subr.mxu0 0.0
      %1435 = vmatpush2.msra.mxu0 0.0
      %1436 = vmatprep.subr.mxu0 0.0
      %1437 = vmatpush2.msra.mxu0 0.0
      %1438 = vmatprep.subr.mxu0 0.0
      %1439 = vmatpush2.msra.mxu0 0.0
      %1440 = vmatprep.subr.mxu0 0.0
      %1441 = vmatpush2.msra.mxu0 0.0
      %1442 = vmatprep.subr.mxu0 0.0
      %1443 = vmatpush2.msra.mxu0 0.0
      %1444 = vmatprep.subr.mxu0 0.0
      %1445 = vmatpush2.msra.mxu0 0.0
      %1446 = vmatprep.subr.mxu0 0.0
      %1447 = vmatpush2.msra.mxu0 0.0
      %1448 = vmatprep.subr.mxu0 0.0
      %1449 = vmatpush2.msra.mxu0 0.0
      %1450 = vmatprep.subr.mxu0 0.0
      %1451 = vmatpush2.msra.mxu0 0.0
      %1452 = vmatprep.subr.mxu0 0.0
      %1453 = vmatpush2.msra.mxu0 0.0
      %1454 = vmatprep.subr.mxu0 0.0
      %1455 = vmatpush2.msra.mxu0 0.0
      %1456 = vmatprep.subr.mxu0 0.0
      %1457 = vmatpush2.msra.mxu0 0.0
      %1458 = vmatprep.subr.mxu0 0.0
      %1459 = vmatpush2.msra.mxu0 0.0
      %1460 = vmatprep.subr.mxu0 0.0
      %1461 = vmatpush2.msra.mxu0 0.0
      %1462 = vmatprep.mubr.f32.mxu0 0.0
      %v1463 = vand.u32 %v1008, 4294901760
      %1464 = vmatmul.mubr.f32.gmra.mxu0 %v1463
      %v1465 = vpop.f32.mrf.mxu0
      %v1466 = vadd.f32 %v1393, %v1465
      %v1467 = vpop.f32.mrf.mxu0
      %1468 = vdwg.mxu0
      %1470 = vrot.lane.b32.xlu0 %v404, 125
      %v1471 = vpop.permute.xlu0 %1470
      %1472 = vrot.lane.b32.xlu0 %v401, 125
      %v1473 = vpop.permute.xlu0 %1472
      %vm1474 = vcmask 1022976
      %v1475 = vsel %vm1474, %v1471, %v1473
      %v1477 = vmul.f32 %v1466, %v1475
      %1478 = vset.pattern.permute.xlu0 1
      %1479 = vperm.xlu0 %1478, %v367
      %v1480 = vpop.permute.xlu0 %1479
      %1481 = vset.pattern.permute.xlu0 1
      %1482 = vperm.xlu0 %1481, %v387
      %v1483 = vpop.permute.xlu0 %1482
      %1484 = vset.pattern.permute.xlu0 1
      %1485 = vperm.xlu0 %1484, %v370
      %v1486 = vpop.permute.xlu0 %1485
      %1487 = vset.pattern.permute.xlu0 1
      %1488 = vperm.xlu0 %1487, %v388
      %v1489 = vpop.permute.xlu0 %1488
      %1490 = vset.pattern.permute.xlu0 1
      %1491 = vperm.xlu0 %1490, %v373
      %v1492 = vpop.permute.xlu0 %1491
      %1493 = vset.pattern.permute.xlu0 1
      %1494 = vperm.xlu0 %1493, %v389
      %v1495 = vpop.permute.xlu0 %1494
      %1496 = vset.pattern.permute.xlu0 1
      %1497 = vperm.xlu0 %1496, %v376
      %v1498 = vpop.permute.xlu0 %1497
      %1499 = vset.pattern.permute.xlu0 1
      %1500 = vperm.xlu0 %1499, %v390
      %v1501 = vpop.permute.xlu0 %1500
      %v1502 = vlaneseq
      %v1503 = vshrl.u32 %v1502, 7
      %v1504 = vsub.s32 %v438, %v1503
      %v1505 = vrot.slane %v1480, %v1504
      %v1506 = vlaneseq
      %v1507 = vshrl.u32 %v1506, 7
      %v1508 = vsub.s32 %v443, %v1507
      %v1509 = vrot.slane %v1483, %v1508
      %v1510 = vsel %vm448, %v1509, %v1505
      %v1511 = vlaneseq
      %v1512 = vshrl.u32 %v1511, 7
      %v1513 = vsub.s32 %v438, %v1512
      %v1514 = vrot.slane %v1486, %v1513
      %v1515 = vlaneseq
      %v1516 = vshrl.u32 %v1515, 7
      %v1517 = vsub.s32 %v443, %v1516
      %v1518 = vrot.slane %v1489, %v1517
      %v1519 = vsel %vm448, %v1518, %v1514
      %v1520 = vlaneseq
      %v1521 = vshrl.u32 %v1520, 7
      %v1522 = vsub.s32 %v438, %v1521
      %v1523 = vrot.slane %v1492, %v1522
      %v1524 = vlaneseq
      %v1525 = vshrl.u32 %v1524, 7
      %v1526 = vsub.s32 %v443, %v1525
      %v1527 = vrot.slane %v1495, %v1526
      %v1528 = vsel %vm448, %v1527, %v1523
      %v1529 = vlaneseq
      %v1530 = vshrl.u32 %v1529, 7
      %v1531 = vsub.s32 %v438, %v1530
      %v1532 = vrot.slane %v1498, %v1531
      %v1533 = vlaneseq
      %v1534 = vshrl.u32 %v1533, 7
      %v1535 = vsub.s32 %v443, %v1534
      %v1536 = vrot.slane %v1501, %v1535
      %v1537 = vsel %vm448, %v1536, %v1532
      %v1538 = vsel %vm477, %v1519, %v1510
      %v1539 = vsel %vm479, %v1528, %v1538
      %v1540 = vsel %vm481, %v1537, %v1539
      %v1541 = vsel %vm483, %v1540, 0
      %1543 = vmatprep.subr.mxu0 0.0
      %1544 = vmatpush1.msra.mxu0 0.0
      %1545 = vmatprep.subr.mxu0 0.0
      %1546 = vmatpush1.msra.mxu0 0.0
      %1547 = vmatprep.subr.mxu0 0.0
      %1548 = vmatpush1.msra.mxu0 0.0
      %1549 = vmatprep.subr.mxu0 0.0
      %1550 = vmatpush1.msra.mxu0 0.0
      %1551 = vmatprep.subr.mxu0 0.0
      %1552 = vmatpush1.msra.mxu0 0.0
      %1553 = vmatprep.subr.mxu0 0.0
      %1554 = vmatpush1.msra.mxu0 0.0
      %1555 = vmatprep.subr.mxu0 0.0
      %1556 = vmatpush1.msra.mxu0 0.0
      %1557 = vmatprep.subr.mxu0 0.0
      %1558 = vmatpush1.msra.mxu0 0.0
      %1559 = vmatprep.subr.mxu0 0.0
      %1560 = vmatpush1.msra.mxu0 0.0
      %1561 = vmatprep.subr.mxu0 0.0
      %1562 = vmatpush1.msra.mxu0 0.0
      %1563 = vmatprep.subr.mxu0 0.0
      %1564 = vmatpush1.msra.mxu0 0.0
      %1565 = vmatprep.subr.mxu0 0.0
      %1566 = vmatpush1.msra.mxu0 0.0
      %1567 = vmatprep.subr.mxu0 0.0
      %1568 = vmatpush1.msra.mxu0 0.0
      %1569 = vmatprep.subr.mxu0 0.0
      %1570 = vmatpush1.msra.mxu0 0.0
      %1571 = vmatprep.subr.mxu0 0.0
      %v1572 = vand.u32 %v408, 4294901760
      %1573 = vmatpush1.msra.mxu0 %v1572
      %1574 = vmatprep.subr.mxu0 0.0
      %v1575 = vand.u32 %v407, 4294901760
      %1576 = vmatpush1.msra.mxu0 %v1575
      %1577 = vmatprep.subr.mxu0 0.0
      %1578 = vmatpush2.msra.mxu0 0.0
      %1579 = vmatprep.subr.mxu0 0.0
      %1580 = vmatpush2.msra.mxu0 0.0
      %1581 = vmatprep.subr.mxu0 0.0
      %1582 = vmatpush2.msra.mxu0 0.0
      %1583 = vmatprep.subr.mxu0 0.0
      %1584 = vmatpush2.msra.mxu0 0.0
      %1585 = vmatprep.subr.mxu0 0.0
      %1586 = vmatpush2.msra.mxu0 0.0
      %1587 = vmatprep.subr.mxu0 0.0
      %1588 = vmatpush2.msra.mxu0 0.0
      %1589 = vmatprep.subr.mxu0 0.0
      %1590 = vmatpush2.msra.mxu0 0.0
      %1591 = vmatprep.subr.mxu0 0.0
      %1592 = vmatpush2.msra.mxu0 0.0
      %1593 = vmatprep.subr.mxu0 0.0
      %1594 = vmatpush2.msra.mxu0 0.0
      %1595 = vmatprep.subr.mxu0 0.0
      %1596 = vmatpush2.msra.mxu0 0.0
      %1597 = vmatprep.subr.mxu0 0.0
      %1598 = vmatpush2.msra.mxu0 0.0
      %1599 = vmatprep.subr.mxu0 0.0
      %1600 = vmatpush2.msra.mxu0 0.0
      %1601 = vmatprep.subr.mxu0 0.0
      %1602 = vmatpush2.msra.mxu0 0.0
      %1603 = vmatprep.subr.mxu0 0.0
      %1604 = vmatpush2.msra.mxu0 0.0
      %1605 = vmatprep.subr.mxu0 0.0
      %1606 = vmatpush2.msra.mxu0 0.0
      %1607 = vmatprep.subr.mxu0 0.0
      %1608 = vmatpush2.msra.mxu0 0.0
      %1609 = vmatprep.mubr.f32.mxu0 0.0
      %v1610 = vand.u32 %v1541, 4294901760
      %v1611 = vsub.f32 %v1541, %v1610
      %v1612 = vand.u32 %v1611, 4294901760
      %v1613 = vsub.f32 %v1611, %v1612
      %v1614 = vand.u32 %v1613, 4294901760
      %1615 = vmatmul.mubr.f32.gmra.mxu0 %v1614
      %v1616 = vpop.f32.mrf.mxu0
      %v1617 = vadd.f32 0.0, %v1616
      %v1618 = vpop.f32.mrf.mxu0
      %1619 = vdwg.mxu0
      %1620 = vmatprep.subr.mxu0 0.0
      %1621 = vmatpush1.msra.mxu0 0.0
      %1622 = vmatprep.subr.mxu0 0.0
      %1623 = vmatpush1.msra.mxu0 0.0
      %1624 = vmatprep.subr.mxu0 0.0
      %1625 = vmatpush1.msra.mxu0 0.0
      %1626 = vmatprep.subr.mxu0 0.0
      %1627 = vmatpush1.msra.mxu0 0.0
      %1628 = vmatprep.subr.mxu0 0.0
      %1629 = vmatpush1.msra.mxu0 0.0
      %1630 = vmatprep.subr.mxu0 0.0
      %1631 = vmatpush1.msra.mxu0 0.0
      %1632 = vmatprep.subr.mxu0 0.0
      %1633 = vmatpush1.msra.mxu0 0.0
      %1634 = vmatprep.subr.mxu0 0.0
      %1635 = vmatpush1.msra.mxu0 0.0
      %1636 = vmatprep.subr.mxu0 0.0
      %1637 = vmatpush1.msra.mxu0 0.0
      %1638 = vmatprep.subr.mxu0 0.0
      %1639 = vmatpush1.msra.mxu0 0.0
      %1640 = vmatprep.subr.mxu0 0.0
      %1641 = vmatpush1.msra.mxu0 0.0
      %1642 = vmatprep.subr.mxu0 0.0
      %1643 = vmatpush1.msra.mxu0 0.0
      %1644 = vmatprep.subr.mxu0 0.0
      %1645 = vmatpush1.msra.mxu0 0.0
      %1646 = vmatprep.subr.mxu0 0.0
      %1647 = vmatpush1.msra.mxu0 0.0
      %1648 = vmatprep.subr.mxu0 0.0
      %v1649 = vand.u32 %v408, 4294901760
      %v1650 = vsub.f32 %v408, %v1649
      %v1651 = vand.u32 %v1650, 4294901760
      %v1652 = vsub.f32 %v1650, %v1651
      %v1653 = vand.u32 %v1652, 4294901760
      %1654 = vmatpush1.msra.mxu0 %v1653
      %1655 = vmatprep.subr.mxu0 0.0
      %v1656 = vand.u32 %v407, 4294901760
      %v1657 = vsub.f32 %v407, %v1656
      %v1658 = vand.u32 %v1657, 4294901760
      %v1659 = vsub.f32 %v1657, %v1658
      %v1660 = vand.u32 %v1659, 4294901760
      %1661 = vmatpush1.msra.mxu0 %v1660
      %1662 = vmatprep.subr.mxu0 0.0
      %1663 = vmatpush2.msra.mxu0 0.0
      %1664 = vmatprep.subr.mxu0 0.0
      %1665 = vmatpush2.msra.mxu0 0.0
      %1666 = vmatprep.subr.mxu0 0.0
      %1667 = vmatpush2.msra.mxu0 0.0
      %1668 = vmatprep.subr.mxu0 0.0
      %1669 = vmatpush2.msra.mxu0 0.0
      %1670 = vmatprep.subr.mxu0 0.0
      %1671 = vmatpush2.msra.mxu0 0.0
      %1672 = vmatprep.subr.mxu0 0.0
      %1673 = vmatpush2.msra.mxu0 0.0
      %1674 = vmatprep.subr.mxu0 0.0
      %1675 = vmatpush2.msra.mxu0 0.0
      %1676 = vmatprep.subr.mxu0 0.0
      %1677 = vmatpush2.msra.mxu0 0.0
      %1678 = vmatprep.subr.mxu0 0.0
      %1679 = vmatpush2.msra.mxu0 0.0
      %1680 = vmatprep.subr.mxu0 0.0
      %1681 = vmatpush2.msra.mxu0 0.0
      %1682 = vmatprep.subr.mxu0 0.0
      %1683 = vmatpush2.msra.mxu0 0.0
      %1684 = vmatprep.subr.mxu0 0.0
      %1685 = vmatpush2.msra.mxu0 0.0
      %1686 = vmatprep.subr.mxu0 0.0
      %1687 = vmatpush2.msra.mxu0 0.0
      %1688 = vmatprep.subr.mxu0 0.0
      %1689 = vmatpush2.msra.mxu0 0.0
      %1690 = vmatprep.subr.mxu0 0.0
      %1691 = vmatpush2.msra.mxu0 0.0
      %1692 = vmatprep.subr.mxu0 0.0
      %1693 = vmatpush2.msra.mxu0 0.0
      %1694 = vmatprep.mubr.f32.mxu0 0.0
      %v1695 = vand.u32 %v1541, 4294901760
      %1696 = vmatmul.mubr.f32.gmra.mxu0 %v1695
      %v1697 = vpop.f32.mrf.mxu0
      %v1698 = vadd.f32 %v1617, %v1697
      %v1699 = vpop.f32.mrf.mxu0
      %1700 = vdwg.mxu0
      %1701 = vmatprep.subr.mxu0 0.0
      %1702 = vmatpush1.msra.mxu0 0.0
      %1703 = vmatprep.subr.mxu0 0.0
      %1704 = vmatpush1.msra.mxu0 0.0
      %1705 = vmatprep.subr.mxu0 0.0
      %1706 = vmatpush1.msra.mxu0 0.0
      %1707 = vmatprep.subr.mxu0 0.0
      %1708 = vmatpush1.msra.mxu0 0.0
      %1709 = vmatprep.subr.mxu0 0.0
      %1710 = vmatpush1.msra.mxu0 0.0
      %1711 = vmatprep.subr.mxu0 0.0
      %1712 = vmatpush1.msra.mxu0 0.0
      %1713 = vmatprep.subr.mxu0 0.0
      %1714 = vmatpush1.msra.mxu0 0.0
      %1715 = vmatprep.subr.mxu0 0.0
      %1716 = vmatpush1.msra.mxu0 0.0
      %1717 = vmatprep.subr.mxu0 0.0
      %1718 = vmatpush1.msra.mxu0 0.0
      %1719 = vmatprep.subr.mxu0 0.0
      %1720 = vmatpush1.msra.mxu0 0.0
      %1721 = vmatprep.subr.mxu0 0.0
      %1722 = vmatpush1.msra.mxu0 0.0
      %1723 = vmatprep.subr.mxu0 0.0
      %1724 = vmatpush1.msra.mxu0 0.0
      %1725 = vmatprep.subr.mxu0 0.0
      %1726 = vmatpush1.msra.mxu0 0.0
      %1727 = vmatprep.subr.mxu0 0.0
      %1728 = vmatpush1.msra.mxu0 0.0
      %1729 = vmatprep.subr.mxu0 0.0
      %v1730 = vand.u32 %v408, 4294901760
      %v1731 = vsub.f32 %v408, %v1730
      %1732 = vmatpush1.msra.mxu0 %v1731
      %1733 = vmatprep.subr.mxu0 0.0
      %v1734 = vand.u32 %v407, 4294901760
      %v1735 = vsub.f32 %v407, %v1734
      %1736 = vmatpush1.msra.mxu0 %v1735
      %1737 = vmatprep.subr.mxu0 0.0
      %1738 = vmatpush2.msra.mxu0 0.0
      %1739 = vmatprep.subr.mxu0 0.0
      %1740 = vmatpush2.msra.mxu0 0.0
      %1741 = vmatprep.subr.mxu0 0.0
      %1742 = vmatpush2.msra.mxu0 0.0
      %1743 = vmatprep.subr.mxu0 0.0
      %1744 = vmatpush2.msra.mxu0 0.0
      %1745 = vmatprep.subr.mxu0 0.0
      %1746 = vmatpush2.msra.mxu0 0.0
      %1747 = vmatprep.subr.mxu0 0.0
      %1748 = vmatpush2.msra.mxu0 0.0
      %1749 = vmatprep.subr.mxu0 0.0
      %1750 = vmatpush2.msra.mxu0 0.0
      %1751 = vmatprep.subr.mxu0 0.0
      %1752 = vmatpush2.msra.mxu0 0.0
      %1753 = vmatprep.subr.mxu0 0.0
      %1754 = vmatpush2.msra.mxu0 0.0
      %1755 = vmatprep.subr.mxu0 0.0
      %1756 = vmatpush2.msra.mxu0 0.0
      %1757 = vmatprep.subr.mxu0 0.0
      %1758 = vmatpush2.msra.mxu0 0.0
      %1759 = vmatprep.subr.mxu0 0.0
      %1760 = vmatpush2.msra.mxu0 0.0
      %1761 = vmatprep.subr.mxu0 0.0
      %1762 = vmatpush2.msra.mxu0 0.0
      %1763 = vmatprep.subr.mxu0 0.0
      %1764 = vmatpush2.msra.mxu0 0.0
      %1765 = vmatprep.subr.mxu0 0.0
      %1766 = vmatpush2.msra.mxu0 0.0
      %1767 = vmatprep.subr.mxu0 0.0
      %1768 = vmatpush2.msra.mxu0 0.0
      %1769 = vmatprep.mubr.f32.mxu0 0.0
      %v1770 = vand.u32 %v1541, 4294901760
      %v1771 = vsub.f32 %v1541, %v1770
      %1772 = vmatmul.mubr.f32.gmra.mxu0 %v1771
      %v1773 = vpop.f32.mrf.mxu0
      %v1774 = vadd.f32 %v1698, %v1773
      %v1775 = vpop.f32.mrf.mxu0
      %1776 = vdwg.mxu0
      %1777 = vmatprep.subr.mxu0 0.0
      %1778 = vmatpush1.msra.mxu0 0.0
      %1779 = vmatprep.subr.mxu0 0.0
      %1780 = vmatpush1.msra.mxu0 0.0
      %1781 = vmatprep.subr.mxu0 0.0
      %1782 = vmatpush1.msra.mxu0 0.0
      %1783 = vmatprep.subr.mxu0 0.0
      %1784 = vmatpush1.msra.mxu0 0.0
      %1785 = vmatprep.subr.mxu0 0.0
      %1786 = vmatpush1.msra.mxu0 0.0
      %1787 = vmatprep.subr.mxu0 0.0
      %1788 = vmatpush1.msra.mxu0 0.0
      %1789 = vmatprep.subr.mxu0 0.0
      %1790 = vmatpush1.msra.mxu0 0.0
      %1791 = vmatprep.subr.mxu0 0.0
      %1792 = vmatpush1.msra.mxu0 0.0
      %1793 = vmatprep.subr.mxu0 0.0
      %1794 = vmatpush1.msra.mxu0 0.0
      %1795 = vmatprep.subr.mxu0 0.0
      %1796 = vmatpush1.msra.mxu0 0.0
      %1797 = vmatprep.subr.mxu0 0.0
      %1798 = vmatpush1.msra.mxu0 0.0
      %1799 = vmatprep.subr.mxu0 0.0
      %1800 = vmatpush1.msra.mxu0 0.0
      %1801 = vmatprep.subr.mxu0 0.0
      %1802 = vmatpush1.msra.mxu0 0.0
      %1803 = vmatprep.subr.mxu0 0.0
      %1804 = vmatpush1.msra.mxu0 0.0
      %1805 = vmatprep.subr.mxu0 0.0
      %v1806 = vand.u32 %v408, 4294901760
      %1807 = vmatpush1.msra.mxu0 %v1806
      %1808 = vmatprep.subr.mxu0 0.0
      %v1809 = vand.u32 %v407, 4294901760
      %1810 = vmatpush1.msra.mxu0 %v1809
      %1811 = vmatprep.subr.mxu0 0.0
      %1812 = vmatpush2.msra.mxu0 0.0
      %1813 = vmatprep.subr.mxu0 0.0
      %1814 = vmatpush2.msra.mxu0 0.0
      %1815 = vmatprep.subr.mxu0 0.0
      %1816 = vmatpush2.msra.mxu0 0.0
      %1817 = vmatprep.subr.mxu0 0.0
      %1818 = vmatpush2.msra.mxu0 0.0
      %1819 = vmatprep.subr.mxu0 0.0
      %1820 = vmatpush2.msra.mxu0 0.0
      %1821 = vmatprep.subr.mxu0 0.0
      %1822 = vmatpush2.msra.mxu0 0.0
      %1823 = vmatprep.subr.mxu0 0.0
      %1824 = vmatpush2.msra.mxu0 0.0
      %1825 = vmatprep.subr.mxu0 0.0
      %1826 = vmatpush2.msra.mxu0 0.0
      %1827 = vmatprep.subr.mxu0 0.0
      %1828 = vmatpush2.msra.mxu0 0.0
      %1829 = vmatprep.subr.mxu0 0.0
      %1830 = vmatpush2.msra.mxu0 0.0
      %1831 = vmatprep.subr.mxu0 0.0
      %1832 = vmatpush2.msra.mxu0 0.0
      %1833 = vmatprep.subr.mxu0 0.0
      %1834 = vmatpush2.msra.mxu0 0.0
      %1835 = vmatprep.subr.mxu0 0.0
      %1836 = vmatpush2.msra.mxu0 0.0
      %1837 = vmatprep.subr.mxu0 0.0
      %1838 = vmatpush2.msra.mxu0 0.0
      %1839 = vmatprep.subr.mxu0 0.0
      %1840 = vmatpush2.msra.mxu0 0.0
      %1841 = vmatprep.subr.mxu0 0.0
      %1842 = vmatpush2.msra.mxu0 0.0
      %1843 = vmatprep.mubr.f32.mxu0 0.0
      %v1844 = vand.u32 %v1541, 4294901760
      %v1845 = vsub.f32 %v1541, %v1844
      %v1846 = vand.u32 %v1845, 4294901760
      %1847 = vmatmul.mubr.f32.gmra.mxu0 %v1846
      %v1848 = vpop.f32.mrf.mxu0
      %v1849 = vadd.f32 %v1774, %v1848
      %v1850 = vpop.f32.mrf.mxu0
      %1851 = vdwg.mxu0
      %1852 = vmatprep.subr.mxu0 0.0
      %1853 = vmatpush1.msra.mxu0 0.0
      %1854 = vmatprep.subr.mxu0 0.0
      %1855 = vmatpush1.msra.mxu0 0.0
      %1856 = vmatprep.subr.mxu0 0.0
      %1857 = vmatpush1.msra.mxu0 0.0
      %1858 = vmatprep.subr.mxu0 0.0
      %1859 = vmatpush1.msra.mxu0 0.0
      %1860 = vmatprep.subr.mxu0 0.0
      %1861 = vmatpush1.msra.mxu0 0.0
      %1862 = vmatprep.subr.mxu0 0.0
      %1863 = vmatpush1.msra.mxu0 0.0
      %1864 = vmatprep.subr.mxu0 0.0
      %1865 = vmatpush1.msra.mxu0 0.0
      %1866 = vmatprep.subr.mxu0 0.0
      %1867 = vmatpush1.msra.mxu0 0.0
      %1868 = vmatprep.subr.mxu0 0.0
      %1869 = vmatpush1.msra.mxu0 0.0
      %1870 = vmatprep.subr.mxu0 0.0
      %1871 = vmatpush1.msra.mxu0 0.0
      %1872 = vmatprep.subr.mxu0 0.0
      %1873 = vmatpush1.msra.mxu0 0.0
      %1874 = vmatprep.subr.mxu0 0.0
      %1875 = vmatpush1.msra.mxu0 0.0
      %1876 = vmatprep.subr.mxu0 0.0
      %1877 = vmatpush1.msra.mxu0 0.0
      %1878 = vmatprep.subr.mxu0 0.0
      %1879 = vmatpush1.msra.mxu0 0.0
      %1880 = vmatprep.subr.mxu0 0.0
      %v1881 = vand.u32 %v408, 4294901760
      %v1882 = vsub.f32 %v408, %v1881
      %v1883 = vand.u32 %v1882, 4294901760
      %1884 = vmatpush1.msra.mxu0 %v1883
      %1885 = vmatprep.subr.mxu0 0.0
      %v1886 = vand.u32 %v407, 4294901760
      %v1887 = vsub.f32 %v407, %v1886
      %v1888 = vand.u32 %v1887, 4294901760
      %1889 = vmatpush1.msra.mxu0 %v1888
      %1890 = vmatprep.subr.mxu0 0.0
      %1891 = vmatpush2.msra.mxu0 0.0
      %1892 = vmatprep.subr.mxu0 0.0
      %1893 = vmatpush2.msra.mxu0 0.0
      %1894 = vmatprep.subr.mxu0 0.0
      %1895 = vmatpush2.msra.mxu0 0.0
      %1896 = vmatprep.subr.mxu0 0.0
      %1897 = vmatpush2.msra.mxu0 0.0
      %1898 = vmatprep.subr.mxu0 0.0
      %1899 = vmatpush2.msra.mxu0 0.0
      %1900 = vmatprep.subr.mxu0 0.0
      %1901 = vmatpush2.msra.mxu0 0.0
      %1902 = vmatprep.subr.mxu0 0.0
      %1903 = vmatpush2.msra.mxu0 0.0
      %1904 = vmatprep.subr.mxu0 0.0
      %1905 = vmatpush2.msra.mxu0 0.0
      %1906 = vmatprep.subr.mxu0 0.0
      %1907 = vmatpush2.msra.mxu0 0.0
      %1908 = vmatprep.subr.mxu0 0.0
      %1909 = vmatpush2.msra.mxu0 0.0
      %1910 = vmatprep.subr.mxu0 0.0
      %1911 = vmatpush2.msra.mxu0 0.0
      %1912 = vmatprep.subr.mxu0 0.0
      %1913 = vmatpush2.msra.mxu0 0.0
      %1914 = vmatprep.subr.mxu0 0.0
      %1915 = vmatpush2.msra.mxu0 0.0
      %1916 = vmatprep.subr.mxu0 0.0
      %1917 = vmatpush2.msra.mxu0 0.0
      %1918 = vmatprep.subr.mxu0 0.0
      %1919 = vmatpush2.msra.mxu0 0.0
      %1920 = vmatprep.subr.mxu0 0.0
      %1921 = vmatpush2.msra.mxu0 0.0
      %1922 = vmatprep.mubr.f32.mxu0 0.0
      %v1923 = vand.u32 %v1541, 4294901760
      %1924 = vmatmul.mubr.f32.gmra.mxu0 %v1923
      %v1925 = vpop.f32.mrf.mxu0
      %v1926 = vadd.f32 %v1849, %v1925
      %v1927 = vpop.f32.mrf.mxu0
      %1928 = vdwg.mxu0
      %1929 = vmatprep.subr.mxu0 0.0
      %1930 = vmatpush1.msra.mxu0 0.0
      %1931 = vmatprep.subr.mxu0 0.0
      %1932 = vmatpush1.msra.mxu0 0.0
      %1933 = vmatprep.subr.mxu0 0.0
      %1934 = vmatpush1.msra.mxu0 0.0
      %1935 = vmatprep.subr.mxu0 0.0
      %1936 = vmatpush1.msra.mxu0 0.0
      %1937 = vmatprep.subr.mxu0 0.0
      %1938 = vmatpush1.msra.mxu0 0.0
      %1939 = vmatprep.subr.mxu0 0.0
      %1940 = vmatpush1.msra.mxu0 0.0
      %1941 = vmatprep.subr.mxu0 0.0
      %1942 = vmatpush1.msra.mxu0 0.0
      %1943 = vmatprep.subr.mxu0 0.0
      %1944 = vmatpush1.msra.mxu0 0.0
      %1945 = vmatprep.subr.mxu0 0.0
      %1946 = vmatpush1.msra.mxu0 0.0
      %1947 = vmatprep.subr.mxu0 0.0
      %1948 = vmatpush1.msra.mxu0 0.0
      %1949 = vmatprep.subr.mxu0 0.0
      %1950 = vmatpush1.msra.mxu0 0.0
      %1951 = vmatprep.subr.mxu0 0.0
      %1952 = vmatpush1.msra.mxu0 0.0
      %1953 = vmatprep.subr.mxu0 0.0
      %1954 = vmatpush1.msra.mxu0 0.0
      %1955 = vmatprep.subr.mxu0 0.0
      %1956 = vmatpush1.msra.mxu0 0.0
      %1957 = vmatprep.subr.mxu0 0.0
      %v1958 = vand.u32 %v408, 4294901760
      %1959 = vmatpush1.msra.mxu0 %v1958
      %1960 = vmatprep.subr.mxu0 0.0
      %v1961 = vand.u32 %v407, 4294901760
      %1962 = vmatpush1.msra.mxu0 %v1961
      %1963 = vmatprep.subr.mxu0 0.0
      %1964 = vmatpush2.msra.mxu0 0.0
      %1965 = vmatprep.subr.mxu0 0.0
      %1966 = vmatpush2.msra.mxu0 0.0
      %1967 = vmatprep.subr.mxu0 0.0
      %1968 = vmatpush2.msra.mxu0 0.0
      %1969 = vmatprep.subr.mxu0 0.0
      %1970 = vmatpush2.msra.mxu0 0.0
      %1971 = vmatprep.subr.mxu0 0.0
      %1972 = vmatpush2.msra.mxu0 0.0
      %1973 = vmatprep.subr.mxu0 0.0
      %1974 = vmatpush2.msra.mxu0 0.0
      %1975 = vmatprep.subr.mxu0 0.0
      %1976 = vmatpush2.msra.mxu0 0.0
      %1977 = vmatprep.subr.mxu0 0.0
      %1978 = vmatpush2.msra.mxu0 0.0
      %1979 = vmatprep.subr.mxu0 0.0
      %1980 = vmatpush2.msra.mxu0 0.0
      %1981 = vmatprep.subr.mxu0 0.0
      %1982 = vmatpush2.msra.mxu0 0.0
      %1983 = vmatprep.subr.mxu0 0.0
      %1984 = vmatpush2.msra.mxu0 0.0
      %1985 = vmatprep.subr.mxu0 0.0
      %1986 = vmatpush2.msra.mxu0 0.0
      %1987 = vmatprep.subr.mxu0 0.0
      %1988 = vmatpush2.msra.mxu0 0.0
      %1989 = vmatprep.subr.mxu0 0.0
      %1990 = vmatpush2.msra.mxu0 0.0
      %1991 = vmatprep.subr.mxu0 0.0
      %1992 = vmatpush2.msra.mxu0 0.0
      %1993 = vmatprep.subr.mxu0 0.0
      %1994 = vmatpush2.msra.mxu0 0.0
      %1995 = vmatprep.mubr.f32.mxu0 0.0
      %v1996 = vand.u32 %v1541, 4294901760
      %1997 = vmatmul.mubr.f32.gmra.mxu0 %v1996
      %v1998 = vpop.f32.mrf.mxu0
      %v1999 = vadd.f32 %v1926, %v1998
      %v2000 = vpop.f32.mrf.mxu0
      %2001 = vdwg.mxu0
      %2002 = vset.pattern.permute.xlu0 1
      %2003 = vperm.xlu0 %2002, %v346
      %v2004 = vpop.permute.xlu0 %2003
      %2005 = vset.pattern.permute.xlu0 1
      %2006 = vperm.xlu0 %2005, %v347
      %v2007 = vpop.permute.xlu0 %2006
      %2008 = vset.pattern.permute.xlu0 1
      %2009 = vperm.xlu0 %2008, %v348
      %v2010 = vpop.permute.xlu0 %2009
      %2011 = vset.pattern.permute.xlu0 1
      %2012 = vperm.xlu0 %2011, %v349
      %v2013 = vpop.permute.xlu0 %2012
      %2014 = vset.pattern.permute.xlu0 1
      %2015 = vperm.xlu0 %2014, %v350
      %v2016 = vpop.permute.xlu0 %2015
      %2017 = vset.pattern.permute.xlu0 1
      %2018 = vperm.xlu0 %2017, %v351
      %v2019 = vpop.permute.xlu0 %2018
      %2020 = vset.pattern.permute.xlu0 1
      %2021 = vperm.xlu0 %2020, %v352
      %v2022 = vpop.permute.xlu0 %2021
      %2023 = vset.pattern.permute.xlu0 1
      %2024 = vperm.xlu0 %2023, %v353
      %v2025 = vpop.permute.xlu0 %2024
      %v2026 = vlaneseq
      %v2027 = vshrl.u32 %v2026, 7
      %v2028 = vsub.s32 %v438, %v2027
      %v2029 = vrot.slane %v2004, %v2028
      %v2030 = vlaneseq
      %v2031 = vshrl.u32 %v2030, 7
      %v2032 = vsub.s32 %v443, %v2031
      %v2033 = vrot.slane %v2007, %v2032
      %v2034 = vsel %vm448, %v2033, %v2029
      %v2035 = vlaneseq
      %v2036 = vshrl.u32 %v2035, 7
      %v2037 = vsub.s32 %v438, %v2036
      %v2038 = vrot.slane %v2010, %v2037
      %v2039 = vlaneseq
      %v2040 = vshrl.u32 %v2039, 7
      %v2041 = vsub.s32 %v443, %v2040
      %v2042 = vrot.slane %v2013, %v2041
      %v2043 = vsel %vm448, %v2042, %v2038
      %v2044 = vlaneseq
      %v2045 = vshrl.u32 %v2044, 7
      %v2046 = vsub.s32 %v438, %v2045
      %v2047 = vrot.slane %v2016, %v2046
      %v2048 = vlaneseq
      %v2049 = vshrl.u32 %v2048, 7
      %v2050 = vsub.s32 %v443, %v2049
      %v2051 = vrot.slane %v2019, %v2050
      %v2052 = vsel %vm448, %v2051, %v2047
      %v2053 = vlaneseq
      %v2054 = vshrl.u32 %v2053, 7
      %v2055 = vsub.s32 %v438, %v2054
      %v2056 = vrot.slane %v2022, %v2055
      %v2057 = vlaneseq
      %v2058 = vshrl.u32 %v2057, 7
      %v2059 = vsub.s32 %v443, %v2058
      %v2060 = vrot.slane %v2025, %v2059
      %v2061 = vsel %vm448, %v2060, %v2056
      %v2062 = vsel %vm477, %v2043, %v2034
      %v2063 = vsel %vm479, %v2052, %v2062
      %v2064 = vsel %vm481, %v2061, %v2063
      %v2065 = vsel %vm483, %v2064, 0
      %2067 = vmatprep.subr.mxu0 0.0
      %2068 = vmatpush1.msra.mxu0 0.0
      %2069 = vmatprep.subr.mxu0 0.0
      %2070 = vmatpush1.msra.mxu0 0.0
      %2071 = vmatprep.subr.mxu0 0.0
      %2072 = vmatpush1.msra.mxu0 0.0
      %2073 = vmatprep.subr.mxu0 0.0
      %2074 = vmatpush1.msra.mxu0 0.0
      %2075 = vmatprep.subr.mxu0 0.0
      %2076 = vmatpush1.msra.mxu0 0.0
      %2077 = vmatprep.subr.mxu0 0.0
      %2078 = vmatpush1.msra.mxu0 0.0
      %2079 = vmatprep.subr.mxu0 0.0
      %2080 = vmatpush1.msra.mxu0 0.0
      %2081 = vmatprep.subr.mxu0 0.0
      %2082 = vmatpush1.msra.mxu0 0.0
      %2083 = vmatprep.subr.mxu0 0.0
      %2084 = vmatpush1.msra.mxu0 0.0
      %2085 = vmatprep.subr.mxu0 0.0
      %2086 = vmatpush1.msra.mxu0 0.0
      %2087 = vmatprep.subr.mxu0 0.0
      %2088 = vmatpush1.msra.mxu0 0.0
      %2089 = vmatprep.subr.mxu0 0.0
      %2090 = vmatpush1.msra.mxu0 0.0
      %2091 = vmatprep.subr.mxu0 0.0
      %2092 = vmatpush1.msra.mxu0 0.0
      %2093 = vmatprep.subr.mxu0 0.0
      %2094 = vmatpush1.msra.mxu0 0.0
      %2095 = vmatprep.subr.mxu0 0.0
      %v2096 = vand.u32 %v406, 4294901760
      %2097 = vmatpush1.msra.mxu0 %v2096
      %2098 = vmatprep.subr.mxu0 0.0
      %v2099 = vand.u32 %v405, 4294901760
      %2100 = vmatpush1.msra.mxu0 %v2099
      %2101 = vmatprep.subr.mxu0 0.0
      %2102 = vmatpush2.msra.mxu0 0.0
      %2103 = vmatprep.subr.mxu0 0.0
      %2104 = vmatpush2.msra.mxu0 0.0
      %2105 = vmatprep.subr.mxu0 0.0
      %2106 = vmatpush2.msra.mxu0 0.0
      %2107 = vmatprep.subr.mxu0 0.0
      %2108 = vmatpush2.msra.mxu0 0.0
      %2109 = vmatprep.subr.mxu0 0.0
      %2110 = vmatpush2.msra.mxu0 0.0
      %2111 = vmatprep.subr.mxu0 0.0
      %2112 = vmatpush2.msra.mxu0 0.0
      %2113 = vmatprep.subr.mxu0 0.0
      %2114 = vmatpush2.msra.mxu0 0.0
      %2115 = vmatprep.subr.mxu0 0.0
      %2116 = vmatpush2.msra.mxu0 0.0
      %2117 = vmatprep.subr.mxu0 0.0
      %2118 = vmatpush2.msra.mxu0 0.0
      %2119 = vmatprep.subr.mxu0 0.0
      %2120 = vmatpush2.msra.mxu0 0.0
      %2121 = vmatprep.subr.mxu0 0.0
      %2122 = vmatpush2.msra.mxu0 0.0
      %2123 = vmatprep.subr.mxu0 0.0
      %2124 = vmatpush2.msra.mxu0 0.0
      %2125 = vmatprep.subr.mxu0 0.0
      %2126 = vmatpush2.msra.mxu0 0.0
      %2127 = vmatprep.subr.mxu0 0.0
      %2128 = vmatpush2.msra.mxu0 0.0
      %2129 = vmatprep.subr.mxu0 0.0
      %2130 = vmatpush2.msra.mxu0 0.0
      %2131 = vmatprep.subr.mxu0 0.0
      %2132 = vmatpush2.msra.mxu0 0.0
      %2133 = vmatprep.mubr.f32.mxu0 0.0
      %v2134 = vand.u32 %v2065, 4294901760
      %v2135 = vsub.f32 %v2065, %v2134
      %v2136 = vand.u32 %v2135, 4294901760
      %v2137 = vsub.f32 %v2135, %v2136
      %v2138 = vand.u32 %v2137, 4294901760
      %2139 = vmatmul.mubr.f32.gmra.mxu0 %v2138
      %v2140 = vpop.f32.mrf.mxu0
      %v2141 = vadd.f32 %v1999, %v2140
      %v2142 = vpop.f32.mrf.mxu0
      %2143 = vdwg.mxu0
      %2144 = vmatprep.subr.mxu0 0.0
      %2145 = vmatpush1.msra.mxu0 0.0
      %2146 = vmatprep.subr.mxu0 0.0
      %2147 = vmatpush1.msra.mxu0 0.0
      %2148 = vmatprep.subr.mxu0 0.0
      %2149 = vmatpush1.msra.mxu0 0.0
      %2150 = vmatprep.subr.mxu0 0.0
      %2151 = vmatpush1.msra.mxu0 0.0
      %2152 = vmatprep.subr.mxu0 0.0
      %2153 = vmatpush1.msra.mxu0 0.0
      %2154 = vmatprep.subr.mxu0 0.0
      %2155 = vmatpush1.msra.mxu0 0.0
      %2156 = vmatprep.subr.mxu0 0.0
      %2157 = vmatpush1.msra.mxu0 0.0
      %2158 = vmatprep.subr.mxu0 0.0
      %2159 = vmatpush1.msra.mxu0 0.0
      %2160 = vmatprep.subr.mxu0 0.0
      %2161 = vmatpush1.msra.mxu0 0.0
      %2162 = vmatprep.subr.mxu0 0.0
      %2163 = vmatpush1.msra.mxu0 0.0
      %2164 = vmatprep.subr.mxu0 0.0
      %2165 = vmatpush1.msra.mxu0 0.0
      %2166 = vmatprep.subr.mxu0 0.0
      %2167 = vmatpush1.msra.mxu0 0.0
      %2168 = vmatprep.subr.mxu0 0.0
      %2169 = vmatpush1.msra.mxu0 0.0
      %2170 = vmatprep.subr.mxu0 0.0
      %2171 = vmatpush1.msra.mxu0 0.0
      %2172 = vmatprep.subr.mxu0 0.0
      %v2173 = vand.u32 %v406, 4294901760
      %v2174 = vsub.f32 %v406, %v2173
      %v2175 = vand.u32 %v2174, 4294901760
      %v2176 = vsub.f32 %v2174, %v2175
      %v2177 = vand.u32 %v2176, 4294901760
      %2178 = vmatpush1.msra.mxu0 %v2177
      %2179 = vmatprep.subr.mxu0 0.0
      %v2180 = vand.u32 %v405, 4294901760
      %v2181 = vsub.f32 %v405, %v2180
      %v2182 = vand.u32 %v2181, 4294901760
      %v2183 = vsub.f32 %v2181, %v2182
      %v2184 = vand.u32 %v2183, 4294901760
      %2185 = vmatpush1.msra.mxu0 %v2184
      %2186 = vmatprep.subr.mxu0 0.0
      %2187 = vmatpush2.msra.mxu0 0.0
      %2188 = vmatprep.subr.mxu0 0.0
      %2189 = vmatpush2.msra.mxu0 0.0
      %2190 = vmatprep.subr.mxu0 0.0
      %2191 = vmatpush2.msra.mxu0 0.0
      %2192 = vmatprep.subr.mxu0 0.0
      %2193 = vmatpush2.msra.mxu0 0.0
      %2194 = vmatprep.subr.mxu0 0.0
      %2195 = vmatpush2.msra.mxu0 0.0
      %2196 = vmatprep.subr.mxu0 0.0
      %2197 = vmatpush2.msra.mxu0 0.0
      %2198 = vmatprep.subr.mxu0 0.0
      %2199 = vmatpush2.msra.mxu0 0.0
      %2200 = vmatprep.subr.mxu0 0.0
      %2201 = vmatpush2.msra.mxu0 0.0
      %2202 = vmatprep.subr.mxu0 0.0
      %2203 = vmatpush2.msra.mxu0 0.0
      %2204 = vmatprep.subr.mxu0 0.0
      %2205 = vmatpush2.msra.mxu0 0.0
      %2206 = vmatprep.subr.mxu0 0.0
      %2207 = vmatpush2.msra.mxu0 0.0
      %2208 = vmatprep.subr.mxu0 0.0
      %2209 = vmatpush2.msra.mxu0 0.0
      %2210 = vmatprep.subr.mxu0 0.0
      %2211 = vmatpush2.msra.mxu0 0.0
      %2212 = vmatprep.subr.mxu0 0.0
      %2213 = vmatpush2.msra.mxu0 0.0
      %2214 = vmatprep.subr.mxu0 0.0
      %2215 = vmatpush2.msra.mxu0 0.0
      %2216 = vmatprep.subr.mxu0 0.0
      %2217 = vmatpush2.msra.mxu0 0.0
      %2218 = vmatprep.mubr.f32.mxu0 0.0
      %v2219 = vand.u32 %v2065, 4294901760
      %2220 = vmatmul.mubr.f32.gmra.mxu0 %v2219
      %v2221 = vpop.f32.mrf.mxu0
      %v2222 = vadd.f32 %v2141, %v2221
      %v2223 = vpop.f32.mrf.mxu0
      %2224 = vdwg.mxu0
      %2225 = vmatprep.subr.mxu0 0.0
      %2226 = vmatpush1.msra.mxu0 0.0
      %2227 = vmatprep.subr.mxu0 0.0
      %2228 = vmatpush1.msra.mxu0 0.0
      %2229 = vmatprep.subr.mxu0 0.0
      %2230 = vmatpush1.msra.mxu0 0.0
      %2231 = vmatprep.subr.mxu0 0.0
      %2232 = vmatpush1.msra.mxu0 0.0
      %2233 = vmatprep.subr.mxu0 0.0
      %2234 = vmatpush1.msra.mxu0 0.0
      %2235 = vmatprep.subr.mxu0 0.0
      %2236 = vmatpush1.msra.mxu0 0.0
      %2237 = vmatprep.subr.mxu0 0.0
      %2238 = vmatpush1.msra.mxu0 0.0
      %2239 = vmatprep.subr.mxu0 0.0
      %2240 = vmatpush1.msra.mxu0 0.0
      %2241 = vmatprep.subr.mxu0 0.0
      %2242 = vmatpush1.msra.mxu0 0.0
      %2243 = vmatprep.subr.mxu0 0.0
      %2244 = vmatpush1.msra.mxu0 0.0
      %2245 = vmatprep.subr.mxu0 0.0
      %2246 = vmatpush1.msra.mxu0 0.0
      %2247 = vmatprep.subr.mxu0 0.0
      %2248 = vmatpush1.msra.mxu0 0.0
      %2249 = vmatprep.subr.mxu0 0.0
      %2250 = vmatpush1.msra.mxu0 0.0
      %2251 = vmatprep.subr.mxu0 0.0
      %2252 = vmatpush1.msra.mxu0 0.0
      %2253 = vmatprep.subr.mxu0 0.0
      %v2254 = vand.u32 %v406, 4294901760
      %v2255 = vsub.f32 %v406, %v2254
      %2256 = vmatpush1.msra.mxu0 %v2255
      %2257 = vmatprep.subr.mxu0 0.0
      %v2258 = vand.u32 %v405, 4294901760
      %v2259 = vsub.f32 %v405, %v2258
      %2260 = vmatpush1.msra.mxu0 %v2259
      %2261 = vmatprep.subr.mxu0 0.0
      %2262 = vmatpush2.msra.mxu0 0.0
      %2263 = vmatprep.subr.mxu0 0.0
      %2264 = vmatpush2.msra.mxu0 0.0
      %2265 = vmatprep.subr.mxu0 0.0
      %2266 = vmatpush2.msra.mxu0 0.0
      %2267 = vmatprep.subr.mxu0 0.0
      %2268 = vmatpush2.msra.mxu0 0.0
      %2269 = vmatprep.subr.mxu0 0.0
      %2270 = vmatpush2.msra.mxu0 0.0
      %2271 = vmatprep.subr.mxu0 0.0
      %2272 = vmatpush2.msra.mxu0 0.0
      %2273 = vmatprep.subr.mxu0 0.0
      %2274 = vmatpush2.msra.mxu0 0.0
      %2275 = vmatprep.subr.mxu0 0.0
      %2276 = vmatpush2.msra.mxu0 0.0
      %2277 = vmatprep.subr.mxu0 0.0
      %2278 = vmatpush2.msra.mxu0 0.0
      %2279 = vmatprep.subr.mxu0 0.0
      %2280 = vmatpush2.msra.mxu0 0.0
      %2281 = vmatprep.subr.mxu0 0.0
      %2282 = vmatpush2.msra.mxu0 0.0
      %2283 = vmatprep.subr.mxu0 0.0
      %2284 = vmatpush2.msra.mxu0 0.0
      %2285 = vmatprep.subr.mxu0 0.0
      %2286 = vmatpush2.msra.mxu0 0.0
      %2287 = vmatprep.subr.mxu0 0.0
      %2288 = vmatpush2.msra.mxu0 0.0
      %2289 = vmatprep.subr.mxu0 0.0
      %2290 = vmatpush2.msra.mxu0 0.0
      %2291 = vmatprep.subr.mxu0 0.0
      %2292 = vmatpush2.msra.mxu0 0.0
      %2293 = vmatprep.mubr.f32.mxu0 0.0
      %v2294 = vand.u32 %v2065, 4294901760
      %v2295 = vsub.f32 %v2065, %v2294
      %2296 = vmatmul.mubr.f32.gmra.mxu0 %v2295
      %v2297 = vpop.f32.mrf.mxu0
      %v2298 = vadd.f32 %v2222, %v2297
      %v2299 = vpop.f32.mrf.mxu0
      %2300 = vdwg.mxu0
      %2301 = vmatprep.subr.mxu0 0.0
      %2302 = vmatpush1.msra.mxu0 0.0
      %2303 = vmatprep.subr.mxu0 0.0
      %2304 = vmatpush1.msra.mxu0 0.0
      %2305 = vmatprep.subr.mxu0 0.0
      %2306 = vmatpush1.msra.mxu0 0.0
      %2307 = vmatprep.subr.mxu0 0.0
      %2308 = vmatpush1.msra.mxu0 0.0
      %2309 = vmatprep.subr.mxu0 0.0
      %2310 = vmatpush1.msra.mxu0 0.0
      %2311 = vmatprep.subr.mxu0 0.0
      %2312 = vmatpush1.msra.mxu0 0.0
      %2313 = vmatprep.subr.mxu0 0.0
      %2314 = vmatpush1.msra.mxu0 0.0
      %2315 = vmatprep.subr.mxu0 0.0
      %2316 = vmatpush1.msra.mxu0 0.0
      %2317 = vmatprep.subr.mxu0 0.0
      %2318 = vmatpush1.msra.mxu0 0.0
      %2319 = vmatprep.subr.mxu0 0.0
      %2320 = vmatpush1.msra.mxu0 0.0
      %2321 = vmatprep.subr.mxu0 0.0
      %2322 = vmatpush1.msra.mxu0 0.0
      %2323 = vmatprep.subr.mxu0 0.0
      %2324 = vmatpush1.msra.mxu0 0.0
      %2325 = vmatprep.subr.mxu0 0.0
      %2326 = vmatpush1.msra.mxu0 0.0
      %2327 = vmatprep.subr.mxu0 0.0
      %2328 = vmatpush1.msra.mxu0 0.0
      %2329 = vmatprep.subr.mxu0 0.0
      %v2330 = vand.u32 %v406, 4294901760
      %2331 = vmatpush1.msra.mxu0 %v2330
      %2332 = vmatprep.subr.mxu0 0.0
      %v2333 = vand.u32 %v405, 4294901760
      %2334 = vmatpush1.msra.mxu0 %v2333
      %2335 = vmatprep.subr.mxu0 0.0
      %2336 = vmatpush2.msra.mxu0 0.0
      %2337 = vmatprep.subr.mxu0 0.0
      %2338 = vmatpush2.msra.mxu0 0.0
      %2339 = vmatprep.subr.mxu0 0.0
      %2340 = vmatpush2.msra.mxu0 0.0
      %2341 = vmatprep.subr.mxu0 0.0
      %2342 = vmatpush2.msra.mxu0 0.0
      %2343 = vmatprep.subr.mxu0 0.0
      %2344 = vmatpush2.msra.mxu0 0.0
      %2345 = vmatprep.subr.mxu0 0.0
      %2346 = vmatpush2.msra.mxu0 0.0
      %2347 = vmatprep.subr.mxu0 0.0
      %2348 = vmatpush2.msra.mxu0 0.0
      %2349 = vmatprep.subr.mxu0 0.0
      %2350 = vmatpush2.msra.mxu0 0.0
      %2351 = vmatprep.subr.mxu0 0.0
      %2352 = vmatpush2.msra.mxu0 0.0
      %2353 = vmatprep.subr.mxu0 0.0
      %2354 = vmatpush2.msra.mxu0 0.0
      %2355 = vmatprep.subr.mxu0 0.0
      %2356 = vmatpush2.msra.mxu0 0.0
      %2357 = vmatprep.subr.mxu0 0.0
      %2358 = vmatpush2.msra.mxu0 0.0
      %2359 = vmatprep.subr.mxu0 0.0
      %2360 = vmatpush2.msra.mxu0 0.0
      %2361 = vmatprep.subr.mxu0 0.0
      %2362 = vmatpush2.msra.mxu0 0.0
      %2363 = vmatprep.subr.mxu0 0.0
      %2364 = vmatpush2.msra.mxu0 0.0
      %2365 = vmatprep.subr.mxu0 0.0
      %2366 = vmatpush2.msra.mxu0 0.0
      %2367 = vmatprep.mubr.f32.mxu0 0.0
      %v2368 = vand.u32 %v2065, 4294901760
      %v2369 = vsub.f32 %v2065, %v2368
      %v2370 = vand.u32 %v2369, 4294901760
      %2371 = vmatmul.mubr.f32.gmra.mxu0 %v2370
      %v2372 = vpop.f32.mrf.mxu0
      %v2373 = vadd.f32 %v2298, %v2372
      %v2374 = vpop.f32.mrf.mxu0
      %2375 = vdwg.mxu0
      %2376 = vmatprep.subr.mxu0 0.0
      %2377 = vmatpush1.msra.mxu0 0.0
      %2378 = vmatprep.subr.mxu0 0.0
      %2379 = vmatpush1.msra.mxu0 0.0
      %2380 = vmatprep.subr.mxu0 0.0
      %2381 = vmatpush1.msra.mxu0 0.0
      %2382 = vmatprep.subr.mxu0 0.0
      %2383 = vmatpush1.msra.mxu0 0.0
      %2384 = vmatprep.subr.mxu0 0.0
      %2385 = vmatpush1.msra.mxu0 0.0
      %2386 = vmatprep.subr.mxu0 0.0
      %2387 = vmatpush1.msra.mxu0 0.0
      %2388 = vmatprep.subr.mxu0 0.0
      %2389 = vmatpush1.msra.mxu0 0.0
      %2390 = vmatprep.subr.mxu0 0.0
      %2391 = vmatpush1.msra.mxu0 0.0
      %2392 = vmatprep.subr.mxu0 0.0
      %2393 = vmatpush1.msra.mxu0 0.0
      %2394 = vmatprep.subr.mxu0 0.0
      %2395 = vmatpush1.msra.mxu0 0.0
      %2396 = vmatprep.subr.mxu0 0.0
      %2397 = vmatpush1.msra.mxu0 0.0
      %2398 = vmatprep.subr.mxu0 0.0
      %2399 = vmatpush1.msra.mxu0 0.0
      %2400 = vmatprep.subr.mxu0 0.0
      %2401 = vmatpush1.msra.mxu0 0.0
      %2402 = vmatprep.subr.mxu0 0.0
      %2403 = vmatpush1.msra.mxu0 0.0
      %2404 = vmatprep.subr.mxu0 0.0
      %v2405 = vand.u32 %v406, 4294901760
      %v2406 = vsub.f32 %v406, %v2405
      %v2407 = vand.u32 %v2406, 4294901760
      %2408 = vmatpush1.msra.mxu0 %v2407
      %2409 = vmatprep.subr.mxu0 0.0
      %v2410 = vand.u32 %v405, 4294901760
      %v2411 = vsub.f32 %v405, %v2410
      %v2412 = vand.u32 %v2411, 4294901760
      %2413 = vmatpush1.msra.mxu0 %v2412
      %2414 = vmatprep.subr.mxu0 0.0
      %2415 = vmatpush2.msra.mxu0 0.0
      %2416 = vmatprep.subr.mxu0 0.0
      %2417 = vmatpush2.msra.mxu0 0.0
      %2418 = vmatprep.subr.mxu0 0.0
      %2419 = vmatpush2.msra.mxu0 0.0
      %2420 = vmatprep.subr.mxu0 0.0
      %2421 = vmatpush2.msra.mxu0 0.0
      %2422 = vmatprep.subr.mxu0 0.0
      %2423 = vmatpush2.msra.mxu0 0.0
      %2424 = vmatprep.subr.mxu0 0.0
      %2425 = vmatpush2.msra.mxu0 0.0
      %2426 = vmatprep.subr.mxu0 0.0
      %2427 = vmatpush2.msra.mxu0 0.0
      %2428 = vmatprep.subr.mxu0 0.0
      %2429 = vmatpush2.msra.mxu0 0.0
      %2430 = vmatprep.subr.mxu0 0.0
      %2431 = vmatpush2.msra.mxu0 0.0
      %2432 = vmatprep.subr.mxu0 0.0
      %2433 = vmatpush2.msra.mxu0 0.0
      %2434 = vmatprep.subr.mxu0 0.0
      %2435 = vmatpush2.msra.mxu0 0.0
      %2436 = vmatprep.subr.mxu0 0.0
      %2437 = vmatpush2.msra.mxu0 0.0
      %2438 = vmatprep.subr.mxu0 0.0
      %2439 = vmatpush2.msra.mxu0 0.0
      %2440 = vmatprep.subr.mxu0 0.0
      %2441 = vmatpush2.msra.mxu0 0.0
      %2442 = vmatprep.subr.mxu0 0.0
      %2443 = vmatpush2.msra.mxu0 0.0
      %2444 = vmatprep.subr.mxu0 0.0
      %2445 = vmatpush2.msra.mxu0 0.0
      %2446 = vmatprep.mubr.f32.mxu0 0.0
      %v2447 = vand.u32 %v2065, 4294901760
      %2448 = vmatmul.mubr.f32.gmra.mxu0 %v2447
      %v2449 = vpop.f32.mrf.mxu0
      %v2450 = vadd.f32 %v2373, %v2449
      %v2451 = vpop.f32.mrf.mxu0
      %2452 = vdwg.mxu0
      %2453 = vmatprep.subr.mxu0 0.0
      %2454 = vmatpush1.msra.mxu0 0.0
      %2455 = vmatprep.subr.mxu0 0.0
      %2456 = vmatpush1.msra.mxu0 0.0
      %2457 = vmatprep.subr.mxu0 0.0
      %2458 = vmatpush1.msra.mxu0 0.0
      %2459 = vmatprep.subr.mxu0 0.0
      %2460 = vmatpush1.msra.mxu0 0.0
      %2461 = vmatprep.subr.mxu0 0.0
      %2462 = vmatpush1.msra.mxu0 0.0
      %2463 = vmatprep.subr.mxu0 0.0
      %2464 = vmatpush1.msra.mxu0 0.0
      %2465 = vmatprep.subr.mxu0 0.0
      %2466 = vmatpush1.msra.mxu0 0.0
      %2467 = vmatprep.subr.mxu0 0.0
      %2468 = vmatpush1.msra.mxu0 0.0
      %2469 = vmatprep.subr.mxu0 0.0
      %2470 = vmatpush1.msra.mxu0 0.0
      %2471 = vmatprep.subr.mxu0 0.0
      %2472 = vmatpush1.msra.mxu0 0.0
      %2473 = vmatprep.subr.mxu0 0.0
      %2474 = vmatpush1.msra.mxu0 0.0
      %2475 = vmatprep.subr.mxu0 0.0
      %2476 = vmatpush1.msra.mxu0 0.0
      %2477 = vmatprep.subr.mxu0 0.0
      %2478 = vmatpush1.msra.mxu0 0.0
      %2479 = vmatprep.subr.mxu0 0.0
      %2480 = vmatpush1.msra.mxu0 0.0
      %2481 = vmatprep.subr.mxu0 0.0
      %v2482 = vand.u32 %v406, 4294901760
      %2483 = vmatpush1.msra.mxu0 %v2482
      %2484 = vmatprep.subr.mxu0 0.0
      %v2485 = vand.u32 %v405, 4294901760
      %2486 = vmatpush1.msra.mxu0 %v2485
      %2487 = vmatprep.subr.mxu0 0.0
      %2488 = vmatpush2.msra.mxu0 0.0
      %2489 = vmatprep.subr.mxu0 0.0
      %2490 = vmatpush2.msra.mxu0 0.0
      %2491 = vmatprep.subr.mxu0 0.0
      %2492 = vmatpush2.msra.mxu0 0.0
      %2493 = vmatprep.subr.mxu0 0.0
      %2494 = vmatpush2.msra.mxu0 0.0
      %2495 = vmatprep.subr.mxu0 0.0
      %2496 = vmatpush2.msra.mxu0 0.0
      %2497 = vmatprep.subr.mxu0 0.0
      %2498 = vmatpush2.msra.mxu0 0.0
      %2499 = vmatprep.subr.mxu0 0.0
      %2500 = vmatpush2.msra.mxu0 0.0
      %2501 = vmatprep.subr.mxu0 0.0
      %2502 = vmatpush2.msra.mxu0 0.0
      %2503 = vmatprep.subr.mxu0 0.0
      %2504 = vmatpush2.msra.mxu0 0.0
      %2505 = vmatprep.subr.mxu0 0.0
      %2506 = vmatpush2.msra.mxu0 0.0
      %2507 = vmatprep.subr.mxu0 0.0
      %2508 = vmatpush2.msra.mxu0 0.0
      %2509 = vmatprep.subr.mxu0 0.0
      %2510 = vmatpush2.msra.mxu0 0.0
      %2511 = vmatprep.subr.mxu0 0.0
      %2512 = vmatpush2.msra.mxu0 0.0
      %2513 = vmatprep.subr.mxu0 0.0
      %2514 = vmatpush2.msra.mxu0 0.0
      %2515 = vmatprep.subr.mxu0 0.0
      %2516 = vmatpush2.msra.mxu0 0.0
      %2517 = vmatprep.subr.mxu0 0.0
      %2518 = vmatpush2.msra.mxu0 0.0
      %2519 = vmatprep.mubr.f32.mxu0 0.0
      %v2520 = vand.u32 %v2065, 4294901760
      %2521 = vmatmul.mubr.f32.gmra.mxu0 %v2520
      %v2522 = vpop.f32.mrf.mxu0
      %v2523 = vadd.f32 %v2450, %v2522
      %v2524 = vpop.f32.mrf.mxu0
      %2525 = vdwg.mxu0
      %2526 = vrot.lane.b32.xlu0 %v404, 126
      %v2527 = vpop.permute.xlu0 %2526
      %2528 = vrot.lane.b32.xlu0 %v401, 126
      %v2529 = vpop.permute.xlu0 %2528
      %vm2530 = vcmask 1031168
      %v2531 = vsel %vm2530, %v2527, %v2529
      %v2533 = vmul.f32 %v2523, %v2531
      %v2534 = vadd.f32 %v1477, %v2533
      %2535 = vset.pattern.permute.xlu0 2
      %2536 = vperm.xlu0 %2535, %v367
      %v2537 = vpop.permute.xlu0 %2536
      %2538 = vset.pattern.permute.xlu0 2
      %2539 = vperm.xlu0 %2538, %v387
      %v2540 = vpop.permute.xlu0 %2539
      %2541 = vset.pattern.permute.xlu0 2
      %2542 = vperm.xlu0 %2541, %v370
      %v2543 = vpop.permute.xlu0 %2542
      %2544 = vset.pattern.permute.xlu0 2
      %2545 = vperm.xlu0 %2544, %v388
      %v2546 = vpop.permute.xlu0 %2545
      %2547 = vset.pattern.permute.xlu0 2
      %2548 = vperm.xlu0 %2547, %v373
      %v2549 = vpop.permute.xlu0 %2548
      %2550 = vset.pattern.permute.xlu0 2
      %2551 = vperm.xlu0 %2550, %v389
      %v2552 = vpop.permute.xlu0 %2551
      %2553 = vset.pattern.permute.xlu0 2
      %2554 = vperm.xlu0 %2553, %v376
      %v2555 = vpop.permute.xlu0 %2554
      %2556 = vset.pattern.permute.xlu0 2
      %2557 = vperm.xlu0 %2556, %v390
      %v2558 = vpop.permute.xlu0 %2557
      %v2559 = vlaneseq
      %v2560 = vshrl.u32 %v2559, 7
      %v2561 = vsub.s32 %v438, %v2560
      %v2562 = vrot.slane %v2537, %v2561
      %v2563 = vlaneseq
      %v2564 = vshrl.u32 %v2563, 7
      %v2565 = vsub.s32 %v443, %v2564
      %v2566 = vrot.slane %v2540, %v2565
      %v2567 = vsel %vm448, %v2566, %v2562
      %v2568 = vlaneseq
      %v2569 = vshrl.u32 %v2568, 7
      %v2570 = vsub.s32 %v438, %v2569
      %v2571 = vrot.slane %v2543, %v2570
      %v2572 = vlaneseq
      %v2573 = vshrl.u32 %v2572, 7
      %v2574 = vsub.s32 %v443, %v2573
      %v2575 = vrot.slane %v2546, %v2574
      %v2576 = vsel %vm448, %v2575, %v2571
      %v2577 = vlaneseq
      %v2578 = vshrl.u32 %v2577, 7
      %v2579 = vsub.s32 %v438, %v2578
      %v2580 = vrot.slane %v2549, %v2579
      %v2581 = vlaneseq
      %v2582 = vshrl.u32 %v2581, 7
      %v2583 = vsub.s32 %v443, %v2582
      %v2584 = vrot.slane %v2552, %v2583
      %v2585 = vsel %vm448, %v2584, %v2580
      %v2586 = vlaneseq
      %v2587 = vshrl.u32 %v2586, 7
      %v2588 = vsub.s32 %v438, %v2587
      %v2589 = vrot.slane %v2555, %v2588
      %v2590 = vlaneseq
      %v2591 = vshrl.u32 %v2590, 7
      %v2592 = vsub.s32 %v443, %v2591
      %v2593 = vrot.slane %v2558, %v2592
      %v2594 = vsel %vm448, %v2593, %v2589
      %v2595 = vsel %vm477, %v2576, %v2567
      %v2596 = vsel %vm479, %v2585, %v2595
      %v2597 = vsel %vm481, %v2594, %v2596
      %v2598 = vsel %vm483, %v2597, 0
      %2600 = vmatprep.subr.mxu0 0.0
      %2601 = vmatpush1.msra.mxu0 0.0
      %2602 = vmatprep.subr.mxu0 0.0
      %2603 = vmatpush1.msra.mxu0 0.0
      %2604 = vmatprep.subr.mxu0 0.0
      %2605 = vmatpush1.msra.mxu0 0.0
      %2606 = vmatprep.subr.mxu0 0.0
      %2607 = vmatpush1.msra.mxu0 0.0
      %2608 = vmatprep.subr.mxu0 0.0
      %2609 = vmatpush1.msra.mxu0 0.0
      %2610 = vmatprep.subr.mxu0 0.0
      %2611 = vmatpush1.msra.mxu0 0.0
      %2612 = vmatprep.subr.mxu0 0.0
      %2613 = vmatpush1.msra.mxu0 0.0
      %2614 = vmatprep.subr.mxu0 0.0
      %2615 = vmatpush1.msra.mxu0 0.0
      %2616 = vmatprep.subr.mxu0 0.0
      %2617 = vmatpush1.msra.mxu0 0.0
      %2618 = vmatprep.subr.mxu0 0.0
      %2619 = vmatpush1.msra.mxu0 0.0
      %2620 = vmatprep.subr.mxu0 0.0
      %2621 = vmatpush1.msra.mxu0 0.0
      %2622 = vmatprep.subr.mxu0 0.0
      %2623 = vmatpush1.msra.mxu0 0.0
      %2624 = vmatprep.subr.mxu0 0.0
      %2625 = vmatpush1.msra.mxu0 0.0
      %2626 = vmatprep.subr.mxu0 0.0
      %2627 = vmatpush1.msra.mxu0 0.0
      %2628 = vmatprep.subr.mxu0 0.0
      %v2629 = vand.u32 %v408, 4294901760
      %2630 = vmatpush1.msra.mxu0 %v2629
      %2631 = vmatprep.subr.mxu0 0.0
      %v2632 = vand.u32 %v407, 4294901760
      %2633 = vmatpush1.msra.mxu0 %v2632
      %2634 = vmatprep.subr.mxu0 0.0
      %2635 = vmatpush2.msra.mxu0 0.0
      %2636 = vmatprep.subr.mxu0 0.0
      %2637 = vmatpush2.msra.mxu0 0.0
      %2638 = vmatprep.subr.mxu0 0.0
      %2639 = vmatpush2.msra.mxu0 0.0
      %2640 = vmatprep.subr.mxu0 0.0
      %2641 = vmatpush2.msra.mxu0 0.0
      %2642 = vmatprep.subr.mxu0 0.0
      %2643 = vmatpush2.msra.mxu0 0.0
      %2644 = vmatprep.subr.mxu0 0.0
      %2645 = vmatpush2.msra.mxu0 0.0
      %2646 = vmatprep.subr.mxu0 0.0
      %2647 = vmatpush2.msra.mxu0 0.0
      %2648 = vmatprep.subr.mxu0 0.0
      %2649 = vmatpush2.msra.mxu0 0.0
      %2650 = vmatprep.subr.mxu0 0.0
      %2651 = vmatpush2.msra.mxu0 0.0
      %2652 = vmatprep.subr.mxu0 0.0
      %2653 = vmatpush2.msra.mxu0 0.0
      %2654 = vmatprep.subr.mxu0 0.0
      %2655 = vmatpush2.msra.mxu0 0.0
      %2656 = vmatprep.subr.mxu0 0.0
      %2657 = vmatpush2.msra.mxu0 0.0
      %2658 = vmatprep.subr.mxu0 0.0
      %2659 = vmatpush2.msra.mxu0 0.0
      %2660 = vmatprep.subr.mxu0 0.0
      %2661 = vmatpush2.msra.mxu0 0.0
      %2662 = vmatprep.subr.mxu0 0.0
      %2663 = vmatpush2.msra.mxu0 0.0
      %2664 = vmatprep.subr.mxu0 0.0
      %2665 = vmatpush2.msra.mxu0 0.0
      %2666 = vmatprep.mubr.f32.mxu0 0.0
      %v2667 = vand.u32 %v2598, 4294901760
      %v2668 = vsub.f32 %v2598, %v2667
      %v2669 = vand.u32 %v2668, 4294901760
      %v2670 = vsub.f32 %v2668, %v2669
      %v2671 = vand.u32 %v2670, 4294901760
      %2672 = vmatmul.mubr.f32.gmra.mxu0 %v2671
      %v2673 = vpop.f32.mrf.mxu0
      %v2674 = vadd.f32 0.0, %v2673
      %v2675 = vpop.f32.mrf.mxu0
      %2676 = vdwg.mxu0
      %2677 = vmatprep.subr.mxu0 0.0
      %2678 = vmatpush1.msra.mxu0 0.0
      %2679 = vmatprep.subr.mxu0 0.0
      %2680 = vmatpush1.msra.mxu0 0.0
      %2681 = vmatprep.subr.mxu0 0.0
      %2682 = vmatpush1.msra.mxu0 0.0
      %2683 = vmatprep.subr.mxu0 0.0
      %2684 = vmatpush1.msra.mxu0 0.0
      %2685 = vmatprep.subr.mxu0 0.0
      %2686 = vmatpush1.msra.mxu0 0.0
      %2687 = vmatprep.subr.mxu0 0.0
      %2688 = vmatpush1.msra.mxu0 0.0
      %2689 = vmatprep.subr.mxu0 0.0
      %2690 = vmatpush1.msra.mxu0 0.0
      %2691 = vmatprep.subr.mxu0 0.0
      %2692 = vmatpush1.msra.mxu0 0.0
      %2693 = vmatprep.subr.mxu0 0.0
      %2694 = vmatpush1.msra.mxu0 0.0
      %2695 = vmatprep.subr.mxu0 0.0
      %2696 = vmatpush1.msra.mxu0 0.0
      %2697 = vmatprep.subr.mxu0 0.0
      %2698 = vmatpush1.msra.mxu0 0.0
      %2699 = vmatprep.subr.mxu0 0.0
      %2700 = vmatpush1.msra.mxu0 0.0
      %2701 = vmatprep.subr.mxu0 0.0
      %2702 = vmatpush1.msra.mxu0 0.0
      %2703 = vmatprep.subr.mxu0 0.0
      %2704 = vmatpush1.msra.mxu0 0.0
      %2705 = vmatprep.subr.mxu0 0.0
      %v2706 = vand.u32 %v408, 4294901760
      %v2707 = vsub.f32 %v408, %v2706
      %v2708 = vand.u32 %v2707, 4294901760
      %v2709 = vsub.f32 %v2707, %v2708
      %v2710 = vand.u32 %v2709, 4294901760
      %2711 = vmatpush1.msra.mxu0 %v2710
      %2712 = vmatprep.subr.mxu0 0.0
      %v2713 = vand.u32 %v407, 4294901760
      %v2714 = vsub.f32 %v407, %v2713
      %v2715 = vand.u32 %v2714, 4294901760
      %v2716 = vsub.f32 %v2714, %v2715
      %v2717 = vand.u32 %v2716, 4294901760
      %2718 = vmatpush1.msra.mxu0 %v2717
      %2719 = vmatprep.subr.mxu0 0.0
      %2720 = vmatpush2.msra.mxu0 0.0
      %2721 = vmatprep.subr.mxu0 0.0
      %2722 = vmatpush2.msra.mxu0 0.0
      %2723 = vmatprep.subr.mxu0 0.0
      %2724 = vmatpush2.msra.mxu0 0.0
      %2725 = vmatprep.subr.mxu0 0.0
      %2726 = vmatpush2.msra.mxu0 0.0
      %2727 = vmatprep.subr.mxu0 0.0
      %2728 = vmatpush2.msra.mxu0 0.0
      %2729 = vmatprep.subr.mxu0 0.0
      %2730 = vmatpush2.msra.mxu0 0.0
      %2731 = vmatprep.subr.mxu0 0.0
      %2732 = vmatpush2.msra.mxu0 0.0
      %2733 = vmatprep.subr.mxu0 0.0
      %2734 = vmatpush2.msra.mxu0 0.0
      %2735 = vmatprep.subr.mxu0 0.0
      %2736 = vmatpush2.msra.mxu0 0.0
      %2737 = vmatprep.subr.mxu0 0.0
      %2738 = vmatpush2.msra.mxu0 0.0
      %2739 = vmatprep.subr.mxu0 0.0
      %2740 = vmatpush2.msra.mxu0 0.0
      %2741 = vmatprep.subr.mxu0 0.0
      %2742 = vmatpush2.msra.mxu0 0.0
      %2743 = vmatprep.subr.mxu0 0.0
      %2744 = vmatpush2.msra.mxu0 0.0
      %2745 = vmatprep.subr.mxu0 0.0
      %2746 = vmatpush2.msra.mxu0 0.0
      %2747 = vmatprep.subr.mxu0 0.0
      %2748 = vmatpush2.msra.mxu0 0.0
      %2749 = vmatprep.subr.mxu0 0.0
      %2750 = vmatpush2.msra.mxu0 0.0
      %2751 = vmatprep.mubr.f32.mxu0 0.0
      %v2752 = vand.u32 %v2598, 4294901760
      %2753 = vmatmul.mubr.f32.gmra.mxu0 %v2752
      %v2754 = vpop.f32.mrf.mxu0
      %v2755 = vadd.f32 %v2674, %v2754
      %v2756 = vpop.f32.mrf.mxu0
      %2757 = vdwg.mxu0
      %2758 = vmatprep.subr.mxu0 0.0
      %2759 = vmatpush1.msra.mxu0 0.0
      %2760 = vmatprep.subr.mxu0 0.0
      %2761 = vmatpush1.msra.mxu0 0.0
      %2762 = vmatprep.subr.mxu0 0.0
      %2763 = vmatpush1.msra.mxu0 0.0
      %2764 = vmatprep.subr.mxu0 0.0
      %2765 = vmatpush1.msra.mxu0 0.0
      %2766 = vmatprep.subr.mxu0 0.0
      %2767 = vmatpush1.msra.mxu0 0.0
      %2768 = vmatprep.subr.mxu0 0.0
      %2769 = vmatpush1.msra.mxu0 0.0
      %2770 = vmatprep.subr.mxu0 0.0
      %2771 = vmatpush1.msra.mxu0 0.0
      %2772 = vmatprep.subr.mxu0 0.0
      %2773 = vmatpush1.msra.mxu0 0.0
      %2774 = vmatprep.subr.mxu0 0.0
      %2775 = vmatpush1.msra.mxu0 0.0
      %2776 = vmatprep.subr.mxu0 0.0
      %2777 = vmatpush1.msra.mxu0 0.0
      %2778 = vmatprep.subr.mxu0 0.0
      %2779 = vmatpush1.msra.mxu0 0.0
      %2780 = vmatprep.subr.mxu0 0.0
      %2781 = vmatpush1.msra.mxu0 0.0
      %2782 = vmatprep.subr.mxu0 0.0
      %2783 = vmatpush1.msra.mxu0 0.0
      %2784 = vmatprep.subr.mxu0 0.0
      %2785 = vmatpush1.msra.mxu0 0.0
      %2786 = vmatprep.subr.mxu0 0.0
      %v2787 = vand.u32 %v408, 4294901760
      %v2788 = vsub.f32 %v408, %v2787
      %2789 = vmatpush1.msra.mxu0 %v2788
      %2790 = vmatprep.subr.mxu0 0.0
      %v2791 = vand.u32 %v407, 4294901760
      %v2792 = vsub.f32 %v407, %v2791
      %2793 = vmatpush1.msra.mxu0 %v2792
      %2794 = vmatprep.subr.mxu0 0.0
      %2795 = vmatpush2.msra.mxu0 0.0
      %2796 = vmatprep.subr.mxu0 0.0
      %2797 = vmatpush2.msra.mxu0 0.0
      %2798 = vmatprep.subr.mxu0 0.0
      %2799 = vmatpush2.msra.mxu0 0.0
      %2800 = vmatprep.subr.mxu0 0.0
      %2801 = vmatpush2.msra.mxu0 0.0
      %2802 = vmatprep.subr.mxu0 0.0
      %2803 = vmatpush2.msra.mxu0 0.0
      %2804 = vmatprep.subr.mxu0 0.0
      %2805 = vmatpush2.msra.mxu0 0.0
      %2806 = vmatprep.subr.mxu0 0.0
      %2807 = vmatpush2.msra.mxu0 0.0
      %2808 = vmatprep.subr.mxu0 0.0
      %2809 = vmatpush2.msra.mxu0 0.0
      %2810 = vmatprep.subr.mxu0 0.0
      %2811 = vmatpush2.msra.mxu0 0.0
      %2812 = vmatprep.subr.mxu0 0.0
      %2813 = vmatpush2.msra.mxu0 0.0
      %2814 = vmatprep.subr.mxu0 0.0
      %2815 = vmatpush2.msra.mxu0 0.0
      %2816 = vmatprep.subr.mxu0 0.0
      %2817 = vmatpush2.msra.mxu0 0.0
      %2818 = vmatprep.subr.mxu0 0.0
      %2819 = vmatpush2.msra.mxu0 0.0
      %2820 = vmatprep.subr.mxu0 0.0
      %2821 = vmatpush2.msra.mxu0 0.0
      %2822 = vmatprep.subr.mxu0 0.0
      %2823 = vmatpush2.msra.mxu0 0.0
      %2824 = vmatprep.subr.mxu0 0.0
      %2825 = vmatpush2.msra.mxu0 0.0
      %2826 = vmatprep.mubr.f32.mxu0 0.0
      %v2827 = vand.u32 %v2598, 4294901760
      %v2828 = vsub.f32 %v2598, %v2827
      %2829 = vmatmul.mubr.f32.gmra.mxu0 %v2828
      %v2830 = vpop.f32.mrf.mxu0
      %v2831 = vadd.f32 %v2755, %v2830
      %v2832 = vpop.f32.mrf.mxu0
      %2833 = vdwg.mxu0
      %2834 = vmatprep.subr.mxu0 0.0
      %2835 = vmatpush1.msra.mxu0 0.0
      %2836 = vmatprep.subr.mxu0 0.0
      %2837 = vmatpush1.msra.mxu0 0.0
      %2838 = vmatprep.subr.mxu0 0.0
      %2839 = vmatpush1.msra.mxu0 0.0
      %2840 = vmatprep.subr.mxu0 0.0
      %2841 = vmatpush1.msra.mxu0 0.0
      %2842 = vmatprep.subr.mxu0 0.0
      %2843 = vmatpush1.msra.mxu0 0.0
      %2844 = vmatprep.subr.mxu0 0.0
      %2845 = vmatpush1.msra.mxu0 0.0
      %2846 = vmatprep.subr.mxu0 0.0
      %2847 = vmatpush1.msra.mxu0 0.0
      %2848 = vmatprep.subr.mxu0 0.0
      %2849 = vmatpush1.msra.mxu0 0.0
      %2850 = vmatprep.subr.mxu0 0.0
      %2851 = vmatpush1.msra.mxu0 0.0
      %2852 = vmatprep.subr.mxu0 0.0
      %2853 = vmatpush1.msra.mxu0 0.0
      %2854 = vmatprep.subr.mxu0 0.0
      %2855 = vmatpush1.msra.mxu0 0.0
      %2856 = vmatprep.subr.mxu0 0.0
      %2857 = vmatpush1.msra.mxu0 0.0
      %2858 = vmatprep.subr.mxu0 0.0
      %2859 = vmatpush1.msra.mxu0 0.0
      %2860 = vmatprep.subr.mxu0 0.0
      %2861 = vmatpush1.msra.mxu0 0.0
      %2862 = vmatprep.subr.mxu0 0.0
      %v2863 = vand.u32 %v408, 4294901760
      %2864 = vmatpush1.msra.mxu0 %v2863
      %2865 = vmatprep.subr.mxu0 0.0
      %v2866 = vand.u32 %v407, 4294901760
      %2867 = vmatpush1.msra.mxu0 %v2866
      %2868 = vmatprep.subr.mxu0 0.0
      %2869 = vmatpush2.msra.mxu0 0.0
      %2870 = vmatprep.subr.mxu0 0.0
      %2871 = vmatpush2.msra.mxu0 0.0
      %2872 = vmatprep.subr.mxu0 0.0
      %2873 = vmatpush2.msra.mxu0 0.0
      %2874 = vmatprep.subr.mxu0 0.0
      %2875 = vmatpush2.msra.mxu0 0.0
      %2876 = vmatprep.subr.mxu0 0.0
      %2877 = vmatpush2.msra.mxu0 0.0
      %2878 = vmatprep.subr.mxu0 0.0
      %2879 = vmatpush2.msra.mxu0 0.0
      %2880 = vmatprep.subr.mxu0 0.0
      %2881 = vmatpush2.msra.mxu0 0.0
      %2882 = vmatprep.subr.mxu0 0.0
      %2883 = vmatpush2.msra.mxu0 0.0
      %2884 = vmatprep.subr.mxu0 0.0
      %2885 = vmatpush2.msra.mxu0 0.0
      %2886 = vmatprep.subr.mxu0 0.0
      %2887 = vmatpush2.msra.mxu0 0.0
      %2888 = vmatprep.subr.mxu0 0.0
      %2889 = vmatpush2.msra.mxu0 0.0
      %2890 = vmatprep.subr.mxu0 0.0
      %2891 = vmatpush2.msra.mxu0 0.0
      %2892 = vmatprep.subr.mxu0 0.0
      %2893 = vmatpush2.msra.mxu0 0.0
      %2894 = vmatprep.subr.mxu0 0.0
      %2895 = vmatpush2.msra.mxu0 0.0
      %2896 = vmatprep.subr.mxu0 0.0
      %2897 = vmatpush2.msra.mxu0 0.0
      %2898 = vmatprep.subr.mxu0 0.0
      %2899 = vmatpush2.msra.mxu0 0.0
      %2900 = vmatprep.mubr.f32.mxu0 0.0
      %v2901 = vand.u32 %v2598, 4294901760
      %v2902 = vsub.f32 %v2598, %v2901
      %v2903 = vand.u32 %v2902, 4294901760
      %2904 = vmatmul.mubr.f32.gmra.mxu0 %v2903
      %v2905 = vpop.f32.mrf.mxu0
      %v2906 = vadd.f32 %v2831, %v2905
      %v2907 = vpop.f32.mrf.mxu0
      %2908 = vdwg.mxu0
      %2909 = vmatprep.subr.mxu0 0.0
      %2910 = vmatpush1.msra.mxu0 0.0
      %2911 = vmatprep.subr.mxu0 0.0
      %2912 = vmatpush1.msra.mxu0 0.0
      %2913 = vmatprep.subr.mxu0 0.0
      %2914 = vmatpush1.msra.mxu0 0.0
      %2915 = vmatprep.subr.mxu0 0.0
      %2916 = vmatpush1.msra.mxu0 0.0
      %2917 = vmatprep.subr.mxu0 0.0
      %2918 = vmatpush1.msra.mxu0 0.0
      %2919 = vmatprep.subr.mxu0 0.0
      %2920 = vmatpush1.msra.mxu0 0.0
      %2921 = vmatprep.subr.mxu0 0.0
      %2922 = vmatpush1.msra.mxu0 0.0
      %2923 = vmatprep.subr.mxu0 0.0
      %2924 = vmatpush1.msra.mxu0 0.0
      %2925 = vmatprep.subr.mxu0 0.0
      %2926 = vmatpush1.msra.mxu0 0.0
      %2927 = vmatprep.subr.mxu0 0.0
      %2928 = vmatpush1.msra.mxu0 0.0
      %2929 = vmatprep.subr.mxu0 0.0
      %2930 = vmatpush1.msra.mxu0 0.0
      %2931 = vmatprep.subr.mxu0 0.0
      %2932 = vmatpush1.msra.mxu0 0.0
      %2933 = vmatprep.subr.mxu0 0.0
      %2934 = vmatpush1.msra.mxu0 0.0
      %2935 = vmatprep.subr.mxu0 0.0
      %2936 = vmatpush1.msra.mxu0 0.0
      %2937 = vmatprep.subr.mxu0 0.0
      %v2938 = vand.u32 %v408, 4294901760
      %v2939 = vsub.f32 %v408, %v2938
      %v2940 = vand.u32 %v2939, 4294901760
      %2941 = vmatpush1.msra.mxu0 %v2940
      %2942 = vmatprep.subr.mxu0 0.0
      %v2943 = vand.u32 %v407, 4294901760
      %v2944 = vsub.f32 %v407, %v2943
      %v2945 = vand.u32 %v2944, 4294901760
      %2946 = vmatpush1.msra.mxu0 %v2945
      %2947 = vmatprep.subr.mxu0 0.0
      %2948 = vmatpush2.msra.mxu0 0.0
      %2949 = vmatprep.subr.mxu0 0.0
      %2950 = vmatpush2.msra.mxu0 0.0
      %2951 = vmatprep.subr.mxu0 0.0
      %2952 = vmatpush2.msra.mxu0 0.0
      %2953 = vmatprep.subr.mxu0 0.0
      %2954 = vmatpush2.msra.mxu0 0.0
      %2955 = vmatprep.subr.mxu0 0.0
      %2956 = vmatpush2.msra.mxu0 0.0
      %2957 = vmatprep.subr.mxu0 0.0
      %2958 = vmatpush2.msra.mxu0 0.0
      %2959 = vmatprep.subr.mxu0 0.0
      %2960 = vmatpush2.msra.mxu0 0.0
      %2961 = vmatprep.subr.mxu0 0.0
      %2962 = vmatpush2.msra.mxu0 0.0
      %2963 = vmatprep.subr.mxu0 0.0
      %2964 = vmatpush2.msra.mxu0 0.0
      %2965 = vmatprep.subr.mxu0 0.0
      %2966 = vmatpush2.msra.mxu0 0.0
      %2967 = vmatprep.subr.mxu0 0.0
      %2968 = vmatpush2.msra.mxu0 0.0
      %2969 = vmatprep.subr.mxu0 0.0
      %2970 = vmatpush2.msra.mxu0 0.0
      %2971 = vmatprep.subr.mxu0 0.0
      %2972 = vmatpush2.msra.mxu0 0.0
      %2973 = vmatprep.subr.mxu0 0.0
      %2974 = vmatpush2.msra.mxu0 0.0
      %2975 = vmatprep.subr.mxu0 0.0
      %2976 = vmatpush2.msra.mxu0 0.0
      %2977 = vmatprep.subr.mxu0 0.0
      %2978 = vmatpush2.msra.mxu0 0.0
      %2979 = vmatprep.mubr.f32.mxu0 0.0
      %v2980 = vand.u32 %v2598, 4294901760
      %2981 = vmatmul.mubr.f32.gmra.mxu0 %v2980
      %v2982 = vpop.f32.mrf.mxu0
      %v2983 = vadd.f32 %v2906, %v2982
      %v2984 = vpop.f32.mrf.mxu0
      %2985 = vdwg.mxu0
      %2986 = vmatprep.subr.mxu0 0.0
      %2987 = vmatpush1.msra.mxu0 0.0
      %2988 = vmatprep.subr.mxu0 0.0
      %2989 = vmatpush1.msra.mxu0 0.0
      %2990 = vmatprep.subr.mxu0 0.0
      %2991 = vmatpush1.msra.mxu0 0.0
      %2992 = vmatprep.subr.mxu0 0.0
      %2993 = vmatpush1.msra.mxu0 0.0
      %2994 = vmatprep.subr.mxu0 0.0
      %2995 = vmatpush1.msra.mxu0 0.0
      %2996 = vmatprep.subr.mxu0 0.0
      %2997 = vmatpush1.msra.mxu0 0.0
      %2998 = vmatprep.subr.mxu0 0.0
      %2999 = vmatpush1.msra.mxu0 0.0
      %3000 = vmatprep.subr.mxu0 0.0
      %3001 = vmatpush1.msra.mxu0 0.0
      %3002 = vmatprep.subr.mxu0 0.0
      %3003 = vmatpush1.msra.mxu0 0.0
      %3004 = vmatprep.subr.mxu0 0.0
      %3005 = vmatpush1.msra.mxu0 0.0
      %3006 = vmatprep.subr.mxu0 0.0
      %3007 = vmatpush1.msra.mxu0 0.0
      %3008 = vmatprep.subr.mxu0 0.0
      %3009 = vmatpush1.msra.mxu0 0.0
      %3010 = vmatprep.subr.mxu0 0.0
      %3011 = vmatpush1.msra.mxu0 0.0
      %3012 = vmatprep.subr.mxu0 0.0
      %3013 = vmatpush1.msra.mxu0 0.0
      %3014 = vmatprep.subr.mxu0 0.0
      %v3015 = vand.u32 %v408, 4294901760
      %3016 = vmatpush1.msra.mxu0 %v3015
      %3017 = vmatprep.subr.mxu0 0.0
      %v3018 = vand.u32 %v407, 4294901760
      %3019 = vmatpush1.msra.mxu0 %v3018
      %3020 = vmatprep.subr.mxu0 0.0
      %3021 = vmatpush2.msra.mxu0 0.0
      %3022 = vmatprep.subr.mxu0 0.0
      %3023 = vmatpush2.msra.mxu0 0.0
      %3024 = vmatprep.subr.mxu0 0.0
      %3025 = vmatpush2.msra.mxu0 0.0
      %3026 = vmatprep.subr.mxu0 0.0
      %3027 = vmatpush2.msra.mxu0 0.0
      %3028 = vmatprep.subr.mxu0 0.0
      %3029 = vmatpush2.msra.mxu0 0.0
      %3030 = vmatprep.subr.mxu0 0.0
      %3031 = vmatpush2.msra.mxu0 0.0
      %3032 = vmatprep.subr.mxu0 0.0
      %3033 = vmatpush2.msra.mxu0 0.0
      %3034 = vmatprep.subr.mxu0 0.0
      %3035 = vmatpush2.msra.mxu0 0.0
      %3036 = vmatprep.subr.mxu0 0.0
      %3037 = vmatpush2.msra.mxu0 0.0
      %3038 = vmatprep.subr.mxu0 0.0
      %3039 = vmatpush2.msra.mxu0 0.0
      %3040 = vmatprep.subr.mxu0 0.0
      %3041 = vmatpush2.msra.mxu0 0.0
      %3042 = vmatprep.subr.mxu0 0.0
      %3043 = vmatpush2.msra.mxu0 0.0
      %3044 = vmatprep.subr.mxu0 0.0
      %3045 = vmatpush2.msra.mxu0 0.0
      %3046 = vmatprep.subr.mxu0 0.0
      %3047 = vmatpush2.msra.mxu0 0.0
      %3048 = vmatprep.subr.mxu0 0.0
      %3049 = vmatpush2.msra.mxu0 0.0
      %3050 = vmatprep.subr.mxu0 0.0
      %3051 = vmatpush2.msra.mxu0 0.0
      %3052 = vmatprep.mubr.f32.mxu0 0.0
      %v3053 = vand.u32 %v2598, 4294901760
      %3054 = vmatmul.mubr.f32.gmra.mxu0 %v3053
      %v3055 = vpop.f32.mrf.mxu0
      %v3056 = vadd.f32 %v2983, %v3055
      %v3057 = vpop.f32.mrf.mxu0
      %3058 = vdwg.mxu0
      %3059 = vset.pattern.permute.xlu0 2
      %3060 = vperm.xlu0 %3059, %v346
      %v3061 = vpop.permute.xlu0 %3060
      %3062 = vset.pattern.permute.xlu0 2
      %3063 = vperm.xlu0 %3062, %v347
      %v3064 = vpop.permute.xlu0 %3063
      %3065 = vset.pattern.permute.xlu0 2
      %3066 = vperm.xlu0 %3065, %v348
      %v3067 = vpop.permute.xlu0 %3066
      %3068 = vset.pattern.permute.xlu0 2
      %3069 = vperm.xlu0 %3068, %v349
      %v3070 = vpop.permute.xlu0 %3069
      %3071 = vset.pattern.permute.xlu0 2
      %3072 = vperm.xlu0 %3071, %v350
      %v3073 = vpop.permute.xlu0 %3072
      %3074 = vset.pattern.permute.xlu0 2
      %3075 = vperm.xlu0 %3074, %v351
      %v3076 = vpop.permute.xlu0 %3075
      %3077 = vset.pattern.permute.xlu0 2
      %3078 = vperm.xlu0 %3077, %v352
      %v3079 = vpop.permute.xlu0 %3078
      %3080 = vset.pattern.permute.xlu0 2
      %3081 = vperm.xlu0 %3080, %v353
      %v3082 = vpop.permute.xlu0 %3081
      %v3083 = vlaneseq
      %v3084 = vshrl.u32 %v3083, 7
      %v3085 = vsub.s32 %v438, %v3084
      %v3086 = vrot.slane %v3061, %v3085
      %v3087 = vlaneseq
      %v3088 = vshrl.u32 %v3087, 7
      %v3089 = vsub.s32 %v443, %v3088
      %v3090 = vrot.slane %v3064, %v3089
      %v3091 = vsel %vm448, %v3090, %v3086
      %v3092 = vlaneseq
      %v3093 = vshrl.u32 %v3092, 7
      %v3094 = vsub.s32 %v438, %v3093
      %v3095 = vrot.slane %v3067, %v3094
      %v3096 = vlaneseq
      %v3097 = vshrl.u32 %v3096, 7
      %v3098 = vsub.s32 %v443, %v3097
      %v3099 = vrot.slane %v3070, %v3098
      %v3100 = vsel %vm448, %v3099, %v3095
      %v3101 = vlaneseq
      %v3102 = vshrl.u32 %v3101, 7
      %v3103 = vsub.s32 %v438, %v3102
      %v3104 = vrot.slane %v3073, %v3103
      %v3105 = vlaneseq
      %v3106 = vshrl.u32 %v3105, 7
      %v3107 = vsub.s32 %v443, %v3106
      %v3108 = vrot.slane %v3076, %v3107
      %v3109 = vsel %vm448, %v3108, %v3104
      %v3110 = vlaneseq
      %v3111 = vshrl.u32 %v3110, 7
      %v3112 = vsub.s32 %v438, %v3111
      %v3113 = vrot.slane %v3079, %v3112
      %v3114 = vlaneseq
      %v3115 = vshrl.u32 %v3114, 7
      %v3116 = vsub.s32 %v443, %v3115
      %v3117 = vrot.slane %v3082, %v3116
      %v3118 = vsel %vm448, %v3117, %v3113
      %v3119 = vsel %vm477, %v3100, %v3091
      %v3120 = vsel %vm479, %v3109, %v3119
      %v3121 = vsel %vm481, %v3118, %v3120
      %v3122 = vsel %vm483, %v3121, 0
      %3124 = vmatprep.subr.mxu0 0.0
      %3125 = vmatpush1.msra.mxu0 0.0
      %3126 = vmatprep.subr.mxu0 0.0
      %3127 = vmatpush1.msra.mxu0 0.0
      %3128 = vmatprep.subr.mxu0 0.0
      %3129 = vmatpush1.msra.mxu0 0.0
      %3130 = vmatprep.subr.mxu0 0.0
      %3131 = vmatpush1.msra.mxu0 0.0
      %3132 = vmatprep.subr.mxu0 0.0
      %3133 = vmatpush1.msra.mxu0 0.0
      %3134 = vmatprep.subr.mxu0 0.0
      %3135 = vmatpush1.msra.mxu0 0.0
      %3136 = vmatprep.subr.mxu0 0.0
      %3137 = vmatpush1.msra.mxu0 0.0
      %3138 = vmatprep.subr.mxu0 0.0
      %3139 = vmatpush1.msra.mxu0 0.0
      %3140 = vmatprep.subr.mxu0 0.0
      %3141 = vmatpush1.msra.mxu0 0.0
      %3142 = vmatprep.subr.mxu0 0.0
      %3143 = vmatpush1.msra.mxu0 0.0
      %3144 = vmatprep.subr.mxu0 0.0
      %3145 = vmatpush1.msra.mxu0 0.0
      %3146 = vmatprep.subr.mxu0 0.0
      %3147 = vmatpush1.msra.mxu0 0.0
      %3148 = vmatprep.subr.mxu0 0.0
      %3149 = vmatpush1.msra.mxu0 0.0
      %3150 = vmatprep.subr.mxu0 0.0
      %3151 = vmatpush1.msra.mxu0 0.0
      %3152 = vmatprep.subr.mxu0 0.0
      %v3153 = vand.u32 %v406, 4294901760
      %3154 = vmatpush1.msra.mxu0 %v3153
      %3155 = vmatprep.subr.mxu0 0.0
      %v3156 = vand.u32 %v405, 4294901760
      %3157 = vmatpush1.msra.mxu0 %v3156
      %3158 = vmatprep.subr.mxu0 0.0
      %3159 = vmatpush2.msra.mxu0 0.0
      %3160 = vmatprep.subr.mxu0 0.0
      %3161 = vmatpush2.msra.mxu0 0.0
      %3162 = vmatprep.subr.mxu0 0.0
      %3163 = vmatpush2.msra.mxu0 0.0
      %3164 = vmatprep.subr.mxu0 0.0
      %3165 = vmatpush2.msra.mxu0 0.0
      %3166 = vmatprep.subr.mxu0 0.0
      %3167 = vmatpush2.msra.mxu0 0.0
      %3168 = vmatprep.subr.mxu0 0.0
      %3169 = vmatpush2.msra.mxu0 0.0
      %3170 = vmatprep.subr.mxu0 0.0
      %3171 = vmatpush2.msra.mxu0 0.0
      %3172 = vmatprep.subr.mxu0 0.0
      %3173 = vmatpush2.msra.mxu0 0.0
      %3174 = vmatprep.subr.mxu0 0.0
      %3175 = vmatpush2.msra.mxu0 0.0
      %3176 = vmatprep.subr.mxu0 0.0
      %3177 = vmatpush2.msra.mxu0 0.0
      %3178 = vmatprep.subr.mxu0 0.0
      %3179 = vmatpush2.msra.mxu0 0.0
      %3180 = vmatprep.subr.mxu0 0.0
      %3181 = vmatpush2.msra.mxu0 0.0
      %3182 = vmatprep.subr.mxu0 0.0
      %3183 = vmatpush2.msra.mxu0 0.0
      %3184 = vmatprep.subr.mxu0 0.0
      %3185 = vmatpush2.msra.mxu0 0.0
      %3186 = vmatprep.subr.mxu0 0.0
      %3187 = vmatpush2.msra.mxu0 0.0
      %3188 = vmatprep.subr.mxu0 0.0
      %3189 = vmatpush2.msra.mxu0 0.0
      %3190 = vmatprep.mubr.f32.mxu0 0.0
      %v3191 = vand.u32 %v3122, 4294901760
      %v3192 = vsub.f32 %v3122, %v3191
      %v3193 = vand.u32 %v3192, 4294901760
      %v3194 = vsub.f32 %v3192, %v3193
      %v3195 = vand.u32 %v3194, 4294901760
      %3196 = vmatmul.mubr.f32.gmra.mxu0 %v3195
      %v3197 = vpop.f32.mrf.mxu0
      %v3198 = vadd.f32 %v3056, %v3197
      %v3199 = vpop.f32.mrf.mxu0
      %3200 = vdwg.mxu0
      %3201 = vmatprep.subr.mxu0 0.0
      %3202 = vmatpush1.msra.mxu0 0.0
      %3203 = vmatprep.subr.mxu0 0.0
      %3204 = vmatpush1.msra.mxu0 0.0
      %3205 = vmatprep.subr.mxu0 0.0
      %3206 = vmatpush1.msra.mxu0 0.0
      %3207 = vmatprep.subr.mxu0 0.0
      %3208 = vmatpush1.msra.mxu0 0.0
      %3209 = vmatprep.subr.mxu0 0.0
      %3210 = vmatpush1.msra.mxu0 0.0
      %3211 = vmatprep.subr.mxu0 0.0
      %3212 = vmatpush1.msra.mxu0 0.0
      %3213 = vmatprep.subr.mxu0 0.0
      %3214 = vmatpush1.msra.mxu0 0.0
      %3215 = vmatprep.subr.mxu0 0.0
      %3216 = vmatpush1.msra.mxu0 0.0
      %3217 = vmatprep.subr.mxu0 0.0
      %3218 = vmatpush1.msra.mxu0 0.0
      %3219 = vmatprep.subr.mxu0 0.0
      %3220 = vmatpush1.msra.mxu0 0.0
      %3221 = vmatprep.subr.mxu0 0.0
      %3222 = vmatpush1.msra.mxu0 0.0
      %3223 = vmatprep.subr.mxu0 0.0
      %3224 = vmatpush1.msra.mxu0 0.0
      %3225 = vmatprep.subr.mxu0 0.0
      %3226 = vmatpush1.msra.mxu0 0.0
      %3227 = vmatprep.subr.mxu0 0.0
      %3228 = vmatpush1.msra.mxu0 0.0
      %3229 = vmatprep.subr.mxu0 0.0
      %v3230 = vand.u32 %v406, 4294901760
      %v3231 = vsub.f32 %v406, %v3230
      %v3232 = vand.u32 %v3231, 4294901760
      %v3233 = vsub.f32 %v3231, %v3232
      %v3234 = vand.u32 %v3233, 4294901760
      %3235 = vmatpush1.msra.mxu0 %v3234
      %3236 = vmatprep.subr.mxu0 0.0
      %v3237 = vand.u32 %v405, 4294901760
      %v3238 = vsub.f32 %v405, %v3237
      %v3239 = vand.u32 %v3238, 4294901760
      %v3240 = vsub.f32 %v3238, %v3239
      %v3241 = vand.u32 %v3240, 4294901760
      %3242 = vmatpush1.msra.mxu0 %v3241
      %3243 = vmatprep.subr.mxu0 0.0
      %3244 = vmatpush2.msra.mxu0 0.0
      %3245 = vmatprep.subr.mxu0 0.0
      %3246 = vmatpush2.msra.mxu0 0.0
      %3247 = vmatprep.subr.mxu0 0.0
      %3248 = vmatpush2.msra.mxu0 0.0
      %3249 = vmatprep.subr.mxu0 0.0
      %3250 = vmatpush2.msra.mxu0 0.0
      %3251 = vmatprep.subr.mxu0 0.0
      %3252 = vmatpush2.msra.mxu0 0.0
      %3253 = vmatprep.subr.mxu0 0.0
      %3254 = vmatpush2.msra.mxu0 0.0
      %3255 = vmatprep.subr.mxu0 0.0
      %3256 = vmatpush2.msra.mxu0 0.0
      %3257 = vmatprep.subr.mxu0 0.0
      %3258 = vmatpush2.msra.mxu0 0.0
      %3259 = vmatprep.subr.mxu0 0.0
      %3260 = vmatpush2.msra.mxu0 0.0
      %3261 = vmatprep.subr.mxu0 0.0
      %3262 = vmatpush2.msra.mxu0 0.0
      %3263 = vmatprep.subr.mxu0 0.0
      %3264 = vmatpush2.msra.mxu0 0.0
      %3265 = vmatprep.subr.mxu0 0.0
      %3266 = vmatpush2.msra.mxu0 0.0
      %3267 = vmatprep.subr.mxu0 0.0
      %3268 = vmatpush2.msra.mxu0 0.0
      %3269 = vmatprep.subr.mxu0 0.0
      %3270 = vmatpush2.msra.mxu0 0.0
      %3271 = vmatprep.subr.mxu0 0.0
      %3272 = vmatpush2.msra.mxu0 0.0
      %3273 = vmatprep.subr.mxu0 0.0
      %3274 = vmatpush2.msra.mxu0 0.0
      %3275 = vmatprep.mubr.f32.mxu0 0.0
      %v3276 = vand.u32 %v3122, 4294901760
      %3277 = vmatmul.mubr.f32.gmra.mxu0 %v3276
      %v3278 = vpop.f32.mrf.mxu0
      %v3279 = vadd.f32 %v3198, %v3278
      %v3280 = vpop.f32.mrf.mxu0
      %3281 = vdwg.mxu0
      %3282 = vmatprep.subr.mxu0 0.0
      %3283 = vmatpush1.msra.mxu0 0.0
      %3284 = vmatprep.subr.mxu0 0.0
      %3285 = vmatpush1.msra.mxu0 0.0
      %3286 = vmatprep.subr.mxu0 0.0
      %3287 = vmatpush1.msra.mxu0 0.0
      %3288 = vmatprep.subr.mxu0 0.0
      %3289 = vmatpush1.msra.mxu0 0.0
      %3290 = vmatprep.subr.mxu0 0.0
      %3291 = vmatpush1.msra.mxu0 0.0
      %3292 = vmatprep.subr.mxu0 0.0
      %3293 = vmatpush1.msra.mxu0 0.0
      %3294 = vmatprep.subr.mxu0 0.0
      %3295 = vmatpush1.msra.mxu0 0.0
      %3296 = vmatprep.subr.mxu0 0.0
      %3297 = vmatpush1.msra.mxu0 0.0
      %3298 = vmatprep.subr.mxu0 0.0
      %3299 = vmatpush1.msra.mxu0 0.0
      %3300 = vmatprep.subr.mxu0 0.0
      %3301 = vmatpush1.msra.mxu0 0.0
      %3302 = vmatprep.subr.mxu0 0.0
      %3303 = vmatpush1.msra.mxu0 0.0
      %3304 = vmatprep.subr.mxu0 0.0
      %3305 = vmatpush1.msra.mxu0 0.0
      %3306 = vmatprep.subr.mxu0 0.0
      %3307 = vmatpush1.msra.mxu0 0.0
      %3308 = vmatprep.subr.mxu0 0.0
      %3309 = vmatpush1.msra.mxu0 0.0
      %3310 = vmatprep.subr.mxu0 0.0
      %v3311 = vand.u32 %v406, 4294901760
      %v3312 = vsub.f32 %v406, %v3311
      %3313 = vmatpush1.msra.mxu0 %v3312
      %3314 = vmatprep.subr.mxu0 0.0
      %v3315 = vand.u32 %v405, 4294901760
      %v3316 = vsub.f32 %v405, %v3315
      %3317 = vmatpush1.msra.mxu0 %v3316
      %3318 = vmatprep.subr.mxu0 0.0
      %3319 = vmatpush2.msra.mxu0 0.0
      %3320 = vmatprep.subr.mxu0 0.0
      %3321 = vmatpush2.msra.mxu0 0.0
      %3322 = vmatprep.subr.mxu0 0.0
      %3323 = vmatpush2.msra.mxu0 0.0
      %3324 = vmatprep.subr.mxu0 0.0
      %3325 = vmatpush2.msra.mxu0 0.0
      %3326 = vmatprep.subr.mxu0 0.0
      %3327 = vmatpush2.msra.mxu0 0.0
      %3328 = vmatprep.subr.mxu0 0.0
      %3329 = vmatpush2.msra.mxu0 0.0
      %3330 = vmatprep.subr.mxu0 0.0
      %3331 = vmatpush2.msra.mxu0 0.0
      %3332 = vmatprep.subr.mxu0 0.0
      %3333 = vmatpush2.msra.mxu0 0.0
      %3334 = vmatprep.subr.mxu0 0.0
      %3335 = vmatpush2.msra.mxu0 0.0
      %3336 = vmatprep.subr.mxu0 0.0
      %3337 = vmatpush2.msra.mxu0 0.0
      %3338 = vmatprep.subr.mxu0 0.0
      %3339 = vmatpush2.msra.mxu0 0.0
      %3340 = vmatprep.subr.mxu0 0.0
      %3341 = vmatpush2.msra.mxu0 0.0
      %3342 = vmatprep.subr.mxu0 0.0
      %3343 = vmatpush2.msra.mxu0 0.0
      %3344 = vmatprep.subr.mxu0 0.0
      %3345 = vmatpush2.msra.mxu0 0.0
      %3346 = vmatprep.subr.mxu0 0.0
      %3347 = vmatpush2.msra.mxu0 0.0
      %3348 = vmatprep.subr.mxu0 0.0
      %3349 = vmatpush2.msra.mxu0 0.0
      %3350 = vmatprep.mubr.f32.mxu0 0.0
      %v3351 = vand.u32 %v3122, 4294901760
      %v3352 = vsub.f32 %v3122, %v3351
      %3353 = vmatmul.mubr.f32.gmra.mxu0 %v3352
      %v3354 = vpop.f32.mrf.mxu0
      %v3355 = vadd.f32 %v3279, %v3354
      %v3356 = vpop.f32.mrf.mxu0
      %3357 = vdwg.mxu0
      %3358 = vmatprep.subr.mxu0 0.0
      %3359 = vmatpush1.msra.mxu0 0.0
      %3360 = vmatprep.subr.mxu0 0.0
      %3361 = vmatpush1.msra.mxu0 0.0
      %3362 = vmatprep.subr.mxu0 0.0
      %3363 = vmatpush1.msra.mxu0 0.0
      %3364 = vmatprep.subr.mxu0 0.0
      %3365 = vmatpush1.msra.mxu0 0.0
      %3366 = vmatprep.subr.mxu0 0.0
      %3367 = vmatpush1.msra.mxu0 0.0
      %3368 = vmatprep.subr.mxu0 0.0
      %3369 = vmatpush1.msra.mxu0 0.0
      %3370 = vmatprep.subr.mxu0 0.0
      %3371 = vmatpush1.msra.mxu0 0.0
      %3372 = vmatprep.subr.mxu0 0.0
      %3373 = vmatpush1.msra.mxu0 0.0
      %3374 = vmatprep.subr.mxu0 0.0
      %3375 = vmatpush1.msra.mxu0 0.0
      %3376 = vmatprep.subr.mxu0 0.0
      %3377 = vmatpush1.msra.mxu0 0.0
      %3378 = vmatprep.subr.mxu0 0.0
      %3379 = vmatpush1.msra.mxu0 0.0
      %3380 = vmatprep.subr.mxu0 0.0
      %3381 = vmatpush1.msra.mxu0 0.0
      %3382 = vmatprep.subr.mxu0 0.0
      %3383 = vmatpush1.msra.mxu0 0.0
      %3384 = vmatprep.subr.mxu0 0.0
      %3385 = vmatpush1.msra.mxu0 0.0
      %3386 = vmatprep.subr.mxu0 0.0
      %v3387 = vand.u32 %v406, 4294901760
      %3388 = vmatpush1.msra.mxu0 %v3387
      %3389 = vmatprep.subr.mxu0 0.0
      %v3390 = vand.u32 %v405, 4294901760
      %3391 = vmatpush1.msra.mxu0 %v3390
      %3392 = vmatprep.subr.mxu0 0.0
      %3393 = vmatpush2.msra.mxu0 0.0
      %3394 = vmatprep.subr.mxu0 0.0
      %3395 = vmatpush2.msra.mxu0 0.0
      %3396 = vmatprep.subr.mxu0 0.0
      %3397 = vmatpush2.msra.mxu0 0.0
      %3398 = vmatprep.subr.mxu0 0.0
      %3399 = vmatpush2.msra.mxu0 0.0
      %3400 = vmatprep.subr.mxu0 0.0
      %3401 = vmatpush2.msra.mxu0 0.0
      %3402 = vmatprep.subr.mxu0 0.0
      %3403 = vmatpush2.msra.mxu0 0.0
      %3404 = vmatprep.subr.mxu0 0.0
      %3405 = vmatpush2.msra.mxu0 0.0
      %3406 = vmatprep.subr.mxu0 0.0
      %3407 = vmatpush2.msra.mxu0 0.0
      %3408 = vmatprep.subr.mxu0 0.0
      %3409 = vmatpush2.msra.mxu0 0.0
      %3410 = vmatprep.subr.mxu0 0.0
      %3411 = vmatpush2.msra.mxu0 0.0
      %3412 = vmatprep.subr.mxu0 0.0
      %3413 = vmatpush2.msra.mxu0 0.0
      %3414 = vmatprep.subr.mxu0 0.0
      %3415 = vmatpush2.msra.mxu0 0.0
      %3416 = vmatprep.subr.mxu0 0.0
      %3417 = vmatpush2.msra.mxu0 0.0
      %3418 = vmatprep.subr.mxu0 0.0
      %3419 = vmatpush2.msra.mxu0 0.0
      %3420 = vmatprep.subr.mxu0 0.0
      %3421 = vmatpush2.msra.mxu0 0.0
      %3422 = vmatprep.subr.mxu0 0.0
      %3423 = vmatpush2.msra.mxu0 0.0
      %3424 = vmatprep.mubr.f32.mxu0 0.0
      %v3425 = vand.u32 %v3122, 4294901760
      %v3426 = vsub.f32 %v3122, %v3425
      %v3427 = vand.u32 %v3426, 4294901760
      %3428 = vmatmul.mubr.f32.gmra.mxu0 %v3427
      %v3429 = vpop.f32.mrf.mxu0
      %v3430 = vadd.f32 %v3355, %v3429
      %v3431 = vpop.f32.mrf.mxu0
      %3432 = vdwg.mxu0
      %3433 = vmatprep.subr.mxu0 0.0
      %3434 = vmatpush1.msra.mxu0 0.0
      %3435 = vmatprep.subr.mxu0 0.0
      %3436 = vmatpush1.msra.mxu0 0.0
      %3437 = vmatprep.subr.mxu0 0.0
      %3438 = vmatpush1.msra.mxu0 0.0
      %3439 = vmatprep.subr.mxu0 0.0
      %3440 = vmatpush1.msra.mxu0 0.0
      %3441 = vmatprep.subr.mxu0 0.0
      %3442 = vmatpush1.msra.mxu0 0.0
      %3443 = vmatprep.subr.mxu0 0.0
      %3444 = vmatpush1.msra.mxu0 0.0
      %3445 = vmatprep.subr.mxu0 0.0
      %3446 = vmatpush1.msra.mxu0 0.0
      %3447 = vmatprep.subr.mxu0 0.0
      %3448 = vmatpush1.msra.mxu0 0.0
      %3449 = vmatprep.subr.mxu0 0.0
      %3450 = vmatpush1.msra.mxu0 0.0
      %3451 = vmatprep.subr.mxu0 0.0
      %3452 = vmatpush1.msra.mxu0 0.0
      %3453 = vmatprep.subr.mxu0 0.0
      %3454 = vmatpush1.msra.mxu0 0.0
      %3455 = vmatprep.subr.mxu0 0.0
      %3456 = vmatpush1.msra.mxu0 0.0
      %3457 = vmatprep.subr.mxu0 0.0
      %3458 = vmatpush1.msra.mxu0 0.0
      %3459 = vmatprep.subr.mxu0 0.0
      %3460 = vmatpush1.msra.mxu0 0.0
      %3461 = vmatprep.subr.mxu0 0.0
      %v3462 = vand.u32 %v406, 4294901760
      %v3463 = vsub.f32 %v406, %v3462
      %v3464 = vand.u32 %v3463, 4294901760
      %3465 = vmatpush1.msra.mxu0 %v3464
      %3466 = vmatprep.subr.mxu0 0.0
      %v3467 = vand.u32 %v405, 4294901760
      %v3468 = vsub.f32 %v405, %v3467
      %v3469 = vand.u32 %v3468, 4294901760
      %3470 = vmatpush1.msra.mxu0 %v3469
      %3471 = vmatprep.subr.mxu0 0.0
      %3472 = vmatpush2.msra.mxu0 0.0
      %3473 = vmatprep.subr.mxu0 0.0
      %3474 = vmatpush2.msra.mxu0 0.0
      %3475 = vmatprep.subr.mxu0 0.0
      %3476 = vmatpush2.msra.mxu0 0.0
      %3477 = vmatprep.subr.mxu0 0.0
      %3478 = vmatpush2.msra.mxu0 0.0
      %3479 = vmatprep.subr.mxu0 0.0
      %3480 = vmatpush2.msra.mxu0 0.0
      %3481 = vmatprep.subr.mxu0 0.0
      %3482 = vmatpush2.msra.mxu0 0.0
      %3483 = vmatprep.subr.mxu0 0.0
      %3484 = vmatpush2.msra.mxu0 0.0
      %3485 = vmatprep.subr.mxu0 0.0
      %3486 = vmatpush2.msra.mxu0 0.0
      %3487 = vmatprep.subr.mxu0 0.0
      %3488 = vmatpush2.msra.mxu0 0.0
      %3489 = vmatprep.subr.mxu0 0.0
      %3490 = vmatpush2.msra.mxu0 0.0
      %3491 = vmatprep.subr.mxu0 0.0
      %3492 = vmatpush2.msra.mxu0 0.0
      %3493 = vmatprep.subr.mxu0 0.0
      %3494 = vmatpush2.msra.mxu0 0.0
      %3495 = vmatprep.subr.mxu0 0.0
      %3496 = vmatpush2.msra.mxu0 0.0
      %3497 = vmatprep.subr.mxu0 0.0
      %3498 = vmatpush2.msra.mxu0 0.0
      %3499 = vmatprep.subr.mxu0 0.0
      %3500 = vmatpush2.msra.mxu0 0.0
      %3501 = vmatprep.subr.mxu0 0.0
      %3502 = vmatpush2.msra.mxu0 0.0
      %3503 = vmatprep.mubr.f32.mxu0 0.0
      %v3504 = vand.u32 %v3122, 4294901760
      %3505 = vmatmul.mubr.f32.gmra.mxu0 %v3504
      %v3506 = vpop.f32.mrf.mxu0
      %v3507 = vadd.f32 %v3430, %v3506
      %v3508 = vpop.f32.mrf.mxu0
      %3509 = vdwg.mxu0
      %3510 = vmatprep.subr.mxu0 0.0
      %3511 = vmatpush1.msra.mxu0 0.0
      %3512 = vmatprep.subr.mxu0 0.0
      %3513 = vmatpush1.msra.mxu0 0.0
      %3514 = vmatprep.subr.mxu0 0.0
      %3515 = vmatpush1.msra.mxu0 0.0
      %3516 = vmatprep.subr.mxu0 0.0
      %3517 = vmatpush1.msra.mxu0 0.0
      %3518 = vmatprep.subr.mxu0 0.0
      %3519 = vmatpush1.msra.mxu0 0.0
      %3520 = vmatprep.subr.mxu0 0.0
      %3521 = vmatpush1.msra.mxu0 0.0
      %3522 = vmatprep.subr.mxu0 0.0
      %3523 = vmatpush1.msra.mxu0 0.0
      %3524 = vmatprep.subr.mxu0 0.0
      %3525 = vmatpush1.msra.mxu0 0.0
      %3526 = vmatprep.subr.mxu0 0.0
      %3527 = vmatpush1.msra.mxu0 0.0
      %3528 = vmatprep.subr.mxu0 0.0
      %3529 = vmatpush1.msra.mxu0 0.0
      %3530 = vmatprep.subr.mxu0 0.0
      %3531 = vmatpush1.msra.mxu0 0.0
      %3532 = vmatprep.subr.mxu0 0.0
      %3533 = vmatpush1.msra.mxu0 0.0
      %3534 = vmatprep.subr.mxu0 0.0
      %3535 = vmatpush1.msra.mxu0 0.0
      %3536 = vmatprep.subr.mxu0 0.0
      %3537 = vmatpush1.msra.mxu0 0.0
      %3538 = vmatprep.subr.mxu0 0.0
      %v3539 = vand.u32 %v406, 4294901760
      %3540 = vmatpush1.msra.mxu0 %v3539
      %3541 = vmatprep.subr.mxu0 0.0
      %v3542 = vand.u32 %v405, 4294901760
      %3543 = vmatpush1.msra.mxu0 %v3542
      %3544 = vmatprep.subr.mxu0 0.0
      %3545 = vmatpush2.msra.mxu0 0.0
      %3546 = vmatprep.subr.mxu0 0.0
      %3547 = vmatpush2.msra.mxu0 0.0
      %3548 = vmatprep.subr.mxu0 0.0
      %3549 = vmatpush2.msra.mxu0 0.0
      %3550 = vmatprep.subr.mxu0 0.0
      %3551 = vmatpush2.msra.mxu0 0.0
      %3552 = vmatprep.subr.mxu0 0.0
      %3553 = vmatpush2.msra.mxu0 0.0
      %3554 = vmatprep.subr.mxu0 0.0
      %3555 = vmatpush2.msra.mxu0 0.0
      %3556 = vmatprep.subr.mxu0 0.0
      %3557 = vmatpush2.msra.mxu0 0.0
      %3558 = vmatprep.subr.mxu0 0.0
      %3559 = vmatpush2.msra.mxu0 0.0
      %3560 = vmatprep.subr.mxu0 0.0
      %3561 = vmatpush2.msra.mxu0 0.0
      %3562 = vmatprep.subr.mxu0 0.0
      %3563 = vmatpush2.msra.mxu0 0.0
      %3564 = vmatprep.subr.mxu0 0.0
      %3565 = vmatpush2.msra.mxu0 0.0
      %3566 = vmatprep.subr.mxu0 0.0
      %3567 = vmatpush2.msra.mxu0 0.0
      %3568 = vmatprep.subr.mxu0 0.0
      %3569 = vmatpush2.msra.mxu0 0.0
      %3570 = vmatprep.subr.mxu0 0.0
      %3571 = vmatpush2.msra.mxu0 0.0
      %3572 = vmatprep.subr.mxu0 0.0
      %3573 = vmatpush2.msra.mxu0 0.0
      %3574 = vmatprep.subr.mxu0 0.0
      %3575 = vmatpush2.msra.mxu0 0.0
      %3576 = vmatprep.mubr.f32.mxu0 0.0
      %v3577 = vand.u32 %v3122, 4294901760
      %3578 = vmatmul.mubr.f32.gmra.mxu0 %v3577
      %v3579 = vpop.f32.mrf.mxu0
      %v3580 = vadd.f32 %v3507, %v3579
      %v3581 = vpop.f32.mrf.mxu0
      %3582 = vdwg.mxu0
      %3583 = vrot.lane.b32.xlu0 %v404, 127
      %v3584 = vpop.permute.xlu0 %3583
      %3585 = vrot.lane.b32.xlu0 %v401, 127
      %v3586 = vpop.permute.xlu0 %3585
      %vm3587 = vcmask 1039360
      %v3588 = vsel %vm3587, %v3584, %v3586
      %v3590 = vmul.f32 %v3580, %v3588
      %v3591 = vadd.f32 %v2534, %v3590
      %3592 = vset.pattern.permute.xlu0 3
      %3593 = vperm.xlu0 %3592, %v367
      %v3594 = vpop.permute.xlu0 %3593
      %3595 = vset.pattern.permute.xlu0 3
      %3596 = vperm.xlu0 %3595, %v387
      %v3597 = vpop.permute.xlu0 %3596
      %3598 = vset.pattern.permute.xlu0 3
      %3599 = vperm.xlu0 %3598, %v370
      %v3600 = vpop.permute.xlu0 %3599
      %3601 = vset.pattern.permute.xlu0 3
      %3602 = vperm.xlu0 %3601, %v388
      %v3603 = vpop.permute.xlu0 %3602
      %3604 = vset.pattern.permute.xlu0 3
      %3605 = vperm.xlu0 %3604, %v373
      %v3606 = vpop.permute.xlu0 %3605
      %3607 = vset.pattern.permute.xlu0 3
      %3608 = vperm.xlu0 %3607, %v389
      %v3609 = vpop.permute.xlu0 %3608
      %3610 = vset.pattern.permute.xlu0 3
      %3611 = vperm.xlu0 %3610, %v376
      %v3612 = vpop.permute.xlu0 %3611
      %3613 = vset.pattern.permute.xlu0 3
      %3614 = vperm.xlu0 %3613, %v390
      %v3615 = vpop.permute.xlu0 %3614
      %v3616 = vlaneseq
      %v3617 = vshrl.u32 %v3616, 7
      %v3618 = vsub.s32 %v438, %v3617
      %v3619 = vrot.slane %v3594, %v3618
      %v3620 = vlaneseq
      %v3621 = vshrl.u32 %v3620, 7
      %v3622 = vsub.s32 %v443, %v3621
      %v3623 = vrot.slane %v3597, %v3622
      %v3624 = vsel %vm448, %v3623, %v3619
      %v3625 = vlaneseq
      %v3626 = vshrl.u32 %v3625, 7
      %v3627 = vsub.s32 %v438, %v3626
      %v3628 = vrot.slane %v3600, %v3627
      %v3629 = vlaneseq
      %v3630 = vshrl.u32 %v3629, 7
      %v3631 = vsub.s32 %v443, %v3630
      %v3632 = vrot.slane %v3603, %v3631
      %v3633 = vsel %vm448, %v3632, %v3628
      %v3634 = vlaneseq
      %v3635 = vshrl.u32 %v3634, 7
      %v3636 = vsub.s32 %v438, %v3635
      %v3637 = vrot.slane %v3606, %v3636
      %v3638 = vlaneseq
      %v3639 = vshrl.u32 %v3638, 7
      %v3640 = vsub.s32 %v443, %v3639
      %v3641 = vrot.slane %v3609, %v3640
      %v3642 = vsel %vm448, %v3641, %v3637
      %v3643 = vlaneseq
      %v3644 = vshrl.u32 %v3643, 7
      %v3645 = vsub.s32 %v438, %v3644
      %v3646 = vrot.slane %v3612, %v3645
      %v3647 = vlaneseq
      %v3648 = vshrl.u32 %v3647, 7
      %v3649 = vsub.s32 %v443, %v3648
      %v3650 = vrot.slane %v3615, %v3649
      %v3651 = vsel %vm448, %v3650, %v3646
      %v3652 = vsel %vm477, %v3633, %v3624
      %v3653 = vsel %vm479, %v3642, %v3652
      %v3654 = vsel %vm481, %v3651, %v3653
      %v3655 = vsel %vm483, %v3654, 0
      %3657 = vmatprep.subr.mxu0 0.0
      %3658 = vmatpush1.msra.mxu0 0.0
      %3659 = vmatprep.subr.mxu0 0.0
      %3660 = vmatpush1.msra.mxu0 0.0
      %3661 = vmatprep.subr.mxu0 0.0
      %3662 = vmatpush1.msra.mxu0 0.0
      %3663 = vmatprep.subr.mxu0 0.0
      %3664 = vmatpush1.msra.mxu0 0.0
      %3665 = vmatprep.subr.mxu0 0.0
      %3666 = vmatpush1.msra.mxu0 0.0
      %3667 = vmatprep.subr.mxu0 0.0
      %3668 = vmatpush1.msra.mxu0 0.0
      %3669 = vmatprep.subr.mxu0 0.0
      %3670 = vmatpush1.msra.mxu0 0.0
      %3671 = vmatprep.subr.mxu0 0.0
      %3672 = vmatpush1.msra.mxu0 0.0
      %3673 = vmatprep.subr.mxu0 0.0
      %3674 = vmatpush1.msra.mxu0 0.0
      %3675 = vmatprep.subr.mxu0 0.0
      %3676 = vmatpush1.msra.mxu0 0.0
      %3677 = vmatprep.subr.mxu0 0.0
      %3678 = vmatpush1.msra.mxu0 0.0
      %3679 = vmatprep.subr.mxu0 0.0
      %3680 = vmatpush1.msra.mxu0 0.0
      %3681 = vmatprep.subr.mxu0 0.0
      %3682 = vmatpush1.msra.mxu0 0.0
      %3683 = vmatprep.subr.mxu0 0.0
      %3684 = vmatpush1.msra.mxu0 0.0
      %3685 = vmatprep.subr.mxu0 0.0
      %v3686 = vand.u32 %v408, 4294901760
      %3687 = vmatpush1.msra.mxu0 %v3686
      %3688 = vmatprep.subr.mxu0 0.0
      %v3689 = vand.u32 %v407, 4294901760
      %3690 = vmatpush1.msra.mxu0 %v3689
      %3691 = vmatprep.subr.mxu0 0.0
      %3692 = vmatpush2.msra.mxu0 0.0
      %3693 = vmatprep.subr.mxu0 0.0
      %3694 = vmatpush2.msra.mxu0 0.0
      %3695 = vmatprep.subr.mxu0 0.0
      %3696 = vmatpush2.msra.mxu0 0.0
      %3697 = vmatprep.subr.mxu0 0.0
      %3698 = vmatpush2.msra.mxu0 0.0
      %3699 = vmatprep.subr.mxu0 0.0
      %3700 = vmatpush2.msra.mxu0 0.0
      %3701 = vmatprep.subr.mxu0 0.0
      %3702 = vmatpush2.msra.mxu0 0.0
      %3703 = vmatprep.subr.mxu0 0.0
      %3704 = vmatpush2.msra.mxu0 0.0
      %3705 = vmatprep.subr.mxu0 0.0
      %3706 = vmatpush2.msra.mxu0 0.0
      %3707 = vmatprep.subr.mxu0 0.0
      %3708 = vmatpush2.msra.mxu0 0.0
      %3709 = vmatprep.subr.mxu0 0.0
      %3710 = vmatpush2.msra.mxu0 0.0
      %3711 = vmatprep.subr.mxu0 0.0
      %3712 = vmatpush2.msra.mxu0 0.0
      %3713 = vmatprep.subr.mxu0 0.0
      %3714 = vmatpush2.msra.mxu0 0.0
      %3715 = vmatprep.subr.mxu0 0.0
      %3716 = vmatpush2.msra.mxu0 0.0
      %3717 = vmatprep.subr.mxu0 0.0
      %3718 = vmatpush2.msra.mxu0 0.0
      %3719 = vmatprep.subr.mxu0 0.0
      %3720 = vmatpush2.msra.mxu0 0.0
      %3721 = vmatprep.subr.mxu0 0.0
      %3722 = vmatpush2.msra.mxu0 0.0
      %3723 = vmatprep.mubr.f32.mxu0 0.0
      %v3724 = vand.u32 %v3655, 4294901760
      %v3725 = vsub.f32 %v3655, %v3724
      %v3726 = vand.u32 %v3725, 4294901760
      %v3727 = vsub.f32 %v3725, %v3726
      %v3728 = vand.u32 %v3727, 4294901760
      %3729 = vmatmul.mubr.f32.gmra.mxu0 %v3728
      %v3730 = vpop.f32.mrf.mxu0
      %v3731 = vadd.f32 0.0, %v3730
      %v3732 = vpop.f32.mrf.mxu0
      %3733 = vdwg.mxu0
      %3734 = vmatprep.subr.mxu0 0.0
      %3735 = vmatpush1.msra.mxu0 0.0
      %3736 = vmatprep.subr.mxu0 0.0
      %3737 = vmatpush1.msra.mxu0 0.0
      %3738 = vmatprep.subr.mxu0 0.0
      %3739 = vmatpush1.msra.mxu0 0.0
      %3740 = vmatprep.subr.mxu0 0.0
      %3741 = vmatpush1.msra.mxu0 0.0
      %3742 = vmatprep.subr.mxu0 0.0
      %3743 = vmatpush1.msra.mxu0 0.0
      %3744 = vmatprep.subr.mxu0 0.0
      %3745 = vmatpush1.msra.mxu0 0.0
      %3746 = vmatprep.subr.mxu0 0.0
      %3747 = vmatpush1.msra.mxu0 0.0
      %3748 = vmatprep.subr.mxu0 0.0
      %3749 = vmatpush1.msra.mxu0 0.0
      %3750 = vmatprep.subr.mxu0 0.0
      %3751 = vmatpush1.msra.mxu0 0.0
      %3752 = vmatprep.subr.mxu0 0.0
      %3753 = vmatpush1.msra.mxu0 0.0
      %3754 = vmatprep.subr.mxu0 0.0
      %3755 = vmatpush1.msra.mxu0 0.0
      %3756 = vmatprep.subr.mxu0 0.0
      %3757 = vmatpush1.msra.mxu0 0.0
      %3758 = vmatprep.subr.mxu0 0.0
      %3759 = vmatpush1.msra.mxu0 0.0
      %3760 = vmatprep.subr.mxu0 0.0
      %3761 = vmatpush1.msra.mxu0 0.0
      %3762 = vmatprep.subr.mxu0 0.0
      %v3763 = vand.u32 %v408, 4294901760
      %v3764 = vsub.f32 %v408, %v3763
      %v3765 = vand.u32 %v3764, 4294901760
      %v3766 = vsub.f32 %v3764, %v3765
      %v3767 = vand.u32 %v3766, 4294901760
      %3768 = vmatpush1.msra.mxu0 %v3767
      %3769 = vmatprep.subr.mxu0 0.0
      %v3770 = vand.u32 %v407, 4294901760
      %v3771 = vsub.f32 %v407, %v3770
      %v3772 = vand.u32 %v3771, 4294901760
      %v3773 = vsub.f32 %v3771, %v3772
      %v3774 = vand.u32 %v3773, 4294901760
      %3775 = vmatpush1.msra.mxu0 %v3774
      %3776 = vmatprep.subr.mxu0 0.0
      %3777 = vmatpush2.msra.mxu0 0.0
      %3778 = vmatprep.subr.mxu0 0.0
      %3779 = vmatpush2.msra.mxu0 0.0
      %3780 = vmatprep.subr.mxu0 0.0
      %3781 = vmatpush2.msra.mxu0 0.0
      %3782 = vmatprep.subr.mxu0 0.0
      %3783 = vmatpush2.msra.mxu0 0.0
      %3784 = vmatprep.subr.mxu0 0.0
      %3785 = vmatpush2.msra.mxu0 0.0
      %3786 = vmatprep.subr.mxu0 0.0
      %3787 = vmatpush2.msra.mxu0 0.0
      %3788 = vmatprep.subr.mxu0 0.0
      %3789 = vmatpush2.msra.mxu0 0.0
      %3790 = vmatprep.subr.mxu0 0.0
      %3791 = vmatpush2.msra.mxu0 0.0
      %3792 = vmatprep.subr.mxu0 0.0
      %3793 = vmatpush2.msra.mxu0 0.0
      %3794 = vmatprep.subr.mxu0 0.0
      %3795 = vmatpush2.msra.mxu0 0.0
      %3796 = vmatprep.subr.mxu0 0.0
      %3797 = vmatpush2.msra.mxu0 0.0
      %3798 = vmatprep.subr.mxu0 0.0
      %3799 = vmatpush2.msra.mxu0 0.0
      %3800 = vmatprep.subr.mxu0 0.0
      %3801 = vmatpush2.msra.mxu0 0.0
      %3802 = vmatprep.subr.mxu0 0.0
      %3803 = vmatpush2.msra.mxu0 0.0
      %3804 = vmatprep.subr.mxu0 0.0
      %3805 = vmatpush2.msra.mxu0 0.0
      %3806 = vmatprep.subr.mxu0 0.0
      %3807 = vmatpush2.msra.mxu0 0.0
      %3808 = vmatprep.mubr.f32.mxu0 0.0
      %v3809 = vand.u32 %v3655, 4294901760
      %3810 = vmatmul.mubr.f32.gmra.mxu0 %v3809
      %v3811 = vpop.f32.mrf.mxu0
      %v3812 = vadd.f32 %v3731, %v3811
      %v3813 = vpop.f32.mrf.mxu0
      %3814 = vdwg.mxu0
      %3815 = vmatprep.subr.mxu0 0.0
      %3816 = vmatpush1.msra.mxu0 0.0
      %3817 = vmatprep.subr.mxu0 0.0
      %3818 = vmatpush1.msra.mxu0 0.0
      %3819 = vmatprep.subr.mxu0 0.0
      %3820 = vmatpush1.msra.mxu0 0.0
      %3821 = vmatprep.subr.mxu0 0.0
      %3822 = vmatpush1.msra.mxu0 0.0
      %3823 = vmatprep.subr.mxu0 0.0
      %3824 = vmatpush1.msra.mxu0 0.0
      %3825 = vmatprep.subr.mxu0 0.0
      %3826 = vmatpush1.msra.mxu0 0.0
      %3827 = vmatprep.subr.mxu0 0.0
      %3828 = vmatpush1.msra.mxu0 0.0
      %3829 = vmatprep.subr.mxu0 0.0
      %3830 = vmatpush1.msra.mxu0 0.0
      %3831 = vmatprep.subr.mxu0 0.0
      %3832 = vmatpush1.msra.mxu0 0.0
      %3833 = vmatprep.subr.mxu0 0.0
      %3834 = vmatpush1.msra.mxu0 0.0
      %3835 = vmatprep.subr.mxu0 0.0
      %3836 = vmatpush1.msra.mxu0 0.0
      %3837 = vmatprep.subr.mxu0 0.0
      %3838 = vmatpush1.msra.mxu0 0.0
      %3839 = vmatprep.subr.mxu0 0.0
      %3840 = vmatpush1.msra.mxu0 0.0
      %3841 = vmatprep.subr.mxu0 0.0
      %3842 = vmatpush1.msra.mxu0 0.0
      %3843 = vmatprep.subr.mxu0 0.0
      %v3844 = vand.u32 %v408, 4294901760
      %v3845 = vsub.f32 %v408, %v3844
      %3846 = vmatpush1.msra.mxu0 %v3845
      %3847 = vmatprep.subr.mxu0 0.0
      %v3848 = vand.u32 %v407, 4294901760
      %v3849 = vsub.f32 %v407, %v3848
      %3850 = vmatpush1.msra.mxu0 %v3849
      %3851 = vmatprep.subr.mxu0 0.0
      %3852 = vmatpush2.msra.mxu0 0.0
      %3853 = vmatprep.subr.mxu0 0.0
      %3854 = vmatpush2.msra.mxu0 0.0
      %3855 = vmatprep.subr.mxu0 0.0
      %3856 = vmatpush2.msra.mxu0 0.0
      %3857 = vmatprep.subr.mxu0 0.0
      %3858 = vmatpush2.msra.mxu0 0.0
      %3859 = vmatprep.subr.mxu0 0.0
      %3860 = vmatpush2.msra.mxu0 0.0
      %3861 = vmatprep.subr.mxu0 0.0
      %3862 = vmatpush2.msra.mxu0 0.0
      %3863 = vmatprep.subr.mxu0 0.0
      %3864 = vmatpush2.msra.mxu0 0.0
      %3865 = vmatprep.subr.mxu0 0.0
      %3866 = vmatpush2.msra.mxu0 0.0
      %3867 = vmatprep.subr.mxu0 0.0
      %3868 = vmatpush2.msra.mxu0 0.0
      %3869 = vmatprep.subr.mxu0 0.0
      %3870 = vmatpush2.msra.mxu0 0.0
      %3871 = vmatprep.subr.mxu0 0.0
      %3872 = vmatpush2.msra.mxu0 0.0
      %3873 = vmatprep.subr.mxu0 0.0
      %3874 = vmatpush2.msra.mxu0 0.0
      %3875 = vmatprep.subr.mxu0 0.0
      %3876 = vmatpush2.msra.mxu0 0.0
      %3877 = vmatprep.subr.mxu0 0.0
      %3878 = vmatpush2.msra.mxu0 0.0
      %3879 = vmatprep.subr.mxu0 0.0
      %3880 = vmatpush2.msra.mxu0 0.0
      %3881 = vmatprep.subr.mxu0 0.0
      %3882 = vmatpush2.msra.mxu0 0.0
      %3883 = vmatprep.mubr.f32.mxu0 0.0
      %v3884 = vand.u32 %v3655, 4294901760
      %v3885 = vsub.f32 %v3655, %v3884
      %3886 = vmatmul.mubr.f32.gmra.mxu0 %v3885
      %v3887 = vpop.f32.mrf.mxu0
      %v3888 = vadd.f32 %v3812, %v3887
      %v3889 = vpop.f32.mrf.mxu0
      %3890 = vdwg.mxu0
      %3891 = vmatprep.subr.mxu0 0.0
      %3892 = vmatpush1.msra.mxu0 0.0
      %3893 = vmatprep.subr.mxu0 0.0
      %3894 = vmatpush1.msra.mxu0 0.0
      %3895 = vmatprep.subr.mxu0 0.0
      %3896 = vmatpush1.msra.mxu0 0.0
      %3897 = vmatprep.subr.mxu0 0.0
      %3898 = vmatpush1.msra.mxu0 0.0
      %3899 = vmatprep.subr.mxu0 0.0
      %3900 = vmatpush1.msra.mxu0 0.0
      %3901 = vmatprep.subr.mxu0 0.0
      %3902 = vmatpush1.msra.mxu0 0.0
      %3903 = vmatprep.subr.mxu0 0.0
      %3904 = vmatpush1.msra.mxu0 0.0
      %3905 = vmatprep.subr.mxu0 0.0
      %3906 = vmatpush1.msra.mxu0 0.0
      %3907 = vmatprep.subr.mxu0 0.0
      %3908 = vmatpush1.msra.mxu0 0.0
      %3909 = vmatprep.subr.mxu0 0.0
      %3910 = vmatpush1.msra.mxu0 0.0
      %3911 = vmatprep.subr.mxu0 0.0
      %3912 = vmatpush1.msra.mxu0 0.0
      %3913 = vmatprep.subr.mxu0 0.0
      %3914 = vmatpush1.msra.mxu0 0.0
      %3915 = vmatprep.subr.mxu0 0.0
      %3916 = vmatpush1.msra.mxu0 0.0
      %3917 = vmatprep.subr.mxu0 0.0
      %3918 = vmatpush1.msra.mxu0 0.0
      %3919 = vmatprep.subr.mxu0 0.0
      %v3920 = vand.u32 %v408, 4294901760
      %3921 = vmatpush1.msra.mxu0 %v3920
      %3922 = vmatprep.subr.mxu0 0.0
      %v3923 = vand.u32 %v407, 4294901760
      %3924 = vmatpush1.msra.mxu0 %v3923
      %3925 = vmatprep.subr.mxu0 0.0
      %3926 = vmatpush2.msra.mxu0 0.0
      %3927 = vmatprep.subr.mxu0 0.0
      %3928 = vmatpush2.msra.mxu0 0.0
      %3929 = vmatprep.subr.mxu0 0.0
      %3930 = vmatpush2.msra.mxu0 0.0
      %3931 = vmatprep.subr.mxu0 0.0
      %3932 = vmatpush2.msra.mxu0 0.0
      %3933 = vmatprep.subr.mxu0 0.0
      %3934 = vmatpush2.msra.mxu0 0.0
      %3935 = vmatprep.subr.mxu0 0.0
      %3936 = vmatpush2.msra.mxu0 0.0
      %3937 = vmatprep.subr.mxu0 0.0
      %3938 = vmatpush2.msra.mxu0 0.0
      %3939 = vmatprep.subr.mxu0 0.0
      %3940 = vmatpush2.msra.mxu0 0.0
      %3941 = vmatprep.subr.mxu0 0.0
      %3942 = vmatpush2.msra.mxu0 0.0
      %3943 = vmatprep.subr.mxu0 0.0
      %3944 = vmatpush2.msra.mxu0 0.0
      %3945 = vmatprep.subr.mxu0 0.0
      %3946 = vmatpush2.msra.mxu0 0.0
      %3947 = vmatprep.subr.mxu0 0.0
      %3948 = vmatpush2.msra.mxu0 0.0
      %3949 = vmatprep.subr.mxu0 0.0
      %3950 = vmatpush2.msra.mxu0 0.0
      %3951 = vmatprep.subr.mxu0 0.0
      %3952 = vmatpush2.msra.mxu0 0.0
      %3953 = vmatprep.subr.mxu0 0.0
      %3954 = vmatpush2.msra.mxu0 0.0
      %3955 = vmatprep.subr.mxu0 0.0
      %3956 = vmatpush2.msra.mxu0 0.0
      %3957 = vmatprep.mubr.f32.mxu0 0.0
      %v3958 = vand.u32 %v3655, 4294901760
      %v3959 = vsub.f32 %v3655, %v3958
      %v3960 = vand.u32 %v3959, 4294901760
      %3961 = vmatmul.mubr.f32.gmra.mxu0 %v3960
      %v3962 = vpop.f32.mrf.mxu0
      %v3963 = vadd.f32 %v3888, %v3962
      %v3964 = vpop.f32.mrf.mxu0
      %3965 = vdwg.mxu0
      %3966 = vmatprep.subr.mxu0 0.0
      %3967 = vmatpush1.msra.mxu0 0.0
      %3968 = vmatprep.subr.mxu0 0.0
      %3969 = vmatpush1.msra.mxu0 0.0
      %3970 = vmatprep.subr.mxu0 0.0
      %3971 = vmatpush1.msra.mxu0 0.0
      %3972 = vmatprep.subr.mxu0 0.0
      %3973 = vmatpush1.msra.mxu0 0.0
      %3974 = vmatprep.subr.mxu0 0.0
      %3975 = vmatpush1.msra.mxu0 0.0
      %3976 = vmatprep.subr.mxu0 0.0
      %3977 = vmatpush1.msra.mxu0 0.0
      %3978 = vmatprep.subr.mxu0 0.0
      %3979 = vmatpush1.msra.mxu0 0.0
      %3980 = vmatprep.subr.mxu0 0.0
      %3981 = vmatpush1.msra.mxu0 0.0
      %3982 = vmatprep.subr.mxu0 0.0
      %3983 = vmatpush1.msra.mxu0 0.0
      %3984 = vmatprep.subr.mxu0 0.0
      %3985 = vmatpush1.msra.mxu0 0.0
      %3986 = vmatprep.subr.mxu0 0.0
      %3987 = vmatpush1.msra.mxu0 0.0
      %3988 = vmatprep.subr.mxu0 0.0
      %3989 = vmatpush1.msra.mxu0 0.0
      %3990 = vmatprep.subr.mxu0 0.0
      %3991 = vmatpush1.msra.mxu0 0.0
      %3992 = vmatprep.subr.mxu0 0.0
      %3993 = vmatpush1.msra.mxu0 0.0
      %3994 = vmatprep.subr.mxu0 0.0
      %v3995 = vand.u32 %v408, 4294901760
      %v3996 = vsub.f32 %v408, %v3995
      %v3997 = vand.u32 %v3996, 4294901760
      %3998 = vmatpush1.msra.mxu0 %v3997
      %3999 = vmatprep.subr.mxu0 0.0
      %v4000 = vand.u32 %v407, 4294901760
      %v4001 = vsub.f32 %v407, %v4000
      %v4002 = vand.u32 %v4001, 4294901760
      %4003 = vmatpush1.msra.mxu0 %v4002
      %4004 = vmatprep.subr.mxu0 0.0
      %4005 = vmatpush2.msra.mxu0 0.0
      %4006 = vmatprep.subr.mxu0 0.0
      %4007 = vmatpush2.msra.mxu0 0.0
      %4008 = vmatprep.subr.mxu0 0.0
      %4009 = vmatpush2.msra.mxu0 0.0
      %4010 = vmatprep.subr.mxu0 0.0
      %4011 = vmatpush2.msra.mxu0 0.0
      %4012 = vmatprep.subr.mxu0 0.0
      %4013 = vmatpush2.msra.mxu0 0.0
      %4014 = vmatprep.subr.mxu0 0.0
      %4015 = vmatpush2.msra.mxu0 0.0
      %4016 = vmatprep.subr.mxu0 0.0
      %4017 = vmatpush2.msra.mxu0 0.0
      %4018 = vmatprep.subr.mxu0 0.0
      %4019 = vmatpush2.msra.mxu0 0.0
      %4020 = vmatprep.subr.mxu0 0.0
      %4021 = vmatpush2.msra.mxu0 0.0
      %4022 = vmatprep.subr.mxu0 0.0
      %4023 = vmatpush2.msra.mxu0 0.0
      %4024 = vmatprep.subr.mxu0 0.0
      %4025 = vmatpush2.msra.mxu0 0.0
      %4026 = vmatprep.subr.mxu0 0.0
      %4027 = vmatpush2.msra.mxu0 0.0
      %4028 = vmatprep.subr.mxu0 0.0
      %4029 = vmatpush2.msra.mxu0 0.0
      %4030 = vmatprep.subr.mxu0 0.0
      %4031 = vmatpush2.msra.mxu0 0.0
      %4032 = vmatprep.subr.mxu0 0.0
      %4033 = vmatpush2.msra.mxu0 0.0
      %4034 = vmatprep.subr.mxu0 0.0
      %4035 = vmatpush2.msra.mxu0 0.0
      %4036 = vmatprep.mubr.f32.mxu0 0.0
      %v4037 = vand.u32 %v3655, 4294901760
      %4038 = vmatmul.mubr.f32.gmra.mxu0 %v4037
      %v4039 = vpop.f32.mrf.mxu0
      %v4040 = vadd.f32 %v3963, %v4039
      %v4041 = vpop.f32.mrf.mxu0
      %4042 = vdwg.mxu0
      %4043 = vmatprep.subr.mxu0 0.0
      %4044 = vmatpush1.msra.mxu0 0.0
      %4045 = vmatprep.subr.mxu0 0.0
      %4046 = vmatpush1.msra.mxu0 0.0
      %4047 = vmatprep.subr.mxu0 0.0
      %4048 = vmatpush1.msra.mxu0 0.0
      %4049 = vmatprep.subr.mxu0 0.0
      %4050 = vmatpush1.msra.mxu0 0.0
      %4051 = vmatprep.subr.mxu0 0.0
      %4052 = vmatpush1.msra.mxu0 0.0
      %4053 = vmatprep.subr.mxu0 0.0
      %4054 = vmatpush1.msra.mxu0 0.0
      %4055 = vmatprep.subr.mxu0 0.0
      %4056 = vmatpush1.msra.mxu0 0.0
      %4057 = vmatprep.subr.mxu0 0.0
      %4058 = vmatpush1.msra.mxu0 0.0
      %4059 = vmatprep.subr.mxu0 0.0
      %4060 = vmatpush1.msra.mxu0 0.0
      %4061 = vmatprep.subr.mxu0 0.0
      %4062 = vmatpush1.msra.mxu0 0.0
      %4063 = vmatprep.subr.mxu0 0.0
      %4064 = vmatpush1.msra.mxu0 0.0
      %4065 = vmatprep.subr.mxu0 0.0
      %4066 = vmatpush1.msra.mxu0 0.0
      %4067 = vmatprep.subr.mxu0 0.0
      %4068 = vmatpush1.msra.mxu0 0.0
      %4069 = vmatprep.subr.mxu0 0.0
      %4070 = vmatpush1.msra.mxu0 0.0
      %4071 = vmatprep.subr.mxu0 0.0
      %v4072 = vand.u32 %v408, 4294901760
      %4073 = vmatpush1.msra.mxu0 %v4072
      %4074 = vmatprep.subr.mxu0 0.0
      %v4075 = vand.u32 %v407, 4294901760
      %4076 = vmatpush1.msra.mxu0 %v4075
      %4077 = vmatprep.subr.mxu0 0.0
      %4078 = vmatpush2.msra.mxu0 0.0
      %4079 = vmatprep.subr.mxu0 0.0
      %4080 = vmatpush2.msra.mxu0 0.0
      %4081 = vmatprep.subr.mxu0 0.0
      %4082 = vmatpush2.msra.mxu0 0.0
      %4083 = vmatprep.subr.mxu0 0.0
      %4084 = vmatpush2.msra.mxu0 0.0
      %4085 = vmatprep.subr.mxu0 0.0
      %4086 = vmatpush2.msra.mxu0 0.0
      %4087 = vmatprep.subr.mxu0 0.0
      %4088 = vmatpush2.msra.mxu0 0.0
      %4089 = vmatprep.subr.mxu0 0.0
      %4090 = vmatpush2.msra.mxu0 0.0
      %4091 = vmatprep.subr.mxu0 0.0
      %4092 = vmatpush2.msra.mxu0 0.0
      %4093 = vmatprep.subr.mxu0 0.0
      %4094 = vmatpush2.msra.mxu0 0.0
      %4095 = vmatprep.subr.mxu0 0.0
      %4096 = vmatpush2.msra.mxu0 0.0
      %4097 = vmatprep.subr.mxu0 0.0
      %4098 = vmatpush2.msra.mxu0 0.0
      %4099 = vmatprep.subr.mxu0 0.0
      %4100 = vmatpush2.msra.mxu0 0.0
      %4101 = vmatprep.subr.mxu0 0.0
      %4102 = vmatpush2.msra.mxu0 0.0
      %4103 = vmatprep.subr.mxu0 0.0
      %4104 = vmatpush2.msra.mxu0 0.0
      %4105 = vmatprep.subr.mxu0 0.0
      %4106 = vmatpush2.msra.mxu0 0.0
      %4107 = vmatprep.subr.mxu0 0.0
      %4108 = vmatpush2.msra.mxu0 0.0
      %4109 = vmatprep.mubr.f32.mxu0 0.0
      %v4110 = vand.u32 %v3655, 4294901760
      %4111 = vmatmul.mubr.f32.gmra.mxu0 %v4110
      %v4112 = vpop.f32.mrf.mxu0
      %v4113 = vadd.f32 %v4040, %v4112
      %v4114 = vpop.f32.mrf.mxu0
      %4115 = vdwg.mxu0
      %4116 = vset.pattern.permute.xlu0 3
      %4117 = vperm.xlu0 %4116, %v346
      %v4118 = vpop.permute.xlu0 %4117
      %4119 = vset.pattern.permute.xlu0 3
      %4120 = vperm.xlu0 %4119, %v347
      %v4121 = vpop.permute.xlu0 %4120
      %4122 = vset.pattern.permute.xlu0 3
      %4123 = vperm.xlu0 %4122, %v348
      %v4124 = vpop.permute.xlu0 %4123
      %4125 = vset.pattern.permute.xlu0 3
      %4126 = vperm.xlu0 %4125, %v349
      %v4127 = vpop.permute.xlu0 %4126
      %4128 = vset.pattern.permute.xlu0 3
      %4129 = vperm.xlu0 %4128, %v350
      %v4130 = vpop.permute.xlu0 %4129
      %4131 = vset.pattern.permute.xlu0 3
      %4132 = vperm.xlu0 %4131, %v351
      %v4133 = vpop.permute.xlu0 %4132
      %4134 = vset.pattern.permute.xlu0 3
      %4135 = vperm.xlu0 %4134, %v352
      %v4136 = vpop.permute.xlu0 %4135
      %4137 = vset.pattern.permute.xlu0 3
      %4138 = vperm.xlu0 %4137, %v353
      %v4139 = vpop.permute.xlu0 %4138
      %v4140 = vlaneseq
      %v4141 = vshrl.u32 %v4140, 7
      %v4142 = vsub.s32 %v438, %v4141
      %v4143 = vrot.slane %v4118, %v4142
      %v4144 = vlaneseq
      %v4145 = vshrl.u32 %v4144, 7
      %v4146 = vsub.s32 %v443, %v4145
      %v4147 = vrot.slane %v4121, %v4146
      %v4148 = vsel %vm448, %v4147, %v4143
      %v4149 = vlaneseq
      %v4150 = vshrl.u32 %v4149, 7
      %v4151 = vsub.s32 %v438, %v4150
      %v4152 = vrot.slane %v4124, %v4151
      %v4153 = vlaneseq
      %v4154 = vshrl.u32 %v4153, 7
      %v4155 = vsub.s32 %v443, %v4154
      %v4156 = vrot.slane %v4127, %v4155
      %v4157 = vsel %vm448, %v4156, %v4152
      %v4158 = vlaneseq
      %v4159 = vshrl.u32 %v4158, 7
      %v4160 = vsub.s32 %v438, %v4159
      %v4161 = vrot.slane %v4130, %v4160
      %v4162 = vlaneseq
      %v4163 = vshrl.u32 %v4162, 7
      %v4164 = vsub.s32 %v443, %v4163
      %v4165 = vrot.slane %v4133, %v4164
      %v4166 = vsel %vm448, %v4165, %v4161
      %v4167 = vlaneseq
      %v4168 = vshrl.u32 %v4167, 7
      %v4169 = vsub.s32 %v438, %v4168
      %v4170 = vrot.slane %v4136, %v4169
      %v4171 = vlaneseq
      %v4172 = vshrl.u32 %v4171, 7
      %v4173 = vsub.s32 %v443, %v4172
      %v4174 = vrot.slane %v4139, %v4173
      %v4175 = vsel %vm448, %v4174, %v4170
      %v4176 = vsel %vm477, %v4157, %v4148
      %v4177 = vsel %vm479, %v4166, %v4176
      %v4178 = vsel %vm481, %v4175, %v4177
      %v4179 = vsel %vm483, %v4178, 0
      %4181 = vmatprep.subr.mxu0 0.0
      %4182 = vmatpush1.msra.mxu0 0.0
      %4183 = vmatprep.subr.mxu0 0.0
      %4184 = vmatpush1.msra.mxu0 0.0
      %4185 = vmatprep.subr.mxu0 0.0
      %4186 = vmatpush1.msra.mxu0 0.0
      %4187 = vmatprep.subr.mxu0 0.0
      %4188 = vmatpush1.msra.mxu0 0.0
      %4189 = vmatprep.subr.mxu0 0.0
      %4190 = vmatpush1.msra.mxu0 0.0
      %4191 = vmatprep.subr.mxu0 0.0
      %4192 = vmatpush1.msra.mxu0 0.0
      %4193 = vmatprep.subr.mxu0 0.0
      %4194 = vmatpush1.msra.mxu0 0.0
      %4195 = vmatprep.subr.mxu0 0.0
      %4196 = vmatpush1.msra.mxu0 0.0
      %4197 = vmatprep.subr.mxu0 0.0
      %4198 = vmatpush1.msra.mxu0 0.0
      %4199 = vmatprep.subr.mxu0 0.0
      %4200 = vmatpush1.msra.mxu0 0.0
      %4201 = vmatprep.subr.mxu0 0.0
      %4202 = vmatpush1.msra.mxu0 0.0
      %4203 = vmatprep.subr.mxu0 0.0
      %4204 = vmatpush1.msra.mxu0 0.0
      %4205 = vmatprep.subr.mxu0 0.0
      %4206 = vmatpush1.msra.mxu0 0.0
      %4207 = vmatprep.subr.mxu0 0.0
      %4208 = vmatpush1.msra.mxu0 0.0
      %4209 = vmatprep.subr.mxu0 0.0
      %v4210 = vand.u32 %v406, 4294901760
      %4211 = vmatpush1.msra.mxu0 %v4210
      %4212 = vmatprep.subr.mxu0 0.0
      %v4213 = vand.u32 %v405, 4294901760
      %4214 = vmatpush1.msra.mxu0 %v4213
      %4215 = vmatprep.subr.mxu0 0.0
      %4216 = vmatpush2.msra.mxu0 0.0
      %4217 = vmatprep.subr.mxu0 0.0
      %4218 = vmatpush2.msra.mxu0 0.0
      %4219 = vmatprep.subr.mxu0 0.0
      %4220 = vmatpush2.msra.mxu0 0.0
      %4221 = vmatprep.subr.mxu0 0.0
      %4222 = vmatpush2.msra.mxu0 0.0
      %4223 = vmatprep.subr.mxu0 0.0
      %4224 = vmatpush2.msra.mxu0 0.0
      %4225 = vmatprep.subr.mxu0 0.0
      %4226 = vmatpush2.msra.mxu0 0.0
      %4227 = vmatprep.subr.mxu0 0.0
      %4228 = vmatpush2.msra.mxu0 0.0
      %4229 = vmatprep.subr.mxu0 0.0
      %4230 = vmatpush2.msra.mxu0 0.0
      %4231 = vmatprep.subr.mxu0 0.0
      %4232 = vmatpush2.msra.mxu0 0.0
      %4233 = vmatprep.subr.mxu0 0.0
      %4234 = vmatpush2.msra.mxu0 0.0
      %4235 = vmatprep.subr.mxu0 0.0
      %4236 = vmatpush2.msra.mxu0 0.0
      %4237 = vmatprep.subr.mxu0 0.0
      %4238 = vmatpush2.msra.mxu0 0.0
      %4239 = vmatprep.subr.mxu0 0.0
      %4240 = vmatpush2.msra.mxu0 0.0
      %4241 = vmatprep.subr.mxu0 0.0
      %4242 = vmatpush2.msra.mxu0 0.0
      %4243 = vmatprep.subr.mxu0 0.0
      %4244 = vmatpush2.msra.mxu0 0.0
      %4245 = vmatprep.subr.mxu0 0.0
      %4246 = vmatpush2.msra.mxu0 0.0
      %4247 = vmatprep.mubr.f32.mxu0 0.0
      %v4248 = vand.u32 %v4179, 4294901760
      %v4249 = vsub.f32 %v4179, %v4248
      %v4250 = vand.u32 %v4249, 4294901760
      %v4251 = vsub.f32 %v4249, %v4250
      %v4252 = vand.u32 %v4251, 4294901760
      %4253 = vmatmul.mubr.f32.gmra.mxu0 %v4252
      %v4254 = vpop.f32.mrf.mxu0
      %v4255 = vadd.f32 %v4113, %v4254
      %v4256 = vpop.f32.mrf.mxu0
      %4257 = vdwg.mxu0
      %4258 = vmatprep.subr.mxu0 0.0
      %4259 = vmatpush1.msra.mxu0 0.0
      %4260 = vmatprep.subr.mxu0 0.0
      %4261 = vmatpush1.msra.mxu0 0.0
      %4262 = vmatprep.subr.mxu0 0.0
      %4263 = vmatpush1.msra.mxu0 0.0
      %4264 = vmatprep.subr.mxu0 0.0
      %4265 = vmatpush1.msra.mxu0 0.0
      %4266 = vmatprep.subr.mxu0 0.0
      %4267 = vmatpush1.msra.mxu0 0.0
      %4268 = vmatprep.subr.mxu0 0.0
      %4269 = vmatpush1.msra.mxu0 0.0
      %4270 = vmatprep.subr.mxu0 0.0
      %4271 = vmatpush1.msra.mxu0 0.0
      %4272 = vmatprep.subr.mxu0 0.0
      %4273 = vmatpush1.msra.mxu0 0.0
      %4274 = vmatprep.subr.mxu0 0.0
      %4275 = vmatpush1.msra.mxu0 0.0
      %4276 = vmatprep.subr.mxu0 0.0
      %4277 = vmatpush1.msra.mxu0 0.0
      %4278 = vmatprep.subr.mxu0 0.0
      %4279 = vmatpush1.msra.mxu0 0.0
      %4280 = vmatprep.subr.mxu0 0.0
      %4281 = vmatpush1.msra.mxu0 0.0
      %4282 = vmatprep.subr.mxu0 0.0
      %4283 = vmatpush1.msra.mxu0 0.0
      %4284 = vmatprep.subr.mxu0 0.0
      %4285 = vmatpush1.msra.mxu0 0.0
      %4286 = vmatprep.subr.mxu0 0.0
      %v4287 = vand.u32 %v406, 4294901760
      %v4288 = vsub.f32 %v406, %v4287
      %v4289 = vand.u32 %v4288, 4294901760
      %v4290 = vsub.f32 %v4288, %v4289
      %v4291 = vand.u32 %v4290, 4294901760
      %4292 = vmatpush1.msra.mxu0 %v4291
      %4293 = vmatprep.subr.mxu0 0.0
      %v4294 = vand.u32 %v405, 4294901760
      %v4295 = vsub.f32 %v405, %v4294
      %v4296 = vand.u32 %v4295, 4294901760
      %v4297 = vsub.f32 %v4295, %v4296
      %v4298 = vand.u32 %v4297, 4294901760
      %4299 = vmatpush1.msra.mxu0 %v4298
      %4300 = vmatprep.subr.mxu0 0.0
      %4301 = vmatpush2.msra.mxu0 0.0
      %4302 = vmatprep.subr.mxu0 0.0
      %4303 = vmatpush2.msra.mxu0 0.0
      %4304 = vmatprep.subr.mxu0 0.0
      %4305 = vmatpush2.msra.mxu0 0.0
      %4306 = vmatprep.subr.mxu0 0.0
      %4307 = vmatpush2.msra.mxu0 0.0
      %4308 = vmatprep.subr.mxu0 0.0
      %4309 = vmatpush2.msra.mxu0 0.0
      %4310 = vmatprep.subr.mxu0 0.0
      %4311 = vmatpush2.msra.mxu0 0.0
      %4312 = vmatprep.subr.mxu0 0.0
      %4313 = vmatpush2.msra.mxu0 0.0
      %4314 = vmatprep.subr.mxu0 0.0
      %4315 = vmatpush2.msra.mxu0 0.0
      %4316 = vmatprep.subr.mxu0 0.0
      %4317 = vmatpush2.msra.mxu0 0.0
      %4318 = vmatprep.subr.mxu0 0.0
      %4319 = vmatpush2.msra.mxu0 0.0
      %4320 = vmatprep.subr.mxu0 0.0
      %4321 = vmatpush2.msra.mxu0 0.0
      %4322 = vmatprep.subr.mxu0 0.0
      %4323 = vmatpush2.msra.mxu0 0.0
      %4324 = vmatprep.subr.mxu0 0.0
      %4325 = vmatpush2.msra.mxu0 0.0
      %4326 = vmatprep.subr.mxu0 0.0
      %4327 = vmatpush2.msra.mxu0 0.0
      %4328 = vmatprep.subr.mxu0 0.0
      %4329 = vmatpush2.msra.mxu0 0.0
      %4330 = vmatprep.subr.mxu0 0.0
      %4331 = vmatpush2.msra.mxu0 0.0
      %4332 = vmatprep.mubr.f32.mxu0 0.0
      %v4333 = vand.u32 %v4179, 4294901760
      %4334 = vmatmul.mubr.f32.gmra.mxu0 %v4333
      %v4335 = vpop.f32.mrf.mxu0
      %v4336 = vadd.f32 %v4255, %v4335
      %v4337 = vpop.f32.mrf.mxu0
      %4338 = vdwg.mxu0
      %4339 = vmatprep.subr.mxu0 0.0
      %4340 = vmatpush1.msra.mxu0 0.0
      %4341 = vmatprep.subr.mxu0 0.0
      %4342 = vmatpush1.msra.mxu0 0.0
      %4343 = vmatprep.subr.mxu0 0.0
      %4344 = vmatpush1.msra.mxu0 0.0
      %4345 = vmatprep.subr.mxu0 0.0
      %4346 = vmatpush1.msra.mxu0 0.0
      %4347 = vmatprep.subr.mxu0 0.0
      %4348 = vmatpush1.msra.mxu0 0.0
      %4349 = vmatprep.subr.mxu0 0.0
      %4350 = vmatpush1.msra.mxu0 0.0
      %4351 = vmatprep.subr.mxu0 0.0
      %4352 = vmatpush1.msra.mxu0 0.0
      %4353 = vmatprep.subr.mxu0 0.0
      %4354 = vmatpush1.msra.mxu0 0.0
      %4355 = vmatprep.subr.mxu0 0.0
      %4356 = vmatpush1.msra.mxu0 0.0
      %4357 = vmatprep.subr.mxu0 0.0
      %4358 = vmatpush1.msra.mxu0 0.0
      %4359 = vmatprep.subr.mxu0 0.0
      %4360 = vmatpush1.msra.mxu0 0.0
      %4361 = vmatprep.subr.mxu0 0.0
      %4362 = vmatpush1.msra.mxu0 0.0
      %4363 = vmatprep.subr.mxu0 0.0
      %4364 = vmatpush1.msra.mxu0 0.0
      %4365 = vmatprep.subr.mxu0 0.0
      %4366 = vmatpush1.msra.mxu0 0.0
      %4367 = vmatprep.subr.mxu0 0.0
      %v4368 = vand.u32 %v406, 4294901760
      %v4369 = vsub.f32 %v406, %v4368
      %4370 = vmatpush1.msra.mxu0 %v4369
      %4371 = vmatprep.subr.mxu0 0.0
      %v4372 = vand.u32 %v405, 4294901760
      %v4373 = vsub.f32 %v405, %v4372
      %4374 = vmatpush1.msra.mxu0 %v4373
      %4375 = vmatprep.subr.mxu0 0.0
      %4376 = vmatpush2.msra.mxu0 0.0
      %4377 = vmatprep.subr.mxu0 0.0
      %4378 = vmatpush2.msra.mxu0 0.0
      %4379 = vmatprep.subr.mxu0 0.0
      %4380 = vmatpush2.msra.mxu0 0.0
      %4381 = vmatprep.subr.mxu0 0.0
      %4382 = vmatpush2.msra.mxu0 0.0
      %4383 = vmatprep.subr.mxu0 0.0
      %4384 = vmatpush2.msra.mxu0 0.0
      %4385 = vmatprep.subr.mxu0 0.0
      %4386 = vmatpush2.msra.mxu0 0.0
      %4387 = vmatprep.subr.mxu0 0.0
      %4388 = vmatpush2.msra.mxu0 0.0
      %4389 = vmatprep.subr.mxu0 0.0
      %4390 = vmatpush2.msra.mxu0 0.0
      %4391 = vmatprep.subr.mxu0 0.0
      %4392 = vmatpush2.msra.mxu0 0.0
      %4393 = vmatprep.subr.mxu0 0.0
      %4394 = vmatpush2.msra.mxu0 0.0
      %4395 = vmatprep.subr.mxu0 0.0
      %4396 = vmatpush2.msra.mxu0 0.0
      %4397 = vmatprep.subr.mxu0 0.0
      %4398 = vmatpush2.msra.mxu0 0.0
      %4399 = vmatprep.subr.mxu0 0.0
      %4400 = vmatpush2.msra.mxu0 0.0
      %4401 = vmatprep.subr.mxu0 0.0
      %4402 = vmatpush2.msra.mxu0 0.0
      %4403 = vmatprep.subr.mxu0 0.0
      %4404 = vmatpush2.msra.mxu0 0.0
      %4405 = vmatprep.subr.mxu0 0.0
      %4406 = vmatpush2.msra.mxu0 0.0
      %4407 = vmatprep.mubr.f32.mxu0 0.0
      %v4408 = vand.u32 %v4179, 4294901760
      %v4409 = vsub.f32 %v4179, %v4408
      %4410 = vmatmul.mubr.f32.gmra.mxu0 %v4409
      %v4411 = vpop.f32.mrf.mxu0
      %v4412 = vadd.f32 %v4336, %v4411
      %v4413 = vpop.f32.mrf.mxu0
      %4414 = vdwg.mxu0
      %4415 = vmatprep.subr.mxu0 0.0
      %4416 = vmatpush1.msra.mxu0 0.0
      %4417 = vmatprep.subr.mxu0 0.0
      %4418 = vmatpush1.msra.mxu0 0.0
      %4419 = vmatprep.subr.mxu0 0.0
      %4420 = vmatpush1.msra.mxu0 0.0
      %4421 = vmatprep.subr.mxu0 0.0
      %4422 = vmatpush1.msra.mxu0 0.0
      %4423 = vmatprep.subr.mxu0 0.0
      %4424 = vmatpush1.msra.mxu0 0.0
      %4425 = vmatprep.subr.mxu0 0.0
      %4426 = vmatpush1.msra.mxu0 0.0
      %4427 = vmatprep.subr.mxu0 0.0
      %4428 = vmatpush1.msra.mxu0 0.0
      %4429 = vmatprep.subr.mxu0 0.0
      %4430 = vmatpush1.msra.mxu0 0.0
      %4431 = vmatprep.subr.mxu0 0.0
      %4432 = vmatpush1.msra.mxu0 0.0
      %4433 = vmatprep.subr.mxu0 0.0
      %4434 = vmatpush1.msra.mxu0 0.0
      %4435 = vmatprep.subr.mxu0 0.0
      %4436 = vmatpush1.msra.mxu0 0.0
      %4437 = vmatprep.subr.mxu0 0.0
      %4438 = vmatpush1.msra.mxu0 0.0
      %4439 = vmatprep.subr.mxu0 0.0
      %4440 = vmatpush1.msra.mxu0 0.0
      %4441 = vmatprep.subr.mxu0 0.0
      %4442 = vmatpush1.msra.mxu0 0.0
      %4443 = vmatprep.subr.mxu0 0.0
      %v4444 = vand.u32 %v406, 4294901760
      %4445 = vmatpush1.msra.mxu0 %v4444
      %4446 = vmatprep.subr.mxu0 0.0
      %v4447 = vand.u32 %v405, 4294901760
      %4448 = vmatpush1.msra.mxu0 %v4447
      %4449 = vmatprep.subr.mxu0 0.0
      %4450 = vmatpush2.msra.mxu0 0.0
      %4451 = vmatprep.subr.mxu0 0.0
      %4452 = vmatpush2.msra.mxu0 0.0
      %4453 = vmatprep.subr.mxu0 0.0
      %4454 = vmatpush2.msra.mxu0 0.0
      %4455 = vmatprep.subr.mxu0 0.0
      %4456 = vmatpush2.msra.mxu0 0.0
      %4457 = vmatprep.subr.mxu0 0.0
      %4458 = vmatpush2.msra.mxu0 0.0
      %4459 = vmatprep.subr.mxu0 0.0
      %4460 = vmatpush2.msra.mxu0 0.0
      %4461 = vmatprep.subr.mxu0 0.0
      %4462 = vmatpush2.msra.mxu0 0.0
      %4463 = vmatprep.subr.mxu0 0.0
      %4464 = vmatpush2.msra.mxu0 0.0
      %4465 = vmatprep.subr.mxu0 0.0
      %4466 = vmatpush2.msra.mxu0 0.0
      %4467 = vmatprep.subr.mxu0 0.0
      %4468 = vmatpush2.msra.mxu0 0.0
      %4469 = vmatprep.subr.mxu0 0.0
      %4470 = vmatpush2.msra.mxu0 0.0
      %4471 = vmatprep.subr.mxu0 0.0
      %4472 = vmatpush2.msra.mxu0 0.0
      %4473 = vmatprep.subr.mxu0 0.0
      %4474 = vmatpush2.msra.mxu0 0.0
      %4475 = vmatprep.subr.mxu0 0.0
      %4476 = vmatpush2.msra.mxu0 0.0
      %4477 = vmatprep.subr.mxu0 0.0
      %4478 = vmatpush2.msra.mxu0 0.0
      %4479 = vmatprep.subr.mxu0 0.0
      %4480 = vmatpush2.msra.mxu0 0.0
      %4481 = vmatprep.mubr.f32.mxu0 0.0
      %v4482 = vand.u32 %v4179, 4294901760
      %v4483 = vsub.f32 %v4179, %v4482
      %v4484 = vand.u32 %v4483, 4294901760
      %4485 = vmatmul.mubr.f32.gmra.mxu0 %v4484
      %v4486 = vpop.f32.mrf.mxu0
      %v4487 = vadd.f32 %v4412, %v4486
      %v4488 = vpop.f32.mrf.mxu0
      %4489 = vdwg.mxu0
      %4490 = vmatprep.subr.mxu0 0.0
      %4491 = vmatpush1.msra.mxu0 0.0
      %4492 = vmatprep.subr.mxu0 0.0
      %4493 = vmatpush1.msra.mxu0 0.0
      %4494 = vmatprep.subr.mxu0 0.0
      %4495 = vmatpush1.msra.mxu0 0.0
      %4496 = vmatprep.subr.mxu0 0.0
      %4497 = vmatpush1.msra.mxu0 0.0
      %4498 = vmatprep.subr.mxu0 0.0
      %4499 = vmatpush1.msra.mxu0 0.0
      %4500 = vmatprep.subr.mxu0 0.0
      %4501 = vmatpush1.msra.mxu0 0.0
      %4502 = vmatprep.subr.mxu0 0.0
      %4503 = vmatpush1.msra.mxu0 0.0
      %4504 = vmatprep.subr.mxu0 0.0
      %4505 = vmatpush1.msra.mxu0 0.0
      %4506 = vmatprep.subr.mxu0 0.0
      %4507 = vmatpush1.msra.mxu0 0.0
      %4508 = vmatprep.subr.mxu0 0.0
      %4509 = vmatpush1.msra.mxu0 0.0
      %4510 = vmatprep.subr.mxu0 0.0
      %4511 = vmatpush1.msra.mxu0 0.0
      %4512 = vmatprep.subr.mxu0 0.0
      %4513 = vmatpush1.msra.mxu0 0.0
      %4514 = vmatprep.subr.mxu0 0.0
      %4515 = vmatpush1.msra.mxu0 0.0
      %4516 = vmatprep.subr.mxu0 0.0
      %4517 = vmatpush1.msra.mxu0 0.0
      %4518 = vmatprep.subr.mxu0 0.0
      %v4519 = vand.u32 %v406, 4294901760
      %v4520 = vsub.f32 %v406, %v4519
      %v4521 = vand.u32 %v4520, 4294901760
      %4522 = vmatpush1.msra.mxu0 %v4521
      %4523 = vmatprep.subr.mxu0 0.0
      %v4524 = vand.u32 %v405, 4294901760
      %v4525 = vsub.f32 %v405, %v4524
      %v4526 = vand.u32 %v4525, 4294901760
      %4527 = vmatpush1.msra.mxu0 %v4526
      %4528 = vmatprep.subr.mxu0 0.0
      %4529 = vmatpush2.msra.mxu0 0.0
      %4530 = vmatprep.subr.mxu0 0.0
      %4531 = vmatpush2.msra.mxu0 0.0
      %4532 = vmatprep.subr.mxu0 0.0
      %4533 = vmatpush2.msra.mxu0 0.0
      %4534 = vmatprep.subr.mxu0 0.0
      %4535 = vmatpush2.msra.mxu0 0.0
      %4536 = vmatprep.subr.mxu0 0.0
      %4537 = vmatpush2.msra.mxu0 0.0
      %4538 = vmatprep.subr.mxu0 0.0
      %4539 = vmatpush2.msra.mxu0 0.0
      %4540 = vmatprep.subr.mxu0 0.0
      %4541 = vmatpush2.msra.mxu0 0.0
      %4542 = vmatprep.subr.mxu0 0.0
      %4543 = vmatpush2.msra.mxu0 0.0
      %4544 = vmatprep.subr.mxu0 0.0
      %4545 = vmatpush2.msra.mxu0 0.0
      %4546 = vmatprep.subr.mxu0 0.0
      %4547 = vmatpush2.msra.mxu0 0.0
      %4548 = vmatprep.subr.mxu0 0.0
      %4549 = vmatpush2.msra.mxu0 0.0
      %4550 = vmatprep.subr.mxu0 0.0
      %4551 = vmatpush2.msra.mxu0 0.0
      %4552 = vmatprep.subr.mxu0 0.0
      %4553 = vmatpush2.msra.mxu0 0.0
      %4554 = vmatprep.subr.mxu0 0.0
      %4555 = vmatpush2.msra.mxu0 0.0
      %4556 = vmatprep.subr.mxu0 0.0
      %4557 = vmatpush2.msra.mxu0 0.0
      %4558 = vmatprep.subr.mxu0 0.0
      %4559 = vmatpush2.msra.mxu0 0.0
      %4560 = vmatprep.mubr.f32.mxu0 0.0
      %v4561 = vand.u32 %v4179, 4294901760
      %4562 = vmatmul.mubr.f32.gmra.mxu0 %v4561
      %v4563 = vpop.f32.mrf.mxu0
      %v4564 = vadd.f32 %v4487, %v4563
      %v4565 = vpop.f32.mrf.mxu0
      %4566 = vdwg.mxu0
      %4567 = vmatprep.subr.mxu0 0.0
      %4568 = vmatpush1.msra.mxu0 0.0
      %4569 = vmatprep.subr.mxu0 0.0
      %4570 = vmatpush1.msra.mxu0 0.0
      %4571 = vmatprep.subr.mxu0 0.0
      %4572 = vmatpush1.msra.mxu0 0.0
      %4573 = vmatprep.subr.mxu0 0.0
      %4574 = vmatpush1.msra.mxu0 0.0
      %4575 = vmatprep.subr.mxu0 0.0
      %4576 = vmatpush1.msra.mxu0 0.0
      %4577 = vmatprep.subr.mxu0 0.0
      %4578 = vmatpush1.msra.mxu0 0.0
      %4579 = vmatprep.subr.mxu0 0.0
      %4580 = vmatpush1.msra.mxu0 0.0
      %4581 = vmatprep.subr.mxu0 0.0
      %4582 = vmatpush1.msra.mxu0 0.0
      %4583 = vmatprep.subr.mxu0 0.0
      %4584 = vmatpush1.msra.mxu0 0.0
      %4585 = vmatprep.subr.mxu0 0.0
      %4586 = vmatpush1.msra.mxu0 0.0
      %4587 = vmatprep.subr.mxu0 0.0
      %4588 = vmatpush1.msra.mxu0 0.0
      %4589 = vmatprep.subr.mxu0 0.0
      %4590 = vmatpush1.msra.mxu0 0.0
      %4591 = vmatprep.subr.mxu0 0.0
      %4592 = vmatpush1.msra.mxu0 0.0
      %4593 = vmatprep.subr.mxu0 0.0
      %4594 = vmatpush1.msra.mxu0 0.0
      %4595 = vmatprep.subr.mxu0 0.0
      %v4596 = vand.u32 %v406, 4294901760
      %4597 = vmatpush1.msra.mxu0 %v4596
      %4598 = vmatprep.subr.mxu0 0.0
      %v4599 = vand.u32 %v405, 4294901760
      %4600 = vmatpush1.msra.mxu0 %v4599
      %4601 = vmatprep.subr.mxu0 0.0
      %4602 = vmatpush2.msra.mxu0 0.0
      %4603 = vmatprep.subr.mxu0 0.0
      %4604 = vmatpush2.msra.mxu0 0.0
      %4605 = vmatprep.subr.mxu0 0.0
      %4606 = vmatpush2.msra.mxu0 0.0
      %4607 = vmatprep.subr.mxu0 0.0
      %4608 = vmatpush2.msra.mxu0 0.0
      %4609 = vmatprep.subr.mxu0 0.0
      %4610 = vmatpush2.msra.mxu0 0.0
      %4611 = vmatprep.subr.mxu0 0.0
      %4612 = vmatpush2.msra.mxu0 0.0
      %4613 = vmatprep.subr.mxu0 0.0
      %4614 = vmatpush2.msra.mxu0 0.0
      %4615 = vmatprep.subr.mxu0 0.0
      %4616 = vmatpush2.msra.mxu0 0.0
      %4617 = vmatprep.subr.mxu0 0.0
      %4618 = vmatpush2.msra.mxu0 0.0
      %4619 = vmatprep.subr.mxu0 0.0
      %4620 = vmatpush2.msra.mxu0 0.0
      %4621 = vmatprep.subr.mxu0 0.0
      %4622 = vmatpush2.msra.mxu0 0.0
      %4623 = vmatprep.subr.mxu0 0.0
      %4624 = vmatpush2.msra.mxu0 0.0
      %4625 = vmatprep.subr.mxu0 0.0
      %4626 = vmatpush2.msra.mxu0 0.0
      %4627 = vmatprep.subr.mxu0 0.0
      %4628 = vmatpush2.msra.mxu0 0.0
      %4629 = vmatprep.subr.mxu0 0.0
      %4630 = vmatpush2.msra.mxu0 0.0
      %4631 = vmatprep.subr.mxu0 0.0
      %4632 = vmatpush2.msra.mxu0 0.0
      %4633 = vmatprep.mubr.f32.mxu0 0.0
      %v4634 = vand.u32 %v4179, 4294901760
      %4635 = vmatmul.mubr.f32.gmra.mxu0 %v4634
      %v4636 = vpop.f32.mrf.mxu0
      %v4637 = vadd.f32 %v4564, %v4636
      %v4638 = vpop.f32.mrf.mxu0
      %4639 = vdwg.mxu0
      %v4640 = vmul.f32 %v4637, %v404
      %v4641 = vadd.f32 %v3591, %v4640
      %4642 = vst [vmem:[%s344] sm:$0xf] %v4641
      %p4643 = scmp.lt.s32.totalorder %s21, 1
      %s4644 = scalar_select %p4643, %s21, 1
      %p4645 = scmp.lt.s32.totalorder %s22, 0
      %s4646 = scalar_select %p4645, %s22, 0
      %s4647 = sadd.s32 %s4646, %s4644
      %s4648 = smul.addr %s4647, 4
      %s4649 = scalar_lea.vmem %s6, %s4648
      // Predicated region
      $region45: #{all_zero_digital_filter.1} parent=43 // pred_check
        %p4650 = pneg %p199
      $region46: #{all_zero_digital_filter.1} parent=43 // pred_check_branch
        %4652 = sbr.rel (%p4650) target = $region48
      $region47: #{all_zero_digital_filter.1} parent=43 // pred_region
        _
      $region48: #{all_zero_digital_filter.1} parent=43 // pred_fallthru
        _
    $region44: #{all_zero_digital_filter.1} parent=5 // pred_fallthru
      _
    %p4653 = scmp.le.s32.totalorder 2, %s12
    // Predicated region
    $region49: #{all_zero_digital_filter.1} parent=5 // pred_check
      %p4654 = pneg %p4653
    $region50: #{all_zero_digital_filter.1} parent=5 // pred_check_branch
      %4656 = sbr.rel (%p4654) target = $region52
    $region51: #{all_zero_digital_filter.1} parent=5 // pred_region
      %s4657 = ssub.s32 %s12, 2
      // Predicated region
      $region53: #{all_zero_digital_filter.1} parent=51 // pred_check
        %p4658 = pneg %p205
      $region54: #{all_zero_digital_filter.1} parent=51 // pred_check_branch
        %4660 = sbr.rel (%p4658) target = $region56
      $region55: #{all_zero_digital_filter.1} parent=51 // pred_region
        %p4661 = scmp.lt.s32.totalorder %s23, 1
        %s4662 = scalar_select %p4661, %s23, 1
        %p4663 = scmp.lt.s32.totalorder %s24, 0
        %s4664 = scalar_select %p4663, %s24, 0
        %s4665 = sadd.s32 %s4664, %s4662
        %s4666 = smul.addr %s4665, 4
        %s4667 = scalar_lea.vmem %s6, %s4666
      $region56: #{all_zero_digital_filter.1} parent=51 // pred_fallthru
        _
    $region52: #{all_zero_digital_filter.1} parent=5 // pred_fallthru
      _
  $region6: #{all_zero_digital_filter.1} parent=0 // loop_footer
    %s16 = sadd.s32 1, %s12
  $region7: #{all_zero_digital_filter.1} parent=0 // loop_footer_branch
    %11 = sbr.rel target = $region3
  $region8: #{all_zero_digital_filter.1} parent=0 // loop_exit
    _

</llo_original>
